<compile_context>
chip_gen: v6e
topology: v6e:2x2x1
jax: 0.10.0
libtpu: 0.0.40
codegen_flags: <defaults>
</compile_context>

<pallas_src>
import functools
import math

import jax
import jax.numpy as jnp
from jax import lax
from jax.experimental import pallas as pl
from jax.experimental.pallas import tpu as pltpu

# ---------------- problem sizes (small, consistent with the module) -----------
B, T, N = 2, 8, 32        # trials, time bins, neurons
L, R = 8, 4               # latent dim, low-rank factor rank (local / backward)
R2 = 2 * R
H_ENC = 32                # encoder hidden width
H_DYN = 16                # dynamics MLP hidden width
S = 4                     # n_samples

TB = T * B                # time-major rows (row = t*B + b)
SB = S * B                # samples*trials rows per step (row = b*S + s)
LR = L * R
ENC_OUT = L + 2 * LR      # [k_y + k_b | vec(K_y) | vec(K_b)]


# ===================== Pallas kernel 1: fused encoders ========================
def _encoder_kernel(y_ref, ma_ref, mb_ref,
                    w0_ref, b0_ref, wy_ref, by_ref,
                    u0_ref, c0_ref, ub_ref, cb_ref, out_ref):
    y = y_ref[...]                                                   # (TB, N)
    ma = ma_ref[...]                                                 # (TB, 1)
    mb = mb_ref[...]                                                 # (TB, 1)

    # local encoder: one hidden tanh layer, fused [k_y | vec(K_y)] head,
    # then t_mask_a applied (matches the torch forward ordering).
    h = jnp.tanh(jnp.dot(y, w0_ref[...], preferred_element_type=jnp.float32)
                 + b0_ref[...])                                      # (TB, H)
    a_y = (jnp.dot(h, wy_ref[...], preferred_element_type=jnp.float32)
           + by_ref[...]) * ma                                       # (TB, L+LR)

    # TODO(synk): real xfads BackwardEncoderLRMvn runs a backward RNN; here the
    # backward message at t is a per-step MLP of the (masked) t+1 local stats.
    hb = jnp.tanh(jnp.dot(a_y, u0_ref[...], preferred_element_type=jnp.float32)
                  + c0_ref[...])                                     # (TB, H)
    a_b = (jnp.dot(hb, ub_ref[...], preferred_element_type=jnp.float32)
           + cb_ref[...])                                            # (TB, L+LR)

    # shift backward messages one step earlier in time (t <- t+1, zero at T-1).
    # rows are time-major (row = t*B + b), so this is a row shift by B rows,
    # implemented as a tiny permutation matmul on the MXU; then apply t_mask_b.
    r = lax.broadcasted_iota(jnp.int32, (TB, TB), 0)
    c = lax.broadcasted_iota(jnp.int32, (TB, TB), 1)
    shift = (c == r + B).astype(jnp.float32)
    a_b = jnp.dot(shift, a_b, preferred_element_type=jnp.float32) * mb

    # single lane-dense output slab: [k_y + k_b | vec(K_y) | vec(K_b)]
    out_ref[...] = jnp.concatenate(
        [a_y[:, :L] + a_b[:, :L], a_y[:, L:], a_b[:, L:]], axis=-1)


def encoders_pallas(y_tm, mask_a, mask_b, p):
    # fuse the matmul pairs by concatenating weight heads (done once, in JAX).
    wy = jnp.concatenate([p['enc_wk'], p['enc_wK']], axis=1)       # (H, L+LR)
    by = jnp.concatenate([p['enc_bk'], p['enc_bK']], axis=1)       # (1, L+LR)
    u0 = jnp.concatenate([p['benc_u0a'], p['benc_u0b']], axis=0)   # (L+LR, H)
    ub = jnp.concatenate([p['benc_uk'], p['benc_uK']], axis=1)     # (H, L+LR)
    cb = jnp.concatenate([p['benc_ck'], p['benc_cK']], axis=1)     # (1, L+LR)
    return pl.pallas_call(
        _encoder_kernel,
        out_shape=jax.ShapeDtypeStruct((TB, ENC_OUT), jnp.float32),
    )(y_tm, mask_a, mask_b,
      p['enc_w0'], p['enc_b0'], wy, by, u0, p['benc_c0'], ub, cb)


# ============ Pallas kernel 2: low-rank causal filter + Poisson ell ===========
def _mm_nt(a, b):
    # a @ b.T without materializing a transpose
    return lax.dot_general(a, b, (((1,), (1,)), ((), ())),
                           preferred_element_type=jnp.float32)


def _eye(n):
    r = lax.broadcasted_iota(jnp.int32, (n, n), 0)
    c = lax.broadcasted_iota(jnp.int32, (n, n), 1)
    return (r == c).astype(jnp.float32)


def _invert_spd(a):
    """Unrolled Gauss-Jordan inverse + logdet of a small SPD matrix.

    jnp.linalg.solve / slogdet do not lower in Mosaic; an SPD matrix needs no
    pivoting and its elimination pivots are positive, so logdet = sum(log pivot).
    """
    n = a.shape[0]
    aug = jnp.concatenate([a, _eye(n)], axis=-1)                    # (n, 2n)
    row_id = lax.broadcasted_iota(jnp.int32, (n, 2 * n), 0)
    logdet = jnp.zeros((1, 1), jnp.float32)
    for k in range(n):
        pivot = aug[k:k + 1, k:k + 1]                               # (1, 1)
        logdet = logdet + jnp.log(pivot)
        row_k = aug[k:k + 1, :] / pivot                             # (1, 2n)
        col_k = aug[:, k:k + 1]                                     # (n, 1)
        elim = aug - col_k * row_k
        aug = jnp.where(row_id == k, jnp.broadcast_to(row_k, elim.shape), elim)
    return aug[:, n:], logdet                                       # (n,n), (1,1)


def _filter_kernel(kt_ref, Ky_ref, Kb_ref, e1_ref, e2_ref, y_ref,
                   Q_ref, P0_ref, m0_ref, A1_ref, b1_ref, A2_ref,
                   C_ref, d_lik_ref,
                   z_ref, kl_ref, ell_ref, mf_ref, z_scr):
    t = pl.program_id(0)

    @pl.when(t == 0)
    def _():
        z_scr[...] = jnp.zeros_like(z_scr)

    is0 = (t == 0).astype(jnp.float32)

    kt = kt_ref[0]                 # (B, L)     k_y + k_b
    Ky_all = Ky_ref[0]             # (B*L, R)
    Kb_all = Kb_ref[0]             # (B*L, R)
    e1 = e1_ref[0]                 # (SB, L)
    e2 = e2_ref[0]                 # (SB, 2R)
    y_t = y_ref[0]                 # (B, N)

    d = is0 * P0_ref[...] + (1.0 - is0) * Q_ref[...]                # (1, L)
    inv_d = 1.0 / d
    inv_sqrt_d = 1.0 / jnp.sqrt(d)
    sum_log_d = jnp.sum(jnp.log(d), axis=-1, keepdims=True)         # (1, 1)
    log2pi = jnp.float32(math.log(2.0 * math.pi))

    # prior mean: m0 at t==0, otherwise residual-tanh dynamics of prev samples
    z_prev = z_scr[...]                                             # (SB, L)
    h_dyn = jnp.tanh(jnp.dot(z_prev, A1_ref[...],
                             preferred_element_type=jnp.float32) + b1_ref[...])
    m_dyn = z_prev + jnp.dot(h_dyn, A2_ref[...],
                             preferred_element_type=jnp.float32)
    m_p = is0 * m0_ref[...] + (1.0 - is0) * m_dyn                   # (SB, L)

    for b in range(B):                                              # B=2, unrolled
        rows = slice(b * S, (b + 1) * S)
        Kyb = Ky_all[b * L:(b + 1) * L, :]                          # (L, R)
        Kbb = Kb_all[b * L:(b + 1) * L, :]                          # (L, R)
        kt_b = kt[b:b + 1, :]                                       # (1, L)
        m_p_b = m_p[rows, :]                                        # (S, L)

        # J = diag(1/d) + K K^T  (K = [K_y | K_b]); explicit inverse + logdet
        J = _eye(L) * inv_d + _mm_nt(Kyb, Kyb) + _mm_nt(Kbb, Kbb)
        J_inv, logdet_J = _invert_spd(J)

        # posterior samples:  z ~ N(J^{-1} h, J^{-1})
        h_b = m_p_b * inv_d + kt_b
        w_b = (e1[rows, :] * inv_sqrt_d
               + _mm_nt(e2[rows, :R], Kyb)
               + _mm_nt(e2[rows, R:], Kbb))                         # ~ N(0, J)
        m_b = jnp.dot(h_b, J_inv, preferred_element_type=jnp.float32)
        z_b = m_b + jnp.dot(w_b, J_inv, preferred_element_type=jnp.float32)

        # sample-based KL( q_t || p(z_t | z_{t-1}) )
        dq = z_b - m_b
        quad_q = (jnp.sum(dq * dq * inv_d, axis=-1, keepdims=True)
                  + jnp.sum(jnp.square(jnp.dot(dq, Kyb,
                                               preferred_element_type=jnp.float32)),
                            axis=-1, keepdims=True)
                  + jnp.sum(jnp.square(jnp.dot(dq, Kbb,
                                               preferred_element_type=jnp.float32)),
                            axis=-1, keepdims=True))
        log_q = 0.5 * logdet_J - 0.5 * L * log2pi - 0.5 * quad_q    # (S, 1)
        dp = z_b - m_p_b
        log_p = (-0.5 * jnp.sum(dp * dp * inv_d, axis=-1, keepdims=True)
                 - 0.5 * sum_log_d - 0.5 * L * log2pi)              # (S, 1)
        kl_b = jnp.sum(log_q - log_p, axis=0, keepdims=True) * (1.0 / S)

        # fused Poisson log-likelihood (get_ell), averaged over samples
        log_rate = jnp.dot(z_b, C_ref[...],
                           preferred_element_type=jnp.float32) + d_lik_ref[...]
        ell_s = jnp.sum(y_t[b:b + 1, :] * log_rate - jnp.exp(log_rate),
                        axis=-1, keepdims=True)                     # (S, 1)
        ell_b = jnp.sum(ell_s, axis=0, keepdims=True) * (1.0 / S)

        m_f_b = jnp.sum(m_b, axis=0, keepdims=True) * (1.0 / S)     # (1, L)

        z_ref[0, rows, :] = z_b
        z_scr[rows, :] = z_b
        kl_ref[0, :, b:b + 1] = kl_b
        ell_ref[0, :, b:b + 1] = ell_b
        mf_ref[0, b:b + 1, :] = m_f_b


def nl_filter_pallas(kt, K_y, K_b, y_tbn, e1, e2, p):
    Q = jax.nn.softplus(p['dyn_log_Q']).reshape(1, L)
    P0 = jax.nn.softplus(p['init_log_P0']).reshape(1, L)
    m0 = p['init_m0'].reshape(1, L)
    b1 = p['dyn_b1'].reshape(1, H_DYN)

    def step_spec(*tail):
        return pl.BlockSpec((1,) + tail, lambda t: (t,) + (0,) * len(tail))

    def full_spec(shape):
        return pl.BlockSpec(shape, lambda t: (0,) * len(shape))

    out_shape = (
        jax.ShapeDtypeStruct((T, SB, L), jnp.float32),   # z samples
        jax.ShapeDtypeStruct((T, 1, B), jnp.float32),    # kl
        jax.ShapeDtypeStruct((T, 1, B), jnp.float32),    # ell (mean over samples)
        jax.ShapeDtypeStruct((T, B, L), jnp.float32),    # filtered mean
    )
    return pl.pallas_call(
        _filter_kernel,
        out_shape=out_shape,
        grid=(T,),
        in_specs=[
            step_spec(B, L),         # k = k_y + k_b
            step_spec(B * L, R),     # K_y factor
            step_spec(B * L, R),     # K_b factor
            step_spec(SB, L),        # eps1
            step_spec(SB, R2),       # eps2
            step_spec(B, N),         # y (raw, for ell)
            full_spec((1, L)),       # Q
            full_spec((1, L)),       # P0
            full_spec((1, L)),       # m0
            full_spec((L, H_DYN)),   # dyn A1
            full_spec((1, H_DYN)),   # dyn b1
            full_spec((H_DYN, L)),   # dyn A2
            full_spec((L, N)),       # likelihood C
            full_spec((1, N)),       # likelihood d
        ],
        out_specs=[
            step_spec(SB, L),
            step_spec(1, B),
            step_spec(1, B),
            step_spec(B, L),
        ],
        scratch_shapes=[pltpu.VMEM((SB, L), jnp.float32)],
        compiler_params=pltpu.CompilerParams(dimension_semantics=("arbitrary",)),
    )(kt, K_y, K_b, e1, e2, y_tbn, Q, P0, m0,
      p['dyn_A1'], b1, p['dyn_A2'], p['lik_C'], p['lik_d'])


# =========================== the model (JAX glue) =============================
class LowRankNonlinearStateSpaceModel:
    def __init__(self, params):
        self.p = params

    # ------------------------------------------------------- fast_smooth_1_to_T
    def fast_smooth_1_to_T(self, y, n_samples, key, p_mask_a=0.0, p_mask_y_in=0.0,
                           p_mask_b=0.0, get_kl=False, get_P_s=False):
        assert n_samples == S
        km_a, km_b, km_y, k1, k2 = jax.random.split(key, 5)
        t_mask_a = jax.random.bernoulli(km_a, 1.0 - p_mask_a, (B, T)).astype(jnp.float32)
        t_mask_b = jax.random.bernoulli(km_b, 1.0 - p_mask_b, (B, T)).astype(jnp.float32)
        t_mask_y = jax.random.bernoulli(km_y, 1.0 - p_mask_y_in, (B, T, N)).astype(jnp.float32)
        y_in = t_mask_y * y / (1.0 - p_mask_y_in)

        # time-major row layout (row = t*B + b) so the backward t+1 shift is a
        # plain row shift inside the encoder kernel.
        y_tm = jnp.transpose(y_in, (1, 0, 2)).reshape(TB, N)
        ma = jnp.transpose(t_mask_a, (1, 0)).reshape(TB, 1)
        mb = jnp.transpose(t_mask_b, (1, 0)).reshape(TB, 1)

        slab = encoders_pallas(y_tm, ma, mb, self.p)                  # (TB, L+2LR)
        kt = slab[:, :L].reshape(T, B, L)
        K_y = slab[:, L:L + LR].reshape(T, B, L, R).reshape(T, B * L, R)
        K_b = slab[:, L + LR:].reshape(T, B, L, R).reshape(T, B * L, R)

        e1 = jax.random.normal(k1, (T, SB, L), jnp.float32)
        e2 = jax.random.normal(k2, (T, SB, R2), jnp.float32)
        y_tbn = jnp.transpose(y, (1, 0, 2))                           # raw y for ell

        z, kl, ell, m_f = nl_filter_pallas(kt, K_y, K_b, y_tbn, e1, e2, self.p)

        z_s = jnp.transpose(z.reshape(T, B, S, L), (2, 1, 0, 3))      # (S, B, T, L)
        stats = {'kl': jnp.transpose(kl[:, 0, :], (1, 0)),            # (B, T)
                 'ell': jnp.transpose(ell[:, 0, :], (1, 0)),          # (B, T)
                 'm_f': jnp.transpose(m_f, (1, 0, 2))}                # (B, T, L)
        return z_s, stats

    # ----------------------------------------------------------------- forward
    def forward(self, y, n_samples, key, p_mask_y_in=0.0, p_mask_a=0.0,
                p_mask_b=0.0, p_mask_apb=0.0, get_P_s=False):
        z_s, stats = self.fast_smooth_1_to_T(
            y, n_samples, key, p_mask_y_in=p_mask_y_in, p_mask_a=p_mask_a,
            p_mask_b=p_mask_b, get_kl=True, get_P_s=get_P_s)
        # Poisson ell (mean over samples) is fused into the filter kernel.
        loss = (stats['kl'] - stats['ell']).sum(axis=-1).mean()
        return loss, z_s, stats


# ============================ deterministic params ============================
def init_params(key):
    ks = jax.random.split(key, 10)
    sc = 0.1

    def w(k, shape):
        return sc * jax.random.normal(k, shape, jnp.float32)

    return {
        # local encoder (LocalEncoderLRMvn-style MLP)
        'enc_w0': w(ks[0], (N, H_ENC)), 'enc_b0': jnp.zeros((1, H_ENC), jnp.float32),
        'enc_wk': w(ks[1], (H_ENC, L)), 'enc_bk': jnp.zeros((1, L), jnp.float32),
        'enc_wK': w(ks[2], (H_ENC, L * R)), 'enc_bK': jnp.zeros((1, L * R), jnp.float32),
        # backward encoder (BackwardEncoderLRMvn-style MLP)
        'benc_u0a': w(ks[3], (L, H_ENC)), 'benc_u0b': w(ks[4], (L * R, H_ENC)),
        'benc_c0': jnp.zeros((1, H_ENC), jnp.float32),
        'benc_uk': w(ks[5], (H_ENC, L)), 'benc_ck': jnp.zeros((1, L), jnp.float32),
        'benc_uK': w(ks[6], (H_ENC, L * R)), 'benc_cK': jnp.zeros((1, L * R), jnp.float32),
        # dynamics_mod: residual tanh MLP mean_fn + log_Q
        'dyn_A1': w(ks[7], (L, H_DYN)), 'dyn_b1': jnp.zeros((H_DYN,), jnp.float32),
        'dyn_A2': w(ks[8], (H_DYN, L)),
        'dyn_log_Q': jnp.full((L,), -1.0, jnp.float32),
        # initial_c_pdf
        'init_m0': jnp.zeros((L,), jnp.float32),
        'init_log_P0': jnp.zeros((L,), jnp.float32),
        # likelihood_pdf: Poisson readout
        'lik_C': w(ks[9], (L, N)),
        'lik_d': jnp.full((1, N), jnp.log(2.0), jnp.float32),
    }


if __name__ == "__main__":
    key = jax.random.PRNGKey(0)
    kp, kd, kf = jax.random.split(key, 3)

    params = init_params(kp)
    model = LowRankNonlinearStateSpaceModel(params)

    y = jax.random.poisson(kd, 2.0, (B, T, N)).astype(jnp.float32)   # spike counts

    fwd = jax.jit(functools.partial(model.forward, n_samples=S))
    loss, z_s, stats = fwd(y, key=kf)
    jax.block_until_ready((loss, z_s, stats['kl']))

    assert loss.shape == ()
    assert z_s.shape == (S, B, T, L)
    assert stats['kl'].shape == (B, T)
    assert bool(jnp.isfinite(loss))
    print("KERNEL_OK")
</pallas_src>

<mosaic_0001>
module attributes {stable_mosaic.version = 11 : i64} {
  func.func @_encoder_kernel(%arg0: memref<16x32xf32, #tpu.memory_space<vmem>>, %arg1: memref<16x1xf32, #tpu.memory_space<vmem>>, %arg2: memref<16x1xf32, #tpu.memory_space<vmem>>, %arg3: memref<32x32xf32, #tpu.memory_space<vmem>>, %arg4: memref<1x32xf32, #tpu.memory_space<vmem>>, %arg5: memref<32x40xf32, #tpu.memory_space<vmem>>, %arg6: memref<1x40xf32, #tpu.memory_space<vmem>>, %arg7: memref<40x32xf32, #tpu.memory_space<vmem>>, %arg8: memref<1x32xf32, #tpu.memory_space<vmem>>, %arg9: memref<32x40xf32, #tpu.memory_space<vmem>>, %arg10: memref<1x40xf32, #tpu.memory_space<vmem>>, %arg11: memref<16x72xf32, #tpu.memory_space<vmem>>) attributes {dimension_semantics = [], scalar_prefetch = 0 : i64, scratch_operands = 0 : i64, tpu.core_type = #tpu.core_type<tc>} {
    %c0 = arith.constant 0 : index
    %c0_0 = arith.constant 0 : index
    %0 = vector.load %arg0[%c0, %c0_0] : memref<16x32xf32, #tpu.memory_space<vmem>>, vector<16x32xf32>
    %c0_1 = arith.constant 0 : index
    %c0_2 = arith.constant 0 : index
    %1 = vector.load %arg1[%c0_1, %c0_2] : memref<16x1xf32, #tpu.memory_space<vmem>>, vector<16x1xf32>
    %c0_3 = arith.constant 0 : index
    %c0_4 = arith.constant 0 : index
    %2 = vector.load %arg2[%c0_3, %c0_4] : memref<16x1xf32, #tpu.memory_space<vmem>>, vector<16x1xf32>
    %c0_5 = arith.constant 0 : index
    %c0_6 = arith.constant 0 : index
    %3 = vector.load %arg3[%c0_5, %c0_6] : memref<32x32xf32, #tpu.memory_space<vmem>>, vector<32x32xf32>
    %cst = arith.constant dense<0.000000e+00> : vector<16x32xf32>
    %4 = tpu.matmul %0, %3, %cst {dimension_numbers = #tpu.dot_dimension_numbers<[1], [0], [0], [1], [0, 0, 1, 1], [], []>} : vector<16x32xf32>, vector<32x32xf32>, vector<16x32xf32> -> vector<16x32xf32>
    %c0_7 = arith.constant 0 : index
    %c0_8 = arith.constant 0 : index
    %5 = vector.load %arg4[%c0_7, %c0_8] : memref<1x32xf32, #tpu.memory_space<vmem>>, vector<1x32xf32>
    %6 = vector.broadcast %5 : vector<1x32xf32> to vector<16x32xf32>
    %7 = arith.addf %4, %6 : vector<16x32xf32>
    %8 = math.tanh %7 : vector<16x32xf32>
    %c0_9 = arith.constant 0 : index
    %c0_10 = arith.constant 0 : index
    %9 = vector.load %arg5[%c0_9, %c0_10] : memref<32x40xf32, #tpu.memory_space<vmem>>, vector<32x40xf32>
    %cst_11 = arith.constant dense<0.000000e+00> : vector<16x40xf32>
    %10 = tpu.matmul %8, %9, %cst_11 {dimension_numbers = #tpu.dot_dimension_numbers<[1], [0], [0], [1], [0, 0, 1, 1], [], []>} : vector<16x32xf32>, vector<32x40xf32>, vector<16x40xf32> -> vector<16x40xf32>
    %c0_12 = arith.constant 0 : index
    %c0_13 = arith.constant 0 : index
    %11 = vector.load %arg6[%c0_12, %c0_13] : memref<1x40xf32, #tpu.memory_space<vmem>>, vector<1x40xf32>
    %12 = vector.broadcast %11 : vector<1x40xf32> to vector<16x40xf32>
    %13 = arith.addf %10, %12 : vector<16x40xf32>
    %14 = vector.broadcast %1 : vector<16x1xf32> to vector<16x40xf32>
    %15 = arith.mulf %13, %14 : vector<16x40xf32>
    %c0_14 = arith.constant 0 : index
    %c0_15 = arith.constant 0 : index
    %16 = vector.load %arg7[%c0_14, %c0_15] : memref<40x32xf32, #tpu.memory_space<vmem>>, vector<40x32xf32>
    %cst_16 = arith.constant dense<0.000000e+00> : vector<16x32xf32>
    %17 = tpu.matmul %15, %16, %cst_16 {dimension_numbers = #tpu.dot_dimension_numbers<[1], [0], [0], [1], [0, 0, 1, 1], [], []>} : vector<16x40xf32>, vector<40x32xf32>, vector<16x32xf32> -> vector<16x32xf32>
    %c0_17 = arith.constant 0 : index
    %c0_18 = arith.constant 0 : index
    %18 = vector.load %arg8[%c0_17, %c0_18] : memref<1x32xf32, #tpu.memory_space<vmem>>, vector<1x32xf32>
    %19 = vector.broadcast %18 : vector<1x32xf32> to vector<16x32xf32>
    %20 = arith.addf %17, %19 : vector<16x32xf32>
    %21 = math.tanh %20 : vector<16x32xf32>
    %c0_19 = arith.constant 0 : index
    %c0_20 = arith.constant 0 : index
    %22 = vector.load %arg9[%c0_19, %c0_20] : memref<32x40xf32, #tpu.memory_space<vmem>>, vector<32x40xf32>
    %cst_21 = arith.constant dense<0.000000e+00> : vector<16x40xf32>
    %23 = tpu.matmul %21, %22, %cst_21 {dimension_numbers = #tpu.dot_dimension_numbers<[1], [0], [0], [1], [0, 0, 1, 1], [], []>} : vector<16x32xf32>, vector<32x40xf32>, vector<16x40xf32> -> vector<16x40xf32>
    %c0_22 = arith.constant 0 : index
    %c0_23 = arith.constant 0 : index
    %24 = vector.load %arg10[%c0_22, %c0_23] : memref<1x40xf32, #tpu.memory_space<vmem>>, vector<1x40xf32>
    %25 = vector.broadcast %24 : vector<1x40xf32> to vector<16x40xf32>
    %26 = arith.addf %23, %25 : vector<16x40xf32>
    %27 = tpu.iota {dimensions = array<i32: 0>} : vector<16x16xi32>
    %28 = tpu.iota {dimensions = array<i32: 1>} : vector<16x16xi32>
    %c2_i32 = arith.constant 2 : i32
    %29 = vector.broadcast %c2_i32 : i32 to vector<16x16xi32>
    %30 = arith.addi %27, %29 : vector<16x16xi32>
    %31 = arith.cmpi eq, %28, %30 : vector<16x16xi32>
    %32 = arith.extui %31 : vector<16x16xi1> to vector<16x16xi32>
    %33 = arith.sitofp %32 : vector<16x16xi32> to vector<16x16xf32>
    %cst_24 = arith.constant dense<0.000000e+00> : vector<16x40xf32>
    %34 = tpu.matmul %33, %26, %cst_24 {dimension_numbers = #tpu.dot_dimension_numbers<[1], [0], [0], [1], [0, 0, 1, 1], [], []>} : vector<16x16xf32>, vector<16x40xf32>, vector<16x40xf32> -> vector<16x40xf32>
    %35 = vector.broadcast %2 : vector<16x1xf32> to vector<16x40xf32>
    %36 = arith.mulf %34, %35 : vector<16x40xf32>
    %37 = vector.extract_strided_slice %15 {offsets = [0, 0], sizes = [16, 8], strides = [1, 1]} : vector<16x40xf32> to vector<16x8xf32>
    %38 = vector.extract_strided_slice %36 {offsets = [0, 0], sizes = [16, 8], strides = [1, 1]} : vector<16x40xf32> to vector<16x8xf32>
    %39 = arith.addf %37, %38 : vector<16x8xf32>
    %40 = vector.extract_strided_slice %15 {offsets = [0, 8], sizes = [16, 32], strides = [1, 1]} : vector<16x40xf32> to vector<16x32xf32>
    %41 = vector.extract_strided_slice %36 {offsets = [0, 8], sizes = [16, 32], strides = [1, 1]} : vector<16x40xf32> to vector<16x32xf32>
    %42 = tpu.concatenate %39, %40, %41 in 1 : vector<16x8xf32>, vector<16x32xf32>, vector<16x32xf32> -> vector<16x72xf32>
    %c0_25 = arith.constant 0 : index
    %c0_26 = arith.constant 0 : index
    %43 = vector.load %arg11[%c0_25, %c0_26] : memref<16x72xf32, #tpu.memory_space<vmem>>, vector<16x72xf32>
    tpu.vector_store %arg11[%c0_25, %c0_26], %42 {strides = array<i32>} : memref<16x72xf32, #tpu.memory_space<vmem>>, vector<16x72xf32>,
    return
  }
}

module attributes {stable_mosaic.version = 11 : i64} {
  func.func @_filter_kernel(%arg0: i32, %arg1: memref<1x2x8xf32, #tpu.memory_space<vmem>>, %arg2: memref<1x16x4xf32, #tpu.memory_space<vmem>>, %arg3: memref<1x16x4xf32, #tpu.memory_space<vmem>>, %arg4: memref<1x8x8xf32, #tpu.memory_space<vmem>>, %arg5: memref<1x8x8xf32, #tpu.memory_space<vmem>>, %arg6: memref<1x2x32xf32, #tpu.memory_space<vmem>>, %arg7: memref<1x8xf32, #tpu.memory_space<vmem>>, %arg8: memref<1x8xf32, #tpu.memory_space<vmem>>, %arg9: memref<1x8xf32, #tpu.memory_space<vmem>>, %arg10: memref<8x16xf32, #tpu.memory_space<vmem>>, %arg11: memref<1x16xf32, #tpu.memory_space<vmem>>, %arg12: memref<16x8xf32, #tpu.memory_space<vmem>>, %arg13: memref<8x32xf32, #tpu.memory_space<vmem>>, %arg14: memref<1x32xf32, #tpu.memory_space<vmem>>, %arg15: memref<1x8x8xf32, #tpu.memory_space<vmem>>, %arg16: memref<1x1x2xf32, #tpu.memory_space<vmem>>, %arg17: memref<1x1x2xf32, #tpu.memory_space<vmem>>, %arg18: memref<1x2x8xf32, #tpu.memory_space<vmem>>, %arg19: memref<8x8xf32, #tpu.memory_space<vmem>>) attributes {dimension_semantics = [#tpu.dimension_semantics<arbitrary>], iteration_bounds = array<i64: 8>, scalar_prefetch = 0 : i64, scratch_operands = 1 : i64, tpu.core_type = #tpu.core_type<tc>, window_params = [{transform_indices = @transform_0, window_bounds = array<i64: 1, 2, 8>}, {transform_indices = @transform_1, window_bounds = array<i64: 1, 16, 4>}, {transform_indices = @transform_2, window_bounds = array<i64: 1, 16, 4>}, {transform_indices = @transform_3, window_bounds = array<i64: 1, 8, 8>}, {transform_indices = @transform_4, window_bounds = array<i64: 1, 8, 8>}, {transform_indices = @transform_5, window_bounds = array<i64: 1, 2, 32>}, {pipeline_mode = #tpu.pipeline_mode<synchronous>, transform_indices = @transform_6, window_bounds = array<i64: 1, 8>}, {pipeline_mode = #tpu.pipeline_mode<synchronous>, transform_indices = @transform_7, window_bounds = array<i64: 1, 8>}, {pipeline_mode = #tpu.pipeline_mode<synchronous>, transform_indices = @transform_8, window_bounds = array<i64: 1, 8>}, {pipeline_mode = #tpu.pipeline_mode<synchronous>, transform_indices = @transform_9, window_bounds = array<i64: 8, 16>}, {pipeline_mode = #tpu.pipeline_mode<synchronous>, transform_indices = @transform_10, window_bounds = array<i64: 1, 16>}, {pipeline_mode = #tpu.pipeline_mode<synchronous>, transform_indices = @transform_11, window_bounds = array<i64: 16, 8>}, {pipeline_mode = #tpu.pipeline_mode<synchronous>, transform_indices = @transform_12, window_bounds = array<i64: 8, 32>}, {pipeline_mode = #tpu.pipeline_mode<synchronous>, transform_indices = @transform_13, window_bounds = array<i64: 1, 32>}, {transform_indices = @transform_14, window_bounds = array<i64: 1, 8, 8>}, {transform_indices = @transform_15, window_bounds = array<i64: 1, 1, 2>}, {transform_indices = @transform_16, window_bounds = array<i64: 1, 1, 2>}, {transform_indices = @transform_17, window_bounds = array<i64: 1, 2, 8>}]} {
    %c0_i32 = arith.constant 0 : i32
    %0 = arith.cmpi eq, %arg0, %c0_i32 : i32
    %1 = arith.extui %0 : i1 to i32
    %c0_i32_0 = arith.constant 0 : i32
    %2 = arith.cmpi ne, %1, %c0_i32_0 : i32
    scf.if %2 {
      %cst_140 = arith.constant 0.000000e+00 : f32
      %544 = vector.broadcast %cst_140 : f32 to vector<8x8xf32>
      %c0_141 = arith.constant 0 : index
      %c0_142 = arith.constant 0 : index
      %545 = vector.load %arg19[%c0_141, %c0_142] : memref<8x8xf32, #tpu.memory_space<vmem>>, vector<8x8xf32>
      tpu.vector_store %arg19[%c0_141, %c0_142], %544 {strides = array<i32>} : memref<8x8xf32, #tpu.memory_space<vmem>>, vector<8x8xf32>,
    } else {
    }
    %c0_i32_1 = arith.constant 0 : i32
    %3 = arith.cmpi eq, %arg0, %c0_i32_1 : i32
    %4 = arith.extui %3 : i1 to i32
    %5 = arith.sitofp %4 : i32 to f32
    %c0 = arith.constant 0 : index
    %c0_2 = arith.constant 0 : index
    %c0_3 = arith.constant 0 : index
    %6 = vector.load %arg1[%c0, %c0_2, %c0_3] : memref<1x2x8xf32, #tpu.memory_space<vmem>>, vector<1x2x8xf32>
    %7 = vector.shape_cast %6 : vector<1x2x8xf32> to vector<2x8xf32>
    %c0_4 = arith.constant 0 : index
    %c0_5 = arith.constant 0 : index
    %c0_6 = arith.constant 0 : index
    %8 = vector.load %arg2[%c0_4, %c0_5, %c0_6] : memref<1x16x4xf32, #tpu.memory_space<vmem>>, vector<1x16x4xf32>
    %9 = vector.shape_cast %8 : vector<1x16x4xf32> to vector<16x4xf32>
    %c0_7 = arith.constant 0 : index
    %c0_8 = arith.constant 0 : index
    %c0_9 = arith.constant 0 : index
    %10 = vector.load %arg3[%c0_7, %c0_8, %c0_9] : memref<1x16x4xf32, #tpu.memory_space<vmem>>, vector<1x16x4xf32>
    %11 = vector.shape_cast %10 : vector<1x16x4xf32> to vector<16x4xf32>
    %c0_10 = arith.constant 0 : index
    %c0_11 = arith.constant 0 : index
    %c0_12 = arith.constant 0 : index
    %12 = vector.load %arg4[%c0_10, %c0_11, %c0_12] : memref<1x8x8xf32, #tpu.memory_space<vmem>>, vector<1x8x8xf32>
    %13 = vector.shape_cast %12 : vector<1x8x8xf32> to vector<8x8xf32>
    %c0_13 = arith.constant 0 : index
    %c0_14 = arith.constant 0 : index
    %c0_15 = arith.constant 0 : index
    %14 = vector.load %arg5[%c0_13, %c0_14, %c0_15] : memref<1x8x8xf32, #tpu.memory_space<vmem>>, vector<1x8x8xf32>
    %15 = vector.shape_cast %14 : vector<1x8x8xf32> to vector<8x8xf32>
    %c0_16 = arith.constant 0 : index
    %c0_17 = arith.constant 0 : index
    %c0_18 = arith.constant 0 : index
    %16 = vector.load %arg6[%c0_16, %c0_17, %c0_18] : memref<1x2x32xf32, #tpu.memory_space<vmem>>, vector<1x2x32xf32>
    %17 = vector.shape_cast %16 : vector<1x2x32xf32> to vector<2x32xf32>
    %c0_19 = arith.constant 0 : index
    %c0_20 = arith.constant 0 : index
    %18 = vector.load %arg8[%c0_19, %c0_20] : memref<1x8xf32, #tpu.memory_space<vmem>>, vector<1x8xf32>
    %19 = vector.broadcast %5 : f32 to vector<1x8xf32>
    %20 = arith.mulf %19, %18 : vector<1x8xf32>
    %cst = arith.constant 1.000000e+00 : f32
    %21 = arith.subf %cst, %5 : f32
    %c0_21 = arith.constant 0 : index
    %c0_22 = arith.constant 0 : index
    %22 = vector.load %arg7[%c0_21, %c0_22] : memref<1x8xf32, #tpu.memory_space<vmem>>, vector<1x8xf32>
    %23 = vector.broadcast %21 : f32 to vector<1x8xf32>
    %24 = arith.mulf %23, %22 : vector<1x8xf32>
    %25 = arith.addf %20, %24 : vector<1x8xf32>
    %cst_23 = arith.constant 1.000000e+00 : f32
    %26 = vector.broadcast %cst_23 : f32 to vector<1x8xf32>
    %27 = arith.divf %26, %25 : vector<1x8xf32>
    %28 = math.sqrt %25 : vector<1x8xf32>
    %cst_24 = arith.constant 1.000000e+00 : f32
    %29 = vector.broadcast %cst_24 : f32 to vector<1x8xf32>
    %30 = arith.divf %29, %28 : vector<1x8xf32>
    %31 = math.log %25 : vector<1x8xf32>
    %cst_25 = arith.constant dense<0.000000e+00> : vector<1xf32>
    %32 = vector.multi_reduction <add>, %31, %cst_25 [1] : vector<1x8xf32> to vector<1xf32>
    %33 = vector.shape_cast %32 : vector<1xf32> to vector<1x1xf32>
    %c0_26 = arith.constant 0 : index
    %c0_27 = arith.constant 0 : index
    %34 = vector.load %arg19[%c0_26, %c0_27] : memref<8x8xf32, #tpu.memory_space<vmem>>, vector<8x8xf32>
    %c0_28 = arith.constant 0 : index
    %c0_29 = arith.constant 0 : index
    %35 = vector.load %arg10[%c0_28, %c0_29] : memref<8x16xf32, #tpu.memory_space<vmem>>, vector<8x16xf32>
    %cst_30 = arith.constant dense<0.000000e+00> : vector<8x16xf32>
    %36 = tpu.matmul %34, %35, %cst_30 {dimension_numbers = #tpu.dot_dimension_numbers<[1], [0], [0], [1], [0, 0, 1, 1], [], []>} : vector<8x8xf32>, vector<8x16xf32>, vector<8x16xf32> -> vector<8x16xf32>
    %c0_31 = arith.constant 0 : index
    %c0_32 = arith.constant 0 : index
    %37 = vector.load %arg11[%c0_31, %c0_32] : memref<1x16xf32, #tpu.memory_space<vmem>>, vector<1x16xf32>
    %38 = vector.broadcast %37 : vector<1x16xf32> to vector<8x16xf32>
    %39 = arith.addf %36, %38 : vector<8x16xf32>
    %40 = math.tanh %39 : vector<8x16xf32>
    %c0_33 = arith.constant 0 : index
    %c0_34 = arith.constant 0 : index
    %41 = vector.load %arg12[%c0_33, %c0_34] : memref<16x8xf32, #tpu.memory_space<vmem>>, vector<16x8xf32>
    %cst_35 = arith.constant dense<0.000000e+00> : vector<8x8xf32>
    %42 = tpu.matmul %40, %41, %cst_35 {dimension_numbers = #tpu.dot_dimension_numbers<[1], [0], [0], [1], [0, 0, 1, 1], [], []>} : vector<8x16xf32>, vector<16x8xf32>, vector<8x8xf32> -> vector<8x8xf32>
    %43 = arith.addf %34, %42 : vector<8x8xf32>
    %c0_36 = arith.constant 0 : index
    %c0_37 = arith.constant 0 : index
    %44 = vector.load %arg9[%c0_36, %c0_37] : memref<1x8xf32, #tpu.memory_space<vmem>>, vector<1x8xf32>
    %45 = vector.broadcast %5 : f32 to vector<1x8xf32>
    %46 = arith.mulf %45, %44 : vector<1x8xf32>
    %cst_38 = arith.constant 1.000000e+00 : f32
    %47 = arith.subf %cst_38, %5 : f32
    %48 = vector.broadcast %47 : f32 to vector<8x8xf32>
    %49 = arith.mulf %48, %43 : vector<8x8xf32>
    %50 = vector.broadcast %46 : vector<1x8xf32> to vector<8x8xf32>
    %51 = arith.addf %50, %49 : vector<8x8xf32>
    %52 = vector.extract_strided_slice %9 {offsets = [0, 0], sizes = [8, 4], strides = [1, 1]} : vector<16x4xf32> to vector<8x4xf32>
    %53 = vector.extract_strided_slice %11 {offsets = [0, 0], sizes = [8, 4], strides = [1, 1]} : vector<16x4xf32> to vector<8x4xf32>
    %54 = vector.extract_strided_slice %7 {offsets = [0, 0], sizes = [1, 8], strides = [1, 1]} : vector<2x8xf32> to vector<1x8xf32>
    %55 = vector.extract_strided_slice %51 {offsets = [0, 0], sizes = [4, 8], strides = [1, 1]} : vector<8x8xf32> to vector<4x8xf32>
    %56 = tpu.iota {dimensions = array<i32: 0>} : vector<8x8xi32>
    %57 = tpu.iota {dimensions = array<i32: 1>} : vector<8x8xi32>
    %58 = arith.cmpi eq, %56, %57 : vector<8x8xi32>
    %59 = arith.extui %58 : vector<8x8xi1> to vector<8x8xi32>
    %60 = arith.sitofp %59 : vector<8x8xi32> to vector<8x8xf32>
    %61 = vector.broadcast %27 : vector<1x8xf32> to vector<8x8xf32>
    %62 = arith.mulf %60, %61 : vector<8x8xf32>
    %cst_39 = arith.constant dense<0.000000e+00> : vector<8x8xf32>
    %63 = tpu.matmul %52, %52, %cst_39 {dimension_numbers = #tpu.dot_dimension_numbers<[1], [1], [0], [0], [0, 0, 1, 0], [], []>} : vector<8x4xf32>, vector<8x4xf32>, vector<8x8xf32> -> vector<8x8xf32>
    %64 = arith.addf %62, %63 : vector<8x8xf32>
    %cst_40 = arith.constant dense<0.000000e+00> : vector<8x8xf32>
    %65 = tpu.matmul %53, %53, %cst_40 {dimension_numbers = #tpu.dot_dimension_numbers<[1], [1], [0], [0], [0, 0, 1, 0], [], []>} : vector<8x4xf32>, vector<8x4xf32>, vector<8x8xf32> -> vector<8x8xf32>
    %66 = arith.addf %64, %65 : vector<8x8xf32>
    %67 = tpu.iota {dimensions = array<i32: 0>} : vector<8x8xi32>
    %68 = tpu.iota {dimensions = array<i32: 1>} : vector<8x8xi32>
    %69 = arith.cmpi eq, %67, %68 : vector<8x8xi32>
    %70 = arith.extui %69 : vector<8x8xi1> to vector<8x8xi32>
    %71 = arith.sitofp %70 : vector<8x8xi32> to vector<8x8xf32>
    %72 = tpu.concatenate %66, %71 in 1 : vector<8x8xf32>, vector<8x8xf32> -> vector<8x16xf32>
    %73 = tpu.iota {dimensions = array<i32: 0>} : vector<8x16xi32>
    %cst_41 = arith.constant 0.000000e+00 : f32
    %74 = vector.broadcast %cst_41 : f32 to vector<1x1xf32>
    %75 = vector.extract_strided_slice %72 {offsets = [0, 0], sizes = [1, 1], strides = [1, 1]} : vector<8x16xf32> to vector<1x1xf32>
    %76 = math.log %75 : vector<1x1xf32>
    %77 = arith.addf %74, %76 : vector<1x1xf32>
    %78 = vector.extract_strided_slice %72 {offsets = [0, 0], sizes = [1, 16], strides = [1, 1]} : vector<8x16xf32> to vector<1x16xf32>
    %79 = vector.broadcast %75 : vector<1x1xf32> to vector<1x16xf32>
    %80 = arith.divf %78, %79 : vector<1x16xf32>
    %81 = vector.extract_strided_slice %72 {offsets = [0, 0], sizes = [8, 1], strides = [1, 1]} : vector<8x16xf32> to vector<8x1xf32>
    %82 = vector.broadcast %81 : vector<8x1xf32> to vector<8x16xf32>
    %83 = vector.broadcast %80 : vector<1x16xf32> to vector<8x16xf32>
    %84 = arith.mulf %82, %83 : vector<8x16xf32>
    %85 = arith.subf %72, %84 : vector<8x16xf32>
    %c0_i32_42 = arith.constant 0 : i32
    %86 = vector.broadcast %c0_i32_42 : i32 to vector<8x16xi32>
    %87 = arith.cmpi eq, %73, %86 : vector<8x16xi32>
    %88 = vector.shape_cast %80 : vector<1x16xf32> to vector<1x16xf32>
    %89 = vector.broadcast %88 : vector<1x16xf32> to vector<8x16xf32>
    %90 = arith.select %87, %89, %85 : vector<8x16xi1>, vector<8x16xf32>
    %91 = vector.extract_strided_slice %90 {offsets = [1, 1], sizes = [1, 1], strides = [1, 1]} : vector<8x16xf32> to vector<1x1xf32>
    %92 = math.log %91 : vector<1x1xf32>
    %93 = arith.addf %77, %92 : vector<1x1xf32>
    %94 = vector.extract_strided_slice %90 {offsets = [1, 0], sizes = [1, 16], strides = [1, 1]} : vector<8x16xf32> to vector<1x16xf32>
    %95 = vector.broadcast %91 : vector<1x1xf32> to vector<1x16xf32>
    %96 = arith.divf %94, %95 : vector<1x16xf32>
    %97 = vector.extract_strided_slice %90 {offsets = [0, 1], sizes = [8, 1], strides = [1, 1]} : vector<8x16xf32> to vector<8x1xf32>
    %98 = vector.broadcast %97 : vector<8x1xf32> to vector<8x16xf32>
    %99 = vector.broadcast %96 : vector<1x16xf32> to vector<8x16xf32>
    %100 = arith.mulf %98, %99 : vector<8x16xf32>
    %101 = arith.subf %90, %100 : vector<8x16xf32>
    %c1_i32 = arith.constant 1 : i32
    %102 = vector.broadcast %c1_i32 : i32 to vector<8x16xi32>
    %103 = arith.cmpi eq, %73, %102 : vector<8x16xi32>
    %104 = vector.shape_cast %96 : vector<1x16xf32> to vector<1x16xf32>
    %105 = vector.broadcast %104 : vector<1x16xf32> to vector<8x16xf32>
    %106 = arith.select %103, %105, %101 : vector<8x16xi1>, vector<8x16xf32>
    %107 = vector.extract_strided_slice %106 {offsets = [2, 2], sizes = [1, 1], strides = [1, 1]} : vector<8x16xf32> to vector<1x1xf32>
    %108 = math.log %107 : vector<1x1xf32>
    %109 = arith.addf %93, %108 : vector<1x1xf32>
    %110 = vector.extract_strided_slice %106 {offsets = [2, 0], sizes = [1, 16], strides = [1, 1]} : vector<8x16xf32> to vector<1x16xf32>
    %111 = vector.broadcast %107 : vector<1x1xf32> to vector<1x16xf32>
    %112 = arith.divf %110, %111 : vector<1x16xf32>
    %113 = vector.extract_strided_slice %106 {offsets = [0, 2], sizes = [8, 1], strides = [1, 1]} : vector<8x16xf32> to vector<8x1xf32>
    %114 = vector.broadcast %113 : vector<8x1xf32> to vector<8x16xf32>
    %115 = vector.broadcast %112 : vector<1x16xf32> to vector<8x16xf32>
    %116 = arith.mulf %114, %115 : vector<8x16xf32>
    %117 = arith.subf %106, %116 : vector<8x16xf32>
    %c2_i32 = arith.constant 2 : i32
    %118 = vector.broadcast %c2_i32 : i32 to vector<8x16xi32>
    %119 = arith.cmpi eq, %73, %118 : vector<8x16xi32>
    %120 = vector.shape_cast %112 : vector<1x16xf32> to vector<1x16xf32>
    %121 = vector.broadcast %120 : vector<1x16xf32> to vector<8x16xf32>
    %122 = arith.select %119, %121, %117 : vector<8x16xi1>, vector<8x16xf32>
    %123 = vector.extract_strided_slice %122 {offsets = [3, 3], sizes = [1, 1], strides = [1, 1]} : vector<8x16xf32> to vector<1x1xf32>
    %124 = math.log %123 : vector<1x1xf32>
    %125 = arith.addf %109, %124 : vector<1x1xf32>
    %126 = vector.extract_strided_slice %122 {offsets = [3, 0], sizes = [1, 16], strides = [1, 1]} : vector<8x16xf32> to vector<1x16xf32>
    %127 = vector.broadcast %123 : vector<1x1xf32> to vector<1x16xf32>
    %128 = arith.divf %126, %127 : vector<1x16xf32>
    %129 = vector.extract_strided_slice %122 {offsets = [0, 3], sizes = [8, 1], strides = [1, 1]} : vector<8x16xf32> to vector<8x1xf32>
    %130 = vector.broadcast %129 : vector<8x1xf32> to vector<8x16xf32>
    %131 = vector.broadcast %128 : vector<1x16xf32> to vector<8x16xf32>
    %132 = arith.mulf %130, %131 : vector<8x16xf32>
    %133 = arith.subf %122, %132 : vector<8x16xf32>
    %c3_i32 = arith.constant 3 : i32
    %134 = vector.broadcast %c3_i32 : i32 to vector<8x16xi32>
    %135 = arith.cmpi eq, %73, %134 : vector<8x16xi32>
    %136 = vector.shape_cast %128 : vector<1x16xf32> to vector<1x16xf32>
    %137 = vector.broadcast %136 : vector<1x16xf32> to vector<8x16xf32>
    %138 = arith.select %135, %137, %133 : vector<8x16xi1>, vector<8x16xf32>
    %139 = vector.extract_strided_slice %138 {offsets = [4, 4], sizes = [1, 1], strides = [1, 1]} : vector<8x16xf32> to vector<1x1xf32>
    %140 = math.log %139 : vector<1x1xf32>
    %141 = arith.addf %125, %140 : vector<1x1xf32>
    %142 = vector.extract_strided_slice %138 {offsets = [4, 0], sizes = [1, 16], strides = [1, 1]} : vector<8x16xf32> to vector<1x16xf32>
    %143 = vector.broadcast %139 : vector<1x1xf32> to vector<1x16xf32>
    %144 = arith.divf %142, %143 : vector<1x16xf32>
    %145 = vector.extract_strided_slice %138 {offsets = [0, 4], sizes = [8, 1], strides = [1, 1]} : vector<8x16xf32> to vector<8x1xf32>
    %146 = vector.broadcast %145 : vector<8x1xf32> to vector<8x16xf32>
    %147 = vector.broadcast %144 : vector<1x16xf32> to vector<8x16xf32>
    %148 = arith.mulf %146, %147 : vector<8x16xf32>
    %149 = arith.subf %138, %148 : vector<8x16xf32>
    %c4_i32 = arith.constant 4 : i32
    %150 = vector.broadcast %c4_i32 : i32 to vector<8x16xi32>
    %151 = arith.cmpi eq, %73, %150 : vector<8x16xi32>
    %152 = vector.shape_cast %144 : vector<1x16xf32> to vector<1x16xf32>
    %153 = vector.broadcast %152 : vector<1x16xf32> to vector<8x16xf32>
    %154 = arith.select %151, %153, %149 : vector<8x16xi1>, vector<8x16xf32>
    %155 = vector.extract_strided_slice %154 {offsets = [5, 5], sizes = [1, 1], strides = [1, 1]} : vector<8x16xf32> to vector<1x1xf32>
    %156 = math.log %155 : vector<1x1xf32>
    %157 = arith.addf %141, %156 : vector<1x1xf32>
    %158 = vector.extract_strided_slice %154 {offsets = [5, 0], sizes = [1, 16], strides = [1, 1]} : vector<8x16xf32> to vector<1x16xf32>
    %159 = vector.broadcast %155 : vector<1x1xf32> to vector<1x16xf32>
    %160 = arith.divf %158, %159 : vector<1x16xf32>
    %161 = vector.extract_strided_slice %154 {offsets = [0, 5], sizes = [8, 1], strides = [1, 1]} : vector<8x16xf32> to vector<8x1xf32>
    %162 = vector.broadcast %161 : vector<8x1xf32> to vector<8x16xf32>
    %163 = vector.broadcast %160 : vector<1x16xf32> to vector<8x16xf32>
    %164 = arith.mulf %162, %163 : vector<8x16xf32>
    %165 = arith.subf %154, %164 : vector<8x16xf32>
    %c5_i32 = arith.constant 5 : i32
    %166 = vector.broadcast %c5_i32 : i32 to vector<8x16xi32>
    %167 = arith.cmpi eq, %73, %166 : vector<8x16xi32>
    %168 = vector.shape_cast %160 : vector<1x16xf32> to vector<1x16xf32>
    %169 = vector.broadcast %168 : vector<1x16xf32> to vector<8x16xf32>
    %170 = arith.select %167, %169, %165 : vector<8x16xi1>, vector<8x16xf32>
    %171 = vector.extract_strided_slice %170 {offsets = [6, 6], sizes = [1, 1], strides = [1, 1]} : vector<8x16xf32> to vector<1x1xf32>
    %172 = math.log %171 : vector<1x1xf32>
    %173 = arith.addf %157, %172 : vector<1x1xf32>
    %174 = vector.extract_strided_slice %170 {offsets = [6, 0], sizes = [1, 16], strides = [1, 1]} : vector<8x16xf32> to vector<1x16xf32>
    %175 = vector.broadcast %171 : vector<1x1xf32> to vector<1x16xf32>
    %176 = arith.divf %174, %175 : vector<1x16xf32>
    %177 = vector.extract_strided_slice %170 {offsets = [0, 6], sizes = [8, 1], strides = [1, 1]} : vector<8x16xf32> to vector<8x1xf32>
    %178 = vector.broadcast %177 : vector<8x1xf32> to vector<8x16xf32>
    %179 = vector.broadcast %176 : vector<1x16xf32> to vector<8x16xf32>
    %180 = arith.mulf %178, %179 : vector<8x16xf32>
    %181 = arith.subf %170, %180 : vector<8x16xf32>
    %c6_i32 = arith.constant 6 : i32
    %182 = vector.broadcast %c6_i32 : i32 to vector<8x16xi32>
    %183 = arith.cmpi eq, %73, %182 : vector<8x16xi32>
    %184 = vector.shape_cast %176 : vector<1x16xf32> to vector<1x16xf32>
    %185 = vector.broadcast %184 : vector<1x16xf32> to vector<8x16xf32>
    %186 = arith.select %183, %185, %181 : vector<8x16xi1>, vector<8x16xf32>
    %187 = vector.extract_strided_slice %186 {offsets = [7, 7], sizes = [1, 1], strides = [1, 1]} : vector<8x16xf32> to vector<1x1xf32>
    %188 = math.log %187 : vector<1x1xf32>
    %189 = arith.addf %173, %188 : vector<1x1xf32>
    %190 = vector.extract_strided_slice %186 {offsets = [7, 0], sizes = [1, 16], strides = [1, 1]} : vector<8x16xf32> to vector<1x16xf32>
    %191 = vector.broadcast %187 : vector<1x1xf32> to vector<1x16xf32>
    %192 = arith.divf %190, %191 : vector<1x16xf32>
    %193 = vector.extract_strided_slice %186 {offsets = [0, 7], sizes = [8, 1], strides = [1, 1]} : vector<8x16xf32> to vector<8x1xf32>
    %194 = vector.broadcast %193 : vector<8x1xf32> to vector<8x16xf32>
    %195 = vector.broadcast %192 : vector<1x16xf32> to vector<8x16xf32>
    %196 = arith.mulf %194, %195 : vector<8x16xf32>
    %197 = arith.subf %186, %196 : vector<8x16xf32>
    %c7_i32 = arith.constant 7 : i32
    %198 = vector.broadcast %c7_i32 : i32 to vector<8x16xi32>
    %199 = arith.cmpi eq, %73, %198 : vector<8x16xi32>
    %200 = vector.shape_cast %192 : vector<1x16xf32> to vector<1x16xf32>
    %201 = vector.broadcast %200 : vector<1x16xf32> to vector<8x16xf32>
    %202 = arith.select %199, %201, %197 : vector<8x16xi1>, vector<8x16xf32>
    %203 = vector.extract_strided_slice %202 {offsets = [0, 8], sizes = [8, 8], strides = [1, 1]} : vector<8x16xf32> to vector<8x8xf32>
    %204 = vector.broadcast %27 : vector<1x8xf32> to vector<4x8xf32>
    %205 = arith.mulf %55, %204 : vector<4x8xf32>
    %206 = vector.broadcast %54 : vector<1x8xf32> to vector<4x8xf32>
    %207 = arith.addf %205, %206 : vector<4x8xf32>
    %208 = vector.extract_strided_slice %13 {offsets = [0, 0], sizes = [4, 8], strides = [1, 1]} : vector<8x8xf32> to vector<4x8xf32>
    %209 = vector.broadcast %30 : vector<1x8xf32> to vector<4x8xf32>
    %210 = arith.mulf %208, %209 : vector<4x8xf32>
    %211 = vector.extract_strided_slice %15 {offsets = [0, 0], sizes = [4, 4], strides = [1, 1]} : vector<8x8xf32> to vector<4x4xf32>
    %cst_43 = arith.constant dense<0.000000e+00> : vector<4x8xf32>
    %212 = tpu.matmul %211, %52, %cst_43 {dimension_numbers = #tpu.dot_dimension_numbers<[1], [1], [0], [0], [0, 0, 1, 0], [], []>} : vector<4x4xf32>, vector<8x4xf32>, vector<4x8xf32> -> vector<4x8xf32>
    %213 = arith.addf %210, %212 : vector<4x8xf32>
    %214 = vector.extract_strided_slice %15 {offsets = [0, 4], sizes = [4, 4], strides = [1, 1]} : vector<8x8xf32> to vector<4x4xf32>
    %cst_44 = arith.constant dense<0.000000e+00> : vector<4x8xf32>
    %215 = tpu.matmul %214, %53, %cst_44 {dimension_numbers = #tpu.dot_dimension_numbers<[1], [1], [0], [0], [0, 0, 1, 0], [], []>} : vector<4x4xf32>, vector<8x4xf32>, vector<4x8xf32> -> vector<4x8xf32>
    %216 = arith.addf %213, %215 : vector<4x8xf32>
    %cst_45 = arith.constant dense<0.000000e+00> : vector<4x8xf32>
    %217 = tpu.matmul %207, %203, %cst_45 {dimension_numbers = #tpu.dot_dimension_numbers<[1], [0], [0], [1], [0, 0, 1, 1], [], []>} : vector<4x8xf32>, vector<8x8xf32>, vector<4x8xf32> -> vector<4x8xf32>
    %cst_46 = arith.constant dense<0.000000e+00> : vector<4x8xf32>
    %218 = tpu.matmul %216, %203, %cst_46 {dimension_numbers = #tpu.dot_dimension_numbers<[1], [0], [0], [1], [0, 0, 1, 1], [], []>} : vector<4x8xf32>, vector<8x8xf32>, vector<4x8xf32> -> vector<4x8xf32>
    %219 = arith.addf %217, %218 : vector<4x8xf32>
    %220 = arith.subf %219, %217 : vector<4x8xf32>
    %221 = arith.mulf %220, %220 : vector<4x8xf32>
    %222 = vector.broadcast %27 : vector<1x8xf32> to vector<4x8xf32>
    %223 = arith.mulf %221, %222 : vector<4x8xf32>
    %cst_47 = arith.constant dense<0.000000e+00> : vector<4xf32>
    %224 = vector.multi_reduction <add>, %223, %cst_47 [1] : vector<4x8xf32> to vector<4xf32>
    %225 = vector.shape_cast %224 : vector<4xf32> to vector<4x1xf32>
    %cst_48 = arith.constant dense<0.000000e+00> : vector<4x4xf32>
    %226 = tpu.matmul %220, %52, %cst_48 {dimension_numbers = #tpu.dot_dimension_numbers<[1], [0], [0], [1], [0, 0, 1, 1], [], []>} : vector<4x8xf32>, vector<8x4xf32>, vector<4x4xf32> -> vector<4x4xf32>
    %227 = arith.mulf %226, %226 : vector<4x4xf32>
    %cst_49 = arith.constant dense<0.000000e+00> : vector<4xf32>
    %228 = vector.multi_reduction <add>, %227, %cst_49 [1] : vector<4x4xf32> to vector<4xf32>
    %229 = vector.shape_cast %228 : vector<4xf32> to vector<4x1xf32>
    %230 = arith.addf %225, %229 : vector<4x1xf32>
    %cst_50 = arith.constant dense<0.000000e+00> : vector<4x4xf32>
    %231 = tpu.matmul %220, %53, %cst_50 {dimension_numbers = #tpu.dot_dimension_numbers<[1], [0], [0], [1], [0, 0, 1, 1], [], []>} : vector<4x8xf32>, vector<8x4xf32>, vector<4x4xf32> -> vector<4x4xf32>
    %232 = arith.mulf %231, %231 : vector<4x4xf32>
    %cst_51 = arith.constant dense<0.000000e+00> : vector<4xf32>
    %233 = vector.multi_reduction <add>, %232, %cst_51 [1] : vector<4x4xf32> to vector<4xf32>
    %234 = vector.shape_cast %233 : vector<4xf32> to vector<4x1xf32>
    %235 = arith.addf %230, %234 : vector<4x1xf32>
    %cst_52 = arith.constant 5.000000e-01 : f32
    %236 = vector.broadcast %cst_52 : f32 to vector<1x1xf32>
    %237 = arith.mulf %236, %189 : vector<1x1xf32>
    %cst_53 = arith.constant 4.000000e+00 : f32
    %cst_54 = arith.constant 1.83787704 : f32
    %238 = arith.mulf %cst_53, %cst_54 : f32
    %239 = vector.broadcast %238 : f32 to vector<1x1xf32>
    %240 = arith.subf %237, %239 : vector<1x1xf32>
    %cst_55 = arith.constant 5.000000e-01 : f32
    %241 = vector.broadcast %cst_55 : f32 to vector<4x1xf32>
    %242 = arith.mulf %241, %235 : vector<4x1xf32>
    %243 = vector.broadcast %240 : vector<1x1xf32> to vector<4x1xf32>
    %244 = arith.subf %243, %242 : vector<4x1xf32>
    %245 = arith.subf %219, %55 : vector<4x8xf32>
    %246 = arith.mulf %245, %245 : vector<4x8xf32>
    %247 = vector.broadcast %27 : vector<1x8xf32> to vector<4x8xf32>
    %248 = arith.mulf %246, %247 : vector<4x8xf32>
    %cst_56 = arith.constant dense<0.000000e+00> : vector<4xf32>
    %249 = vector.multi_reduction <add>, %248, %cst_56 [1] : vector<4x8xf32> to vector<4xf32>
    %250 = vector.shape_cast %249 : vector<4xf32> to vector<4x1xf32>
    %cst_57 = arith.constant -5.000000e-01 : f32
    %251 = vector.broadcast %cst_57 : f32 to vector<4x1xf32>
    %252 = arith.mulf %251, %250 : vector<4x1xf32>
    %cst_58 = arith.constant 5.000000e-01 : f32
    %253 = vector.broadcast %cst_58 : f32 to vector<1x1xf32>
    %254 = arith.mulf %253, %33 : vector<1x1xf32>
    %255 = vector.broadcast %254 : vector<1x1xf32> to vector<4x1xf32>
    %256 = arith.subf %252, %255 : vector<4x1xf32>
    %cst_59 = arith.constant 4.000000e+00 : f32
    %cst_60 = arith.constant 1.83787704 : f32
    %257 = arith.mulf %cst_59, %cst_60 : f32
    %258 = vector.broadcast %257 : f32 to vector<4x1xf32>
    %259 = arith.subf %256, %258 : vector<4x1xf32>
    %260 = arith.subf %244, %259 : vector<4x1xf32>
    %cst_61 = arith.constant dense<0.000000e+00> : vector<1xf32>
    %261 = vector.multi_reduction <add>, %260, %cst_61 [0] : vector<4x1xf32> to vector<1xf32>
    %262 = vector.shape_cast %261 : vector<1xf32> to vector<1x1xf32>
    %cst_62 = arith.constant 2.500000e-01 : f32
    %263 = vector.broadcast %cst_62 : f32 to vector<1x1xf32>
    %264 = arith.mulf %262, %263 : vector<1x1xf32>
    %c0_63 = arith.constant 0 : index
    %c0_64 = arith.constant 0 : index
    %265 = vector.load %arg13[%c0_63, %c0_64] : memref<8x32xf32, #tpu.memory_space<vmem>>, vector<8x32xf32>
    %cst_65 = arith.constant dense<0.000000e+00> : vector<4x32xf32>
    %266 = tpu.matmul %219, %265, %cst_65 {dimension_numbers = #tpu.dot_dimension_numbers<[1], [0], [0], [1], [0, 0, 1, 1], [], []>} : vector<4x8xf32>, vector<8x32xf32>, vector<4x32xf32> -> vector<4x32xf32>
    %c0_66 = arith.constant 0 : index
    %c0_67 = arith.constant 0 : index
    %267 = vector.load %arg14[%c0_66, %c0_67] : memref<1x32xf32, #tpu.memory_space<vmem>>, vector<1x32xf32>
    %268 = vector.broadcast %267 : vector<1x32xf32> to vector<4x32xf32>
    %269 = arith.addf %266, %268 : vector<4x32xf32>
    %270 = vector.extract_strided_slice %17 {offsets = [0, 0], sizes = [1, 32], strides = [1, 1]} : vector<2x32xf32> to vector<1x32xf32>
    %271 = vector.broadcast %270 : vector<1x32xf32> to vector<4x32xf32>
    %272 = arith.mulf %271, %269 : vector<4x32xf32>
    %273 = math.exp %269 : vector<4x32xf32>
    %274 = arith.subf %272, %273 : vector<4x32xf32>
    %cst_68 = arith.constant dense<0.000000e+00> : vector<4xf32>
    %275 = vector.multi_reduction <add>, %274, %cst_68 [1] : vector<4x32xf32> to vector<4xf32>
    %276 = vector.shape_cast %275 : vector<4xf32> to vector<4x1xf32>
    %cst_69 = arith.constant dense<0.000000e+00> : vector<1xf32>
    %277 = vector.multi_reduction <add>, %276, %cst_69 [0] : vector<4x1xf32> to vector<1xf32>
    %278 = vector.shape_cast %277 : vector<1xf32> to vector<1x1xf32>
    %cst_70 = arith.constant 2.500000e-01 : f32
    %279 = vector.broadcast %cst_70 : f32 to vector<1x1xf32>
    %280 = arith.mulf %278, %279 : vector<1x1xf32>
    %cst_71 = arith.constant dense<0.000000e+00> : vector<8xf32>
    %281 = vector.multi_reduction <add>, %217, %cst_71 [0] : vector<4x8xf32> to vector<8xf32>
    %282 = vector.shape_cast %281 : vector<8xf32> to vector<1x8xf32>
    %cst_72 = arith.constant 2.500000e-01 : f32
    %283 = vector.broadcast %cst_72 : f32 to vector<1x8xf32>
    %284 = arith.mulf %282, %283 : vector<1x8xf32>
    %c0_73 = arith.constant 0 : index
    %c0_74 = arith.constant 0 : index
    %c0_75 = arith.constant 0 : index
    %285 = vector.load %arg15[%c0_73, %c0_74, %c0_75] : memref<1x8x8xf32, #tpu.memory_space<vmem>>, vector<1x4x8xf32>
    %286 = vector.shape_cast %285 : vector<1x4x8xf32> to vector<4x8xf32>
    %287 = vector.shape_cast %219 : vector<4x8xf32> to vector<1x4x8xf32>
    tpu.vector_store %arg15[%c0_73, %c0_74, %c0_75], %287 {strides = array<i32>} : memref<1x8x8xf32, #tpu.memory_space<vmem>>, vector<1x4x8xf32>,
    %c0_76 = arith.constant 0 : index
    %c0_77 = arith.constant 0 : index
    %288 = vector.load %arg19[%c0_76, %c0_77] : memref<8x8xf32, #tpu.memory_space<vmem>>, vector<4x8xf32>
    tpu.vector_store %arg19[%c0_76, %c0_77], %219 {strides = array<i32>} : memref<8x8xf32, #tpu.memory_space<vmem>>, vector<4x8xf32>,
    %c0_78 = arith.constant 0 : index
    %c0_79 = arith.constant 0 : index
    %c0_80 = arith.constant 0 : index
    %289 = vector.load %arg16[%c0_78, %c0_79, %c0_80] : memref<1x1x2xf32, #tpu.memory_space<vmem>>, vector<1x1x1xf32>
    %290 = vector.shape_cast %289 : vector<1x1x1xf32> to vector<1x1xf32>
    %291 = vector.shape_cast %264 : vector<1x1xf32> to vector<1x1x1xf32>
    tpu.vector_store %arg16[%c0_78, %c0_79, %c0_80], %291 {strides = array<i32>} : memref<1x1x2xf32, #tpu.memory_space<vmem>>, vector<1x1x1xf32>,
    %c0_81 = arith.constant 0 : index
    %c0_82 = arith.constant 0 : index
    %c0_83 = arith.constant 0 : index
    %292 = vector.load %arg17[%c0_81, %c0_82, %c0_83] : memref<1x1x2xf32, #tpu.memory_space<vmem>>, vector<1x1x1xf32>
    %293 = vector.shape_cast %292 : vector<1x1x1xf32> to vector<1x1xf32>
    %294 = vector.shape_cast %280 : vector<1x1xf32> to vector<1x1x1xf32>
    tpu.vector_store %arg17[%c0_81, %c0_82, %c0_83], %294 {strides = array<i32>} : memref<1x1x2xf32, #tpu.memory_space<vmem>>, vector<1x1x1xf32>,
    %c0_84 = arith.constant 0 : index
    %c0_85 = arith.constant 0 : index
    %c0_86 = arith.constant 0 : index
    %295 = vector.load %arg18[%c0_84, %c0_85, %c0_86] : memref<1x2x8xf32, #tpu.memory_space<vmem>>, vector<1x1x8xf32>
    %296 = vector.shape_cast %295 : vector<1x1x8xf32> to vector<1x8xf32>
    %297 = vector.shape_cast %284 : vector<1x8xf32> to vector<1x1x8xf32>
    tpu.vector_store %arg18[%c0_84, %c0_85, %c0_86], %297 {strides = array<i32>} : memref<1x2x8xf32, #tpu.memory_space<vmem>>, vector<1x1x8xf32>,
    %298 = vector.extract_strided_slice %9 {offsets = [8, 0], sizes = [8, 4], strides = [1, 1]} : vector<16x4xf32> to vector<8x4xf32>
    %299 = vector.extract_strided_slice %11 {offsets = [8, 0], sizes = [8, 4], strides = [1, 1]} : vector<16x4xf32> to vector<8x4xf32>
    %300 = vector.extract_strided_slice %7 {offsets = [1, 0], sizes = [1, 8], strides = [1, 1]} : vector<2x8xf32> to vector<1x8xf32>
    %301 = vector.extract_strided_slice %51 {offsets = [4, 0], sizes = [4, 8], strides = [1, 1]} : vector<8x8xf32> to vector<4x8xf32>
    %302 = tpu.iota {dimensions = array<i32: 0>} : vector<8x8xi32>
    %303 = tpu.iota {dimensions = array<i32: 1>} : vector<8x8xi32>
    %304 = arith.cmpi eq, %302, %303 : vector<8x8xi32>
    %305 = arith.extui %304 : vector<8x8xi1> to vector<8x8xi32>
    %306 = arith.sitofp %305 : vector<8x8xi32> to vector<8x8xf32>
    %307 = vector.broadcast %27 : vector<1x8xf32> to vector<8x8xf32>
    %308 = arith.mulf %306, %307 : vector<8x8xf32>
    %cst_87 = arith.constant dense<0.000000e+00> : vector<8x8xf32>
    %309 = tpu.matmul %298, %298, %cst_87 {dimension_numbers = #tpu.dot_dimension_numbers<[1], [1], [0], [0], [0, 0, 1, 0], [], []>} : vector<8x4xf32>, vector<8x4xf32>, vector<8x8xf32> -> vector<8x8xf32>
    %310 = arith.addf %308, %309 : vector<8x8xf32>
    %cst_88 = arith.constant dense<0.000000e+00> : vector<8x8xf32>
    %311 = tpu.matmul %299, %299, %cst_88 {dimension_numbers = #tpu.dot_dimension_numbers<[1], [1], [0], [0], [0, 0, 1, 0], [], []>} : vector<8x4xf32>, vector<8x4xf32>, vector<8x8xf32> -> vector<8x8xf32>
    %312 = arith.addf %310, %311 : vector<8x8xf32>
    %313 = tpu.iota {dimensions = array<i32: 0>} : vector<8x8xi32>
    %314 = tpu.iota {dimensions = array<i32: 1>} : vector<8x8xi32>
    %315 = arith.cmpi eq, %313, %314 : vector<8x8xi32>
    %316 = arith.extui %315 : vector<8x8xi1> to vector<8x8xi32>
    %317 = arith.sitofp %316 : vector<8x8xi32> to vector<8x8xf32>
    %318 = tpu.concatenate %312, %317 in 1 : vector<8x8xf32>, vector<8x8xf32> -> vector<8x16xf32>
    %319 = tpu.iota {dimensions = array<i32: 0>} : vector<8x16xi32>
    %cst_89 = arith.constant 0.000000e+00 : f32
    %320 = vector.broadcast %cst_89 : f32 to vector<1x1xf32>
    %321 = vector.extract_strided_slice %318 {offsets = [0, 0], sizes = [1, 1], strides = [1, 1]} : vector<8x16xf32> to vector<1x1xf32>
    %322 = math.log %321 : vector<1x1xf32>
    %323 = arith.addf %320, %322 : vector<1x1xf32>
    %324 = vector.extract_strided_slice %318 {offsets = [0, 0], sizes = [1, 16], strides = [1, 1]} : vector<8x16xf32> to vector<1x16xf32>
    %325 = vector.broadcast %321 : vector<1x1xf32> to vector<1x16xf32>
    %326 = arith.divf %324, %325 : vector<1x16xf32>
    %327 = vector.extract_strided_slice %318 {offsets = [0, 0], sizes = [8, 1], strides = [1, 1]} : vector<8x16xf32> to vector<8x1xf32>
    %328 = vector.broadcast %327 : vector<8x1xf32> to vector<8x16xf32>
    %329 = vector.broadcast %326 : vector<1x16xf32> to vector<8x16xf32>
    %330 = arith.mulf %328, %329 : vector<8x16xf32>
    %331 = arith.subf %318, %330 : vector<8x16xf32>
    %c0_i32_90 = arith.constant 0 : i32
    %332 = vector.broadcast %c0_i32_90 : i32 to vector<8x16xi32>
    %333 = arith.cmpi eq, %319, %332 : vector<8x16xi32>
    %334 = vector.shape_cast %326 : vector<1x16xf32> to vector<1x16xf32>
    %335 = vector.broadcast %334 : vector<1x16xf32> to vector<8x16xf32>
    %336 = arith.select %333, %335, %331 : vector<8x16xi1>, vector<8x16xf32>
    %337 = vector.extract_strided_slice %336 {offsets = [1, 1], sizes = [1, 1], strides = [1, 1]} : vector<8x16xf32> to vector<1x1xf32>
    %338 = math.log %337 : vector<1x1xf32>
    %339 = arith.addf %323, %338 : vector<1x1xf32>
    %340 = vector.extract_strided_slice %336 {offsets = [1, 0], sizes = [1, 16], strides = [1, 1]} : vector<8x16xf32> to vector<1x16xf32>
    %341 = vector.broadcast %337 : vector<1x1xf32> to vector<1x16xf32>
    %342 = arith.divf %340, %341 : vector<1x16xf32>
    %343 = vector.extract_strided_slice %336 {offsets = [0, 1], sizes = [8, 1], strides = [1, 1]} : vector<8x16xf32> to vector<8x1xf32>
    %344 = vector.broadcast %343 : vector<8x1xf32> to vector<8x16xf32>
    %345 = vector.broadcast %342 : vector<1x16xf32> to vector<8x16xf32>
    %346 = arith.mulf %344, %345 : vector<8x16xf32>
    %347 = arith.subf %336, %346 : vector<8x16xf32>
    %c1_i32_91 = arith.constant 1 : i32
    %348 = vector.broadcast %c1_i32_91 : i32 to vector<8x16xi32>
    %349 = arith.cmpi eq, %319, %348 : vector<8x16xi32>
    %350 = vector.shape_cast %342 : vector<1x16xf32> to vector<1x16xf32>
    %351 = vector.broadcast %350 : vector<1x16xf32> to vector<8x16xf32>
    %352 = arith.select %349, %351, %347 : vector<8x16xi1>, vector<8x16xf32>
    %353 = vector.extract_strided_slice %352 {offsets = [2, 2], sizes = [1, 1], strides = [1, 1]} : vector<8x16xf32> to vector<1x1xf32>
    %354 = math.log %353 : vector<1x1xf32>
    %355 = arith.addf %339, %354 : vector<1x1xf32>
    %356 = vector.extract_strided_slice %352 {offsets = [2, 0], sizes = [1, 16], strides = [1, 1]} : vector<8x16xf32> to vector<1x16xf32>
    %357 = vector.broadcast %353 : vector<1x1xf32> to vector<1x16xf32>
    %358 = arith.divf %356, %357 : vector<1x16xf32>
    %359 = vector.extract_strided_slice %352 {offsets = [0, 2], sizes = [8, 1], strides = [1, 1]} : vector<8x16xf32> to vector<8x1xf32>
    %360 = vector.broadcast %359 : vector<8x1xf32> to vector<8x16xf32>
    %361 = vector.broadcast %358 : vector<1x16xf32> to vector<8x16xf32>
    %362 = arith.mulf %360, %361 : vector<8x16xf32>
    %363 = arith.subf %352, %362 : vector<8x16xf32>
    %c2_i32_92 = arith.constant 2 : i32
    %364 = vector.broadcast %c2_i32_92 : i32 to vector<8x16xi32>
    %365 = arith.cmpi eq, %319, %364 : vector<8x16xi32>
    %366 = vector.shape_cast %358 : vector<1x16xf32> to vector<1x16xf32>
    %367 = vector.broadcast %366 : vector<1x16xf32> to vector<8x16xf32>
    %368 = arith.select %365, %367, %363 : vector<8x16xi1>, vector<8x16xf32>
    %369 = vector.extract_strided_slice %368 {offsets = [3, 3], sizes = [1, 1], strides = [1, 1]} : vector<8x16xf32> to vector<1x1xf32>
    %370 = math.log %369 : vector<1x1xf32>
    %371 = arith.addf %355, %370 : vector<1x1xf32>
    %372 = vector.extract_strided_slice %368 {offsets = [3, 0], sizes = [1, 16], strides = [1, 1]} : vector<8x16xf32> to vector<1x16xf32>
    %373 = vector.broadcast %369 : vector<1x1xf32> to vector<1x16xf32>
    %374 = arith.divf %372, %373 : vector<1x16xf32>
    %375 = vector.extract_strided_slice %368 {offsets = [0, 3], sizes = [8, 1], strides = [1, 1]} : vector<8x16xf32> to vector<8x1xf32>
    %376 = vector.broadcast %375 : vector<8x1xf32> to vector<8x16xf32>
    %377 = vector.broadcast %374 : vector<1x16xf32> to vector<8x16xf32>
    %378 = arith.mulf %376, %377 : vector<8x16xf32>
    %379 = arith.subf %368, %378 : vector<8x16xf32>
    %c3_i32_93 = arith.constant 3 : i32
    %380 = vector.broadcast %c3_i32_93 : i32 to vector<8x16xi32>
    %381 = arith.cmpi eq, %319, %380 : vector<8x16xi32>
    %382 = vector.shape_cast %374 : vector<1x16xf32> to vector<1x16xf32>
    %383 = vector.broadcast %382 : vector<1x16xf32> to vector<8x16xf32>
    %384 = arith.select %381, %383, %379 : vector<8x16xi1>, vector<8x16xf32>
    %385 = vector.extract_strided_slice %384 {offsets = [4, 4], sizes = [1, 1], strides = [1, 1]} : vector<8x16xf32> to vector<1x1xf32>
    %386 = math.log %385 : vector<1x1xf32>
    %387 = arith.addf %371, %386 : vector<1x1xf32>
    %388 = vector.extract_strided_slice %384 {offsets = [4, 0], sizes = [1, 16], strides = [1, 1]} : vector<8x16xf32> to vector<1x16xf32>
    %389 = vector.broadcast %385 : vector<1x1xf32> to vector<1x16xf32>
    %390 = arith.divf %388, %389 : vector<1x16xf32>
    %391 = vector.extract_strided_slice %384 {offsets = [0, 4], sizes = [8, 1], strides = [1, 1]} : vector<8x16xf32> to vector<8x1xf32>
    %392 = vector.broadcast %391 : vector<8x1xf32> to vector<8x16xf32>
    %393 = vector.broadcast %390 : vector<1x16xf32> to vector<8x16xf32>
    %394 = arith.mulf %392, %393 : vector<8x16xf32>
    %395 = arith.subf %384, %394 : vector<8x16xf32>
    %c4_i32_94 = arith.constant 4 : i32
    %396 = vector.broadcast %c4_i32_94 : i32 to vector<8x16xi32>
    %397 = arith.cmpi eq, %319, %396 : vector<8x16xi32>
    %398 = vector.shape_cast %390 : vector<1x16xf32> to vector<1x16xf32>
    %399 = vector.broadcast %398 : vector<1x16xf32> to vector<8x16xf32>
    %400 = arith.select %397, %399, %395 : vector<8x16xi1>, vector<8x16xf32>
    %401 = vector.extract_strided_slice %400 {offsets = [5, 5], sizes = [1, 1], strides = [1, 1]} : vector<8x16xf32> to vector<1x1xf32>
    %402 = math.log %401 : vector<1x1xf32>
    %403 = arith.addf %387, %402 : vector<1x1xf32>
    %404 = vector.extract_strided_slice %400 {offsets = [5, 0], sizes = [1, 16], strides = [1, 1]} : vector<8x16xf32> to vector<1x16xf32>
    %405 = vector.broadcast %401 : vector<1x1xf32> to vector<1x16xf32>
    %406 = arith.divf %404, %405 : vector<1x16xf32>
    %407 = vector.extract_strided_slice %400 {offsets = [0, 5], sizes = [8, 1], strides = [1, 1]} : vector<8x16xf32> to vector<8x1xf32>
    %408 = vector.broadcast %407 : vector<8x1xf32> to vector<8x16xf32>
    %409 = vector.broadcast %406 : vector<1x16xf32> to vector<8x16xf32>
    %410 = arith.mulf %408, %409 : vector<8x16xf32>
    %411 = arith.subf %400, %410 : vector<8x16xf32>
    %c5_i32_95 = arith.constant 5 : i32
    %412 = vector.broadcast %c5_i32_95 : i32 to vector<8x16xi32>
    %413 = arith.cmpi eq, %319, %412 : vector<8x16xi32>
    %414 = vector.shape_cast %406 : vector<1x16xf32> to vector<1x16xf32>
    %415 = vector.broadcast %414 : vector<1x16xf32> to vector<8x16xf32>
    %416 = arith.select %413, %415, %411 : vector<8x16xi1>, vector<8x16xf32>
    %417 = vector.extract_strided_slice %416 {offsets = [6, 6], sizes = [1, 1], strides = [1, 1]} : vector<8x16xf32> to vector<1x1xf32>
    %418 = math.log %417 : vector<1x1xf32>
    %419 = arith.addf %403, %418 : vector<1x1xf32>
    %420 = vector.extract_strided_slice %416 {offsets = [6, 0], sizes = [1, 16], strides = [1, 1]} : vector<8x16xf32> to vector<1x16xf32>
    %421 = vector.broadcast %417 : vector<1x1xf32> to vector<1x16xf32>
    %422 = arith.divf %420, %421 : vector<1x16xf32>
    %423 = vector.extract_strided_slice %416 {offsets = [0, 6], sizes = [8, 1], strides = [1, 1]} : vector<8x16xf32> to vector<8x1xf32>
    %424 = vector.broadcast %423 : vector<8x1xf32> to vector<8x16xf32>
    %425 = vector.broadcast %422 : vector<1x16xf32> to vector<8x16xf32>
    %426 = arith.mulf %424, %425 : vector<8x16xf32>
    %427 = arith.subf %416, %426 : vector<8x16xf32>
    %c6_i32_96 = arith.constant 6 : i32
    %428 = vector.broadcast %c6_i32_96 : i32 to vector<8x16xi32>
    %429 = arith.cmpi eq, %319, %428 : vector<8x16xi32>
    %430 = vector.shape_cast %422 : vector<1x16xf32> to vector<1x16xf32>
    %431 = vector.broadcast %430 : vector<1x16xf32> to vector<8x16xf32>
    %432 = arith.select %429, %431, %427 : vector<8x16xi1>, vector<8x16xf32>
    %433 = vector.extract_strided_slice %432 {offsets = [7, 7], sizes = [1, 1], strides = [1, 1]} : vector<8x16xf32> to vector<1x1xf32>
    %434 = math.log %433 : vector<1x1xf32>
    %435 = arith.addf %419, %434 : vector<1x1xf32>
    %436 = vector.extract_strided_slice %432 {offsets = [7, 0], sizes = [1, 16], strides = [1, 1]} : vector<8x16xf32> to vector<1x16xf32>
    %437 = vector.broadcast %433 : vector<1x1xf32> to vector<1x16xf32>
    %438 = arith.divf %436, %437 : vector<1x16xf32>
    %439 = vector.extract_strided_slice %432 {offsets = [0, 7], sizes = [8, 1], strides = [1, 1]} : vector<8x16xf32> to vector<8x1xf32>
    %440 = vector.broadcast %439 : vector<8x1xf32> to vector<8x16xf32>
    %441 = vector.broadcast %438 : vector<1x16xf32> to vector<8x16xf32>
    %442 = arith.mulf %440, %441 : vector<8x16xf32>
    %443 = arith.subf %432, %442 : vector<8x16xf32>
    %c7_i32_97 = arith.constant 7 : i32
    %444 = vector.broadcast %c7_i32_97 : i32 to vector<8x16xi32>
    %445 = arith.cmpi eq, %319, %444 : vector<8x16xi32>
    %446 = vector.shape_cast %438 : vector<1x16xf32> to vector<1x16xf32>
    %447 = vector.broadcast %446 : vector<1x16xf32> to vector<8x16xf32>
    %448 = arith.select %445, %447, %443 : vector<8x16xi1>, vector<8x16xf32>
    %449 = vector.extract_strided_slice %448 {offsets = [0, 8], sizes = [8, 8], strides = [1, 1]} : vector<8x16xf32> to vector<8x8xf32>
    %450 = vector.broadcast %27 : vector<1x8xf32> to vector<4x8xf32>
    %451 = arith.mulf %301, %450 : vector<4x8xf32>
    %452 = vector.broadcast %300 : vector<1x8xf32> to vector<4x8xf32>
    %453 = arith.addf %451, %452 : vector<4x8xf32>
    %454 = vector.extract_strided_slice %13 {offsets = [4, 0], sizes = [4, 8], strides = [1, 1]} : vector<8x8xf32> to vector<4x8xf32>
    %455 = vector.broadcast %30 : vector<1x8xf32> to vector<4x8xf32>
    %456 = arith.mulf %454, %455 : vector<4x8xf32>
    %457 = vector.extract_strided_slice %15 {offsets = [4, 0], sizes = [4, 4], strides = [1, 1]} : vector<8x8xf32> to vector<4x4xf32>
    %cst_98 = arith.constant dense<0.000000e+00> : vector<4x8xf32>
    %458 = tpu.matmul %457, %298, %cst_98 {dimension_numbers = #tpu.dot_dimension_numbers<[1], [1], [0], [0], [0, 0, 1, 0], [], []>} : vector<4x4xf32>, vector<8x4xf32>, vector<4x8xf32> -> vector<4x8xf32>
    %459 = arith.addf %456, %458 : vector<4x8xf32>
    %460 = vector.extract_strided_slice %15 {offsets = [4, 4], sizes = [4, 4], strides = [1, 1]} : vector<8x8xf32> to vector<4x4xf32>
    %cst_99 = arith.constant dense<0.000000e+00> : vector<4x8xf32>
    %461 = tpu.matmul %460, %299, %cst_99 {dimension_numbers = #tpu.dot_dimension_numbers<[1], [1], [0], [0], [0, 0, 1, 0], [], []>} : vector<4x4xf32>, vector<8x4xf32>, vector<4x8xf32> -> vector<4x8xf32>
    %462 = arith.addf %459, %461 : vector<4x8xf32>
    %cst_100 = arith.constant dense<0.000000e+00> : vector<4x8xf32>
    %463 = tpu.matmul %453, %449, %cst_100 {dimension_numbers = #tpu.dot_dimension_numbers<[1], [0], [0], [1], [0, 0, 1, 1], [], []>} : vector<4x8xf32>, vector<8x8xf32>, vector<4x8xf32> -> vector<4x8xf32>
    %cst_101 = arith.constant dense<0.000000e+00> : vector<4x8xf32>
    %464 = tpu.matmul %462, %449, %cst_101 {dimension_numbers = #tpu.dot_dimension_numbers<[1], [0], [0], [1], [0, 0, 1, 1], [], []>} : vector<4x8xf32>, vector<8x8xf32>, vector<4x8xf32> -> vector<4x8xf32>
    %465 = arith.addf %463, %464 : vector<4x8xf32>
    %466 = arith.subf %465, %463 : vector<4x8xf32>
    %467 = arith.mulf %466, %466 : vector<4x8xf32>
    %468 = vector.broadcast %27 : vector<1x8xf32> to vector<4x8xf32>
    %469 = arith.mulf %467, %468 : vector<4x8xf32>
    %cst_102 = arith.constant dense<0.000000e+00> : vector<4xf32>
    %470 = vector.multi_reduction <add>, %469, %cst_102 [1] : vector<4x8xf32> to vector<4xf32>
    %471 = vector.shape_cast %470 : vector<4xf32> to vector<4x1xf32>
    %cst_103 = arith.constant dense<0.000000e+00> : vector<4x4xf32>
    %472 = tpu.matmul %466, %298, %cst_103 {dimension_numbers = #tpu.dot_dimension_numbers<[1], [0], [0], [1], [0, 0, 1, 1], [], []>} : vector<4x8xf32>, vector<8x4xf32>, vector<4x4xf32> -> vector<4x4xf32>
    %473 = arith.mulf %472, %472 : vector<4x4xf32>
    %cst_104 = arith.constant dense<0.000000e+00> : vector<4xf32>
    %474 = vector.multi_reduction <add>, %473, %cst_104 [1] : vector<4x4xf32> to vector<4xf32>
    %475 = vector.shape_cast %474 : vector<4xf32> to vector<4x1xf32>
    %476 = arith.addf %471, %475 : vector<4x1xf32>
    %cst_105 = arith.constant dense<0.000000e+00> : vector<4x4xf32>
    %477 = tpu.matmul %466, %299, %cst_105 {dimension_numbers = #tpu.dot_dimension_numbers<[1], [0], [0], [1], [0, 0, 1, 1], [], []>} : vector<4x8xf32>, vector<8x4xf32>, vector<4x4xf32> -> vector<4x4xf32>
    %478 = arith.mulf %477, %477 : vector<4x4xf32>
    %cst_106 = arith.constant dense<0.000000e+00> : vector<4xf32>
    %479 = vector.multi_reduction <add>, %478, %cst_106 [1] : vector<4x4xf32> to vector<4xf32>
    %480 = vector.shape_cast %479 : vector<4xf32> to vector<4x1xf32>
    %481 = arith.addf %476, %480 : vector<4x1xf32>
    %cst_107 = arith.constant 5.000000e-01 : f32
    %482 = vector.broadcast %cst_107 : f32 to vector<1x1xf32>
    %483 = arith.mulf %482, %435 : vector<1x1xf32>
    %cst_108 = arith.constant 4.000000e+00 : f32
    %cst_109 = arith.constant 1.83787704 : f32
    %484 = arith.mulf %cst_108, %cst_109 : f32
    %485 = vector.broadcast %484 : f32 to vector<1x1xf32>
    %486 = arith.subf %483, %485 : vector<1x1xf32>
    %cst_110 = arith.constant 5.000000e-01 : f32
    %487 = vector.broadcast %cst_110 : f32 to vector<4x1xf32>
    %488 = arith.mulf %487, %481 : vector<4x1xf32>
    %489 = vector.broadcast %486 : vector<1x1xf32> to vector<4x1xf32>
    %490 = arith.subf %489, %488 : vector<4x1xf32>
    %491 = arith.subf %465, %301 : vector<4x8xf32>
    %492 = arith.mulf %491, %491 : vector<4x8xf32>
    %493 = vector.broadcast %27 : vector<1x8xf32> to vector<4x8xf32>
    %494 = arith.mulf %492, %493 : vector<4x8xf32>
    %cst_111 = arith.constant dense<0.000000e+00> : vector<4xf32>
    %495 = vector.multi_reduction <add>, %494, %cst_111 [1] : vector<4x8xf32> to vector<4xf32>
    %496 = vector.shape_cast %495 : vector<4xf32> to vector<4x1xf32>
    %cst_112 = arith.constant -5.000000e-01 : f32
    %497 = vector.broadcast %cst_112 : f32 to vector<4x1xf32>
    %498 = arith.mulf %497, %496 : vector<4x1xf32>
    %cst_113 = arith.constant 5.000000e-01 : f32
    %499 = vector.broadcast %cst_113 : f32 to vector<1x1xf32>
    %500 = arith.mulf %499, %33 : vector<1x1xf32>
    %501 = vector.broadcast %500 : vector<1x1xf32> to vector<4x1xf32>
    %502 = arith.subf %498, %501 : vector<4x1xf32>
    %cst_114 = arith.constant 4.000000e+00 : f32
    %cst_115 = arith.constant 1.83787704 : f32
    %503 = arith.mulf %cst_114, %cst_115 : f32
    %504 = vector.broadcast %503 : f32 to vector<4x1xf32>
    %505 = arith.subf %502, %504 : vector<4x1xf32>
    %506 = arith.subf %490, %505 : vector<4x1xf32>
    %cst_116 = arith.constant dense<0.000000e+00> : vector<1xf32>
    %507 = vector.multi_reduction <add>, %506, %cst_116 [0] : vector<4x1xf32> to vector<1xf32>
    %508 = vector.shape_cast %507 : vector<1xf32> to vector<1x1xf32>
    %cst_117 = arith.constant 2.500000e-01 : f32
    %509 = vector.broadcast %cst_117 : f32 to vector<1x1xf32>
    %510 = arith.mulf %508, %509 : vector<1x1xf32>
    %c0_118 = arith.constant 0 : index
    %c0_119 = arith.constant 0 : index
    %511 = vector.load %arg13[%c0_118, %c0_119] : memref<8x32xf32, #tpu.memory_space<vmem>>, vector<8x32xf32>
    %cst_120 = arith.constant dense<0.000000e+00> : vector<4x32xf32>
    %512 = tpu.matmul %465, %511, %cst_120 {dimension_numbers = #tpu.dot_dimension_numbers<[1], [0], [0], [1], [0, 0, 1, 1], [], []>} : vector<4x8xf32>, vector<8x32xf32>, vector<4x32xf32> -> vector<4x32xf32>
    %c0_121 = arith.constant 0 : index
    %c0_122 = arith.constant 0 : index
    %513 = vector.load %arg14[%c0_121, %c0_122] : memref<1x32xf32, #tpu.memory_space<vmem>>, vector<1x32xf32>
    %514 = vector.broadcast %513 : vector<1x32xf32> to vector<4x32xf32>
    %515 = arith.addf %512, %514 : vector<4x32xf32>
    %516 = vector.extract_strided_slice %17 {offsets = [1, 0], sizes = [1, 32], strides = [1, 1]} : vector<2x32xf32> to vector<1x32xf32>
    %517 = vector.broadcast %516 : vector<1x32xf32> to vector<4x32xf32>
    %518 = arith.mulf %517, %515 : vector<4x32xf32>
    %519 = math.exp %515 : vector<4x32xf32>
    %520 = arith.subf %518, %519 : vector<4x32xf32>
    %cst_123 = arith.constant dense<0.000000e+00> : vector<4xf32>
    %521 = vector.multi_reduction <add>, %520, %cst_123 [1] : vector<4x32xf32> to vector<4xf32>
    %522 = vector.shape_cast %521 : vector<4xf32> to vector<4x1xf32>
    %cst_124 = arith.constant dense<0.000000e+00> : vector<1xf32>
    %523 = vector.multi_reduction <add>, %522, %cst_124 [0] : vector<4x1xf32> to vector<1xf32>
    %524 = vector.shape_cast %523 : vector<1xf32> to vector<1x1xf32>
    %cst_125 = arith.constant 2.500000e-01 : f32
    %525 = vector.broadcast %cst_125 : f32 to vector<1x1xf32>
    %526 = arith.mulf %524, %525 : vector<1x1xf32>
    %cst_126 = arith.constant dense<0.000000e+00> : vector<8xf32>
    %527 = vector.multi_reduction <add>, %463, %cst_126 [0] : vector<4x8xf32> to vector<8xf32>
    %528 = vector.shape_cast %527 : vector<8xf32> to vector<1x8xf32>
    %cst_127 = arith.constant 2.500000e-01 : f32
    %529 = vector.broadcast %cst_127 : f32 to vector<1x8xf32>
    %530 = arith.mulf %528, %529 : vector<1x8xf32>
    %c0_128 = arith.constant 0 : index
    %c4 = arith.constant 4 : index
    %c0_129 = arith.constant 0 : index
    %531 = vector.load %arg15[%c0_128, %c4, %c0_129] : memref<1x8x8xf32, #tpu.memory_space<vmem>>, vector<1x4x8xf32>
    %532 = vector.shape_cast %531 : vector<1x4x8xf32> to vector<4x8xf32>
    %533 = vector.shape_cast %465 : vector<4x8xf32> to vector<1x4x8xf32>
    tpu.vector_store %arg15[%c0_128, %c4, %c0_129], %533 {strides = array<i32>} : memref<1x8x8xf32, #tpu.memory_space<vmem>>, vector<1x4x8xf32>,
    %c4_130 = arith.constant 4 : index
    %c0_131 = arith.constant 0 : index
    %534 = vector.load %arg19[%c4_130, %c0_131] : memref<8x8xf32, #tpu.memory_space<vmem>>, vector<4x8xf32>
    tpu.vector_store %arg19[%c4_130, %c0_131], %465 {strides = array<i32>} : memref<8x8xf32, #tpu.memory_space<vmem>>, vector<4x8xf32>,
    %c0_132 = arith.constant 0 : index
    %c0_133 = arith.constant 0 : index
    %c1 = arith.constant 1 : index
    %535 = vector.load %arg16[%c0_132, %c0_133, %c1] : memref<1x1x2xf32, #tpu.memory_space<vmem>>, vector<1x1x1xf32>
    %536 = vector.shape_cast %535 : vector<1x1x1xf32> to vector<1x1xf32>
    %537 = vector.shape_cast %510 : vector<1x1xf32> to vector<1x1x1xf32>
    tpu.vector_store %arg16[%c0_132, %c0_133, %c1], %537 {strides = array<i32>} : memref<1x1x2xf32, #tpu.memory_space<vmem>>, vector<1x1x1xf32>,
    %c0_134 = arith.constant 0 : index
    %c0_135 = arith.constant 0 : index
    %c1_136 = arith.constant 1 : index
    %538 = vector.load %arg17[%c0_134, %c0_135, %c1_136] : memref<1x1x2xf32, #tpu.memory_space<vmem>>, vector<1x1x1xf32>
    %539 = vector.shape_cast %538 : vector<1x1x1xf32> to vector<1x1xf32>
    %540 = vector.shape_cast %526 : vector<1x1xf32> to vector<1x1x1xf32>
    tpu.vector_store %arg17[%c0_134, %c0_135, %c1_136], %540 {strides = array<i32>} : memref<1x1x2xf32, #tpu.memory_space<vmem>>, vector<1x1x1xf32>,
    %c0_137 = arith.constant 0 : index
    %c1_138 = arith.constant 1 : index
    %c0_139 = arith.constant 0 : index
    %541 = vector.load %arg18[%c0_137, %c1_138, %c0_139] : memref<1x2x8xf32, #tpu.memory_space<vmem>>, vector<1x1x8xf32>
    %542 = vector.shape_cast %541 : vector<1x1x8xf32> to vector<1x8xf32>
    %543 = vector.shape_cast %530 : vector<1x8xf32> to vector<1x1x8xf32>
    tpu.vector_store %arg18[%c0_137, %c1_138, %c0_139], %543 {strides = array<i32>} : memref<1x2x8xf32, #tpu.memory_space<vmem>>, vector<1x1x8xf32>,
    return
  }
  func.func @transform_0(%arg0: i32) -> (i32, i32, i32) {
    %c0_i32 = arith.constant 0 : i32
    %c0_i32_0 = arith.constant 0 : i32
    %c0_i32_1 = arith.constant 0 : i32
    return %arg0, %c0_i32, %c0_i32_0 : i32, i32, i32
  }
  func.func @transform_1(%arg0: i32) -> (i32, i32, i32) {
    %c0_i32 = arith.constant 0 : i32
    %c0_i32_0 = arith.constant 0 : i32
    %c0_i32_1 = arith.constant 0 : i32
    return %arg0, %c0_i32, %c0_i32_0 : i32, i32, i32
  }
  func.func @transform_2(%arg0: i32) -> (i32, i32, i32) {
    %c0_i32 = arith.constant 0 : i32
    %c0_i32_0 = arith.constant 0 : i32
    %c0_i32_1 = arith.constant 0 : i32
    return %arg0, %c0_i32, %c0_i32_0 : i32, i32, i32
  }
  func.func @transform_3(%arg0: i32) -> (i32, i32, i32) {
    %c0_i32 = arith.constant 0 : i32
    %c0_i32_0 = arith.constant 0 : i32
    %c0_i32_1 = arith.constant 0 : i32
    return %arg0, %c0_i32, %c0_i32_0 : i32, i32, i32
  }
  func.func @transform_4(%arg0: i32) -> (i32, i32, i32) {
    %c0_i32 = arith.constant 0 : i32
    %c0_i32_0 = arith.constant 0 : i32
    %c0_i32_1 = arith.constant 0 : i32
    return %arg0, %c0_i32, %c0_i32_0 : i32, i32, i32
  }
  func.func @transform_5(%arg0: i32) -> (i32, i32, i32) {
    %c0_i32 = arith.constant 0 : i32
    %c0_i32_0 = arith.constant 0 : i32
    %c0_i32_1 = arith.constant 0 : i32
    return %arg0, %c0_i32, %c0_i32_0 : i32, i32, i32
  }
  func.func @transform_6(%arg0: i32) -> (i32, i32) {
    %c0_i32 = arith.constant 0 : i32
    %c0_i32_0 = arith.constant 0 : i32
    %c0_i32_1 = arith.constant 0 : i32
    return %c0_i32, %c0_i32_0 : i32, i32
  }
  func.func @transform_7(%arg0: i32) -> (i32, i32) {
    %c0_i32 = arith.constant 0 : i32
    %c0_i32_0 = arith.constant 0 : i32
    %c0_i32_1 = arith.constant 0 : i32
    return %c0_i32, %c0_i32_0 : i32, i32
  }
  func.func @transform_8(%arg0: i32) -> (i32, i32) {
    %c0_i32 = arith.constant 0 : i32
    %c0_i32_0 = arith.constant 0 : i32
    %c0_i32_1 = arith.constant 0 : i32
    return %c0_i32, %c0_i32_0 : i32, i32
  }
  func.func @transform_9(%arg0: i32) -> (i32, i32) {
    %c0_i32 = arith.constant 0 : i32
    %c0_i32_0 = arith.constant 0 : i32
    %c0_i32_1 = arith.constant 0 : i32
    return %c0_i32, %c0_i32_0 : i32, i32
  }
  func.func @transform_10(%arg0: i32) -> (i32, i32) {
    %c0_i32 = arith.constant 0 : i32
    %c0_i32_0 = arith.constant 0 : i32
    %c0_i32_1 = arith.constant 0 : i32
    return %c0_i32, %c0_i32_0 : i32, i32
  }
  func.func @transform_11(%arg0: i32) -> (i32, i32) {
    %c0_i32 = arith.constant 0 : i32
    %c0_i32_0 = arith.constant 0 : i32
    %c0_i32_1 = arith.constant 0 : i32
    return %c0_i32, %c0_i32_0 : i32, i32
  }
  func.func @transform_12(%arg0: i32) -> (i32, i32) {
    %c0_i32 = arith.constant 0 : i32
    %c0_i32_0 = arith.constant 0 : i32
    %c0_i32_1 = arith.constant 0 : i32
    return %c0_i32, %c0_i32_0 : i32, i32
  }
  func.func @transform_13(%arg0: i32) -> (i32, i32) {
    %c0_i32 = arith.constant 0 : i32
    %c0_i32_0 = arith.constant 0 : i32
    %c0_i32_1 = arith.constant 0 : i32
    return %c0_i32, %c0_i32_0 : i32, i32
  }
  func.func @transform_14(%arg0: i32) -> (i32, i32, i32) {
    %c0_i32 = arith.constant 0 : i32
    %c0_i32_0 = arith.constant 0 : i32
    %c0_i32_1 = arith.constant 0 : i32
    return %arg0, %c0_i32, %c0_i32_0 : i32, i32, i32
  }
  func.func @transform_15(%arg0: i32) -> (i32, i32, i32) {
    %c0_i32 = arith.constant 0 : i32
    %c0_i32_0 = arith.constant 0 : i32
    %c0_i32_1 = arith.constant 0 : i32
    return %arg0, %c0_i32, %c0_i32_0 : i32, i32, i32
  }
  func.func @transform_16(%arg0: i32) -> (i32, i32, i32) {
    %c0_i32 = arith.constant 0 : i32
    %c0_i32_0 = arith.constant 0 : i32
    %c0_i32_1 = arith.constant 0 : i32
    return %arg0, %c0_i32, %c0_i32_0 : i32, i32, i32
  }
  func.func @transform_17(%arg0: i32) -> (i32, i32, i32) {
    %c0_i32 = arith.constant 0 : i32
    %c0_i32_0 = arith.constant 0 : i32
    %c0_i32_1 = arith.constant 0 : i32
    return %arg0, %c0_i32, %c0_i32_0 : i32, i32, i32
  }
}

</mosaic_0001>

<llo_original>
// kernel: forward.2
$region0: #{forward.2}
  #allocation0 [shape = 'u32[]', space=smem, size = 0x4, offset = 0x4, fixed_abs, tag = 'smem constant byte address 0x4 - core index']
  #allocation1 [shape = 'u32[144,128]{1,0:T(1,128)}', space=vmem, size = 0x12000, scoped, tag = 'internal scratch']
  %s0 = inlined_call_operand.vmem [shape: f32[16,32], index: 0, kind: input, shape index: {}]
  %s1 = inlined_call_operand.vmem [shape: f32[16,1], index: 1, kind: input, shape index: {}]
  %s2 = inlined_call_operand.vmem [shape: f32[16,1], index: 2, kind: input, shape index: {}]
  %s3 = inlined_call_operand.vmem [shape: f32[32,32], index: 3, kind: input, shape index: {}]
  %s4 = inlined_call_operand.vmem [shape: f32[1,32], index: 4, kind: input, shape index: {}, may-alias: {4,8}]
  %s5 = inlined_call_operand.vmem [shape: f32[32,40], index: 5, kind: input, shape index: {}]
  %s6 = inlined_call_operand.vmem [shape: f32[1,40], index: 6, kind: input, shape index: {}, may-alias: {6,10}]
  %s7 = inlined_call_operand.vmem [shape: f32[40,32], index: 7, kind: input, shape index: {}]
  %s8 = inlined_call_operand.vmem [shape: f32[1,32], index: 8, kind: input, shape index: {}, may-alias: {4,8}]
  %s9 = inlined_call_operand.vmem [shape: f32[32,40], index: 9, kind: input, shape index: {}]
  %s10 = inlined_call_operand.vmem [shape: f32[1,40], index: 10, kind: input, shape index: {}, may-alias: {6,10}]
  %s11 = inlined_call_operand.vmem [shape: f32[16,72], index: 11, kind: output, shape index: {}]
  %s12 = sld [smem:[#allocation0]]
  $region54: #{forward.2} parent=0
    _
  %s14 = ssub.s32 1, %s12
  %s15 = scalar_select 0, %s14, %s12
  // Predicated region
  $region2: #{forward.2} parent=0 // pred_check
    _
  $region3: #{forward.2} parent=0 // pred_check_branch
    %17 = sbr.rel (0) target = $region5
  $region4: #{forward.2} parent=0 // pred_region
    _
  $region5: #{forward.2} parent=0 // pred_fallthru
    _
  // Predicated region
  $region6: #{forward.2} parent=0 // pred_check
    _
  $region7: #{forward.2} parent=0 // pred_check_branch
    %19 = sbr.rel (0) target = $region9
  $region8: #{forward.2} parent=0 // pred_region
    _
  $region9: #{forward.2} parent=0 // pred_fallthru
    _
  // Predicated region
  $region10: #{forward.2} parent=0 // pred_check
    _
  $region11: #{forward.2} parent=0 // pred_check_branch
    %21 = sbr.rel (0) target = $region13
  $region12: #{forward.2} parent=0 // pred_region
    _
  $region13: #{forward.2} parent=0 // pred_fallthru
    _
  // Predicated region
  $region14: #{forward.2} parent=0 // pred_check
    _
  $region15: #{forward.2} parent=0 // pred_check_branch
    %23 = sbr.rel (0) target = $region17
  $region16: #{forward.2} parent=0 // pred_region
    _
  $region17: #{forward.2} parent=0 // pred_fallthru
    _
  // Predicated region
  $region18: #{forward.2} parent=0 // pred_check
    _
  $region19: #{forward.2} parent=0 // pred_check_branch
    %25 = sbr.rel (0) target = $region21
  $region20: #{forward.2} parent=0 // pred_region
    _
  $region21: #{forward.2} parent=0 // pred_fallthru
    _
  // Predicated region
  $region22: #{forward.2} parent=0 // pred_check
    _
  $region23: #{forward.2} parent=0 // pred_check_branch
    %27 = sbr.rel (0) target = $region25
  $region24: #{forward.2} parent=0 // pred_region
    _
  $region25: #{forward.2} parent=0 // pred_fallthru
    _
  // Predicated region
  $region26: #{forward.2} parent=0 // pred_check
    _
  $region27: #{forward.2} parent=0 // pred_check_branch
    %29 = sbr.rel (0) target = $region29
  $region28: #{forward.2} parent=0 // pred_region
    _
  $region29: #{forward.2} parent=0 // pred_fallthru
    _
  // Predicated region
  $region30: #{forward.2} parent=0 // pred_check
    _
  $region31: #{forward.2} parent=0 // pred_check_branch
    %31 = sbr.rel (0) target = $region33
  $region32: #{forward.2} parent=0 // pred_region
    _
  $region33: #{forward.2} parent=0 // pred_fallthru
    _
  // Predicated region
  $region34: #{forward.2} parent=0 // pred_check
    _
  $region35: #{forward.2} parent=0 // pred_check_branch
    %33 = sbr.rel (0) target = $region37
  $region36: #{forward.2} parent=0 // pred_region
    _
  $region37: #{forward.2} parent=0 // pred_fallthru
    _
  // Predicated region
  $region38: #{forward.2} parent=0 // pred_check
    _
  $region39: #{forward.2} parent=0 // pred_check_branch
    %35 = sbr.rel (0) target = $region41
  $region40: #{forward.2} parent=0 // pred_region
    _
  $region41: #{forward.2} parent=0 // pred_fallthru
    _
  // Predicated region
  $region42: #{forward.2} parent=0 // pred_check
    _
  $region43: #{forward.2} parent=0 // pred_check_branch
    %37 = sbr.rel (0) target = $region45
  $region44: #{forward.2} parent=0 // pred_region
    _
  $region45: #{forward.2} parent=0 // pred_fallthru
    _
  %v38 = vld [vmem:[%s0] sm:$0xff]
  %v39 = vld [vmem:[%s0 + $0x8] sm:$0xff]
  %v40 = vld [vmem:[%s1] sm:$0xff]
  %v41 = vld [vmem:[%s1 + $0x8] sm:$0xff]
  %v42 = vld [vmem:[%s2] sm:$0xff]
  %v43 = vld [vmem:[%s2 + $0x8] sm:$0xff]
  %v44 = vld [vmem:[%s3] sm:$0xff]
  %v45 = vld [vmem:[%s3 + $0x8] sm:$0xff]
  %v46 = vld [vmem:[%s3 + $0x10] sm:$0xff]
  %v47 = vld [vmem:[%s3 + $0x18] sm:$0xff]
  %v48 = vld [vmem:[%s4] sm:$0x1]
  %v50 = vlaneseq
  %v51 = vshrl.u32 %v50, 7
  %v52 = vsub.s32 0, %v51
  %v53 = vrot.slane %v48, %v52
  %vm55 = vcmask 261120
  %v57 = vsel %vm55, %v38, 0
  %v60 = vsel %vm55, %v39, 0
  %62 = vmatprep.subr.mxu0 0.0
  %63 = vmatpush1.msra.mxu0 0.0
  %64 = vmatprep.subr.mxu0 0.0
  %65 = vmatpush1.msra.mxu0 0.0
  %66 = vmatprep.subr.mxu0 0.0
  %67 = vmatpush1.msra.mxu0 0.0
  %68 = vmatprep.subr.mxu0 0.0
  %69 = vmatpush1.msra.mxu0 0.0
  %70 = vmatprep.subr.mxu0 0.0
  %71 = vmatpush1.msra.mxu0 0.0
  %72 = vmatprep.subr.mxu0 0.0
  %73 = vmatpush1.msra.mxu0 0.0
  %74 = vmatprep.subr.mxu0 0.0
  %75 = vmatpush1.msra.mxu0 0.0
  %76 = vmatprep.subr.mxu0 0.0
  %77 = vmatpush1.msra.mxu0 0.0
  %78 = vmatprep.subr.mxu0 0.0
  %79 = vmatpush1.msra.mxu0 0.0
  %80 = vmatprep.subr.mxu0 0.0
  %81 = vmatpush1.msra.mxu0 0.0
  %82 = vmatprep.subr.mxu0 0.0
  %83 = vmatpush1.msra.mxu0 0.0
  %84 = vmatprep.subr.mxu0 0.0
  %85 = vmatpush1.msra.mxu0 0.0
  %86 = vmatprep.subr.mxu0 0.0
  %87 = vmatpush1.msra.mxu0 %v47
  %88 = vmatprep.subr.mxu0 0.0
  %89 = vmatpush1.msra.mxu0 %v46
  %90 = vmatprep.subr.mxu0 0.0
  %91 = vmatpush1.msra.mxu0 %v45
  %92 = vmatprep.subr.mxu0 0.0
  %93 = vmatpush1.msra.mxu0 %v44
  %94 = vmatprep.subr.mxu0 0.0
  %95 = vmatpush2.msra.mxu0 0.0
  %96 = vmatprep.subr.mxu0 0.0
  %97 = vmatpush2.msra.mxu0 0.0
  %98 = vmatprep.subr.mxu0 0.0
  %99 = vmatpush2.msra.mxu0 0.0
  %100 = vmatprep.subr.mxu0 0.0
  %101 = vmatpush2.msra.mxu0 0.0
  %102 = vmatprep.subr.mxu0 0.0
  %103 = vmatpush2.msra.mxu0 0.0
  %104 = vmatprep.subr.mxu0 0.0
  %105 = vmatpush2.msra.mxu0 0.0
  %106 = vmatprep.subr.mxu0 0.0
  %107 = vmatpush2.msra.mxu0 0.0
  %108 = vmatprep.subr.mxu0 0.0
  %109 = vmatpush2.msra.mxu0 0.0
  %110 = vmatprep.subr.mxu0 0.0
  %111 = vmatpush2.msra.mxu0 0.0
  %112 = vmatprep.subr.mxu0 0.0
  %113 = vmatpush2.msra.mxu0 0.0
  %114 = vmatprep.subr.mxu0 0.0
  %115 = vmatpush2.msra.mxu0 0.0
  %116 = vmatprep.subr.mxu0 0.0
  %117 = vmatpush2.msra.mxu0 0.0
  %118 = vmatprep.subr.mxu0 0.0
  %119 = vmatpush2.msra.mxu0 0.0
  %120 = vmatprep.subr.mxu0 0.0
  %121 = vmatpush2.msra.mxu0 0.0
  %122 = vmatprep.subr.mxu0 0.0
  %123 = vmatpush2.msra.mxu0 0.0
  %124 = vmatprep.subr.mxu0 0.0
  %125 = vmatpush2.msra.mxu0 0.0
  %126 = vmatprep.mubr.f32.mxu0 0.0
  %127 = vmatmul.mubr.f32.gmra.mxu0 %v57
  %v128 = vpop.f32.mrf.mxu0
  %v129 = vadd.f32 %v53, %v128
  %v130 = vpop.f32.mrf.mxu0
  %131 = vmatprep.mubr.f32.mxu0 0.0
  %132 = vmatmul.mubr.f32.gmra.mxu0 %v60
  %v133 = vpop.f32.mrf.mxu0
  %v134 = vadd.f32 %v53, %v133
  %v135 = vpop.f32.mrf.mxu0
  %136 = vdwg.mxu0
  %v137 = vtanh.pop %v129
  %v138 = vtanh.pop %v134
  %v139 = vld [vmem:[%s5] sm:$0xff]
  %v140 = vld [vmem:[%s5 + $0x8] sm:$0xff]
  %v141 = vld [vmem:[%s5 + $0x10] sm:$0xff]
  %v142 = vld [vmem:[%s5 + $0x18] sm:$0xff]
  %v143 = vld [vmem:[%s6] sm:$0x1]
  %v145 = vlaneseq
  %v146 = vshrl.u32 %v145, 7
  %v147 = vsub.s32 0, %v146
  %v148 = vrot.slane %v143, %v147
  %v151 = vsel %vm55, %v137, 0
  %v154 = vsel %vm55, %v138, 0
  %156 = vmatprep.subr.mxu0 0.0
  %157 = vmatpush1.msra.mxu0 0.0
  %158 = vmatprep.subr.mxu0 0.0
  %159 = vmatpush1.msra.mxu0 0.0
  %160 = vmatprep.subr.mxu0 0.0
  %161 = vmatpush1.msra.mxu0 0.0
  %162 = vmatprep.subr.mxu0 0.0
  %163 = vmatpush1.msra.mxu0 0.0
  %164 = vmatprep.subr.mxu0 0.0
  %165 = vmatpush1.msra.mxu0 0.0
  %166 = vmatprep.subr.mxu0 0.0
  %167 = vmatpush1.msra.mxu0 0.0
  %168 = vmatprep.subr.mxu0 0.0
  %169 = vmatpush1.msra.mxu0 0.0
  %170 = vmatprep.subr.mxu0 0.0
  %171 = vmatpush1.msra.mxu0 0.0
  %172 = vmatprep.subr.mxu0 0.0
  %173 = vmatpush1.msra.mxu0 0.0
  %174 = vmatprep.subr.mxu0 0.0
  %175 = vmatpush1.msra.mxu0 0.0
  %176 = vmatprep.subr.mxu0 0.0
  %177 = vmatpush1.msra.mxu0 0.0
  %178 = vmatprep.subr.mxu0 0.0
  %179 = vmatpush1.msra.mxu0 0.0
  %180 = vmatprep.subr.mxu0 0.0
  %181 = vmatpush1.msra.mxu0 %v142
  %182 = vmatprep.subr.mxu0 0.0
  %183 = vmatpush1.msra.mxu0 %v141
  %184 = vmatprep.subr.mxu0 0.0
  %185 = vmatpush1.msra.mxu0 %v140
  %186 = vmatprep.subr.mxu0 0.0
  %187 = vmatpush1.msra.mxu0 %v139
  %188 = vmatprep.subr.mxu0 0.0
  %189 = vmatpush2.msra.mxu0 0.0
  %190 = vmatprep.subr.mxu0 0.0
  %191 = vmatpush2.msra.mxu0 0.0
  %192 = vmatprep.subr.mxu0 0.0
  %193 = vmatpush2.msra.mxu0 0.0
  %194 = vmatprep.subr.mxu0 0.0
  %195 = vmatpush2.msra.mxu0 0.0
  %196 = vmatprep.subr.mxu0 0.0
  %197 = vmatpush2.msra.mxu0 0.0
  %198 = vmatprep.subr.mxu0 0.0
  %199 = vmatpush2.msra.mxu0 0.0
  %200 = vmatprep.subr.mxu0 0.0
  %201 = vmatpush2.msra.mxu0 0.0
  %202 = vmatprep.subr.mxu0 0.0
  %203 = vmatpush2.msra.mxu0 0.0
  %204 = vmatprep.subr.mxu0 0.0
  %205 = vmatpush2.msra.mxu0 0.0
  %206 = vmatprep.subr.mxu0 0.0
  %207 = vmatpush2.msra.mxu0 0.0
  %208 = vmatprep.subr.mxu0 0.0
  %209 = vmatpush2.msra.mxu0 0.0
  %210 = vmatprep.subr.mxu0 0.0
  %211 = vmatpush2.msra.mxu0 0.0
  %212 = vmatprep.subr.mxu0 0.0
  %213 = vmatpush2.msra.mxu0 0.0
  %214 = vmatprep.subr.mxu0 0.0
  %215 = vmatpush2.msra.mxu0 0.0
  %216 = vmatprep.subr.mxu0 0.0
  %217 = vmatpush2.msra.mxu0 0.0
  %218 = vmatprep.subr.mxu0 0.0
  %219 = vmatpush2.msra.mxu0 0.0
  %220 = vmatprep.mubr.f32.mxu0 0.0
  %221 = vmatmul.mubr.f32.gmra.mxu0 %v151
  %v222 = vpop.f32.mrf.mxu0
  %v223 = vadd.f32 %v148, %v222
  %v224 = vpop.f32.mrf.mxu0
  %225 = vmatprep.mubr.f32.mxu0 0.0
  %226 = vmatmul.mubr.f32.gmra.mxu0 %v154
  %v227 = vpop.f32.mrf.mxu0
  %v228 = vadd.f32 %v148, %v227
  %v229 = vpop.f32.mrf.mxu0
  %230 = vdwg.mxu0
  %232 = vset.pattern.permute.xlu0 0
  %233 = vperm.xlu0 %232, %v40
  %v234 = vpop.permute.xlu0 %233
  %237 = vset.pattern.permute.xlu0 0
  %238 = vperm.xlu0 %237, %v41
  %v239 = vpop.permute.xlu0 %238
  %v241 = vmul.f32 %v223, %v234
  %v242 = vmul.f32 %v228, %v239
  %v243 = vld [vmem:[%s7] sm:$0xff]
  %v244 = vld [vmem:[%s7 + $0x8] sm:$0xff]
  %v245 = vld [vmem:[%s7 + $0x10] sm:$0xff]
  %v246 = vld [vmem:[%s7 + $0x18] sm:$0xff]
  %v247 = vld [vmem:[%s7 + $0x20] sm:$0xff]
  %v248 = vld [vmem:[%s8] sm:$0x1]
  %v250 = vlaneseq
  %v251 = vshrl.u32 %v250, 7
  %v252 = vsub.s32 0, %v251
  %v253 = vrot.slane %v248, %v252
  %vm255 = vcmask 326656
  %v257 = vsel %vm255, %v241, 0
  %v260 = vsel %vm255, %v242, 0
  %262 = vmatprep.subr.mxu0 0.0
  %263 = vmatpush1.msra.mxu0 0.0
  %264 = vmatprep.subr.mxu0 0.0
  %265 = vmatpush1.msra.mxu0 0.0
  %266 = vmatprep.subr.mxu0 0.0
  %267 = vmatpush1.msra.mxu0 0.0
  %268 = vmatprep.subr.mxu0 0.0
  %269 = vmatpush1.msra.mxu0 0.0
  %270 = vmatprep.subr.mxu0 0.0
  %271 = vmatpush1.msra.mxu0 0.0
  %272 = vmatprep.subr.mxu0 0.0
  %273 = vmatpush1.msra.mxu0 0.0
  %274 = vmatprep.subr.mxu0 0.0
  %275 = vmatpush1.msra.mxu0 0.0
  %276 = vmatprep.subr.mxu0 0.0
  %277 = vmatpush1.msra.mxu0 0.0
  %278 = vmatprep.subr.mxu0 0.0
  %279 = vmatpush1.msra.mxu0 0.0
  %280 = vmatprep.subr.mxu0 0.0
  %281 = vmatpush1.msra.mxu0 0.0
  %282 = vmatprep.subr.mxu0 0.0
  %283 = vmatpush1.msra.mxu0 0.0
  %284 = vmatprep.subr.mxu0 0.0
  %285 = vmatpush1.msra.mxu0 %v247
  %286 = vmatprep.subr.mxu0 0.0
  %287 = vmatpush1.msra.mxu0 %v246
  %288 = vmatprep.subr.mxu0 0.0
  %289 = vmatpush1.msra.mxu0 %v245
  %290 = vmatprep.subr.mxu0 0.0
  %291 = vmatpush1.msra.mxu0 %v244
  %292 = vmatprep.subr.mxu0 0.0
  %293 = vmatpush1.msra.mxu0 %v243
  %294 = vmatprep.subr.mxu0 0.0
  %295 = vmatpush2.msra.mxu0 0.0
  %296 = vmatprep.subr.mxu0 0.0
  %297 = vmatpush2.msra.mxu0 0.0
  %298 = vmatprep.subr.mxu0 0.0
  %299 = vmatpush2.msra.mxu0 0.0
  %300 = vmatprep.subr.mxu0 0.0
  %301 = vmatpush2.msra.mxu0 0.0
  %302 = vmatprep.subr.mxu0 0.0
  %303 = vmatpush2.msra.mxu0 0.0
  %304 = vmatprep.subr.mxu0 0.0
  %305 = vmatpush2.msra.mxu0 0.0
  %306 = vmatprep.subr.mxu0 0.0
  %307 = vmatpush2.msra.mxu0 0.0
  %308 = vmatprep.subr.mxu0 0.0
  %309 = vmatpush2.msra.mxu0 0.0
  %310 = vmatprep.subr.mxu0 0.0
  %311 = vmatpush2.msra.mxu0 0.0
  %312 = vmatprep.subr.mxu0 0.0
  %313 = vmatpush2.msra.mxu0 0.0
  %314 = vmatprep.subr.mxu0 0.0
  %315 = vmatpush2.msra.mxu0 0.0
  %316 = vmatprep.subr.mxu0 0.0
  %317 = vmatpush2.msra.mxu0 0.0
  %318 = vmatprep.subr.mxu0 0.0
  %319 = vmatpush2.msra.mxu0 0.0
  %320 = vmatprep.subr.mxu0 0.0
  %321 = vmatpush2.msra.mxu0 0.0
  %322 = vmatprep.subr.mxu0 0.0
  %323 = vmatpush2.msra.mxu0 0.0
  %324 = vmatprep.subr.mxu0 0.0
  %325 = vmatpush2.msra.mxu0 0.0
  %326 = vmatprep.mubr.f32.mxu0 0.0
  %327 = vmatmul.mubr.f32.gmra.mxu0 %v257
  %v328 = vpop.f32.mrf.mxu0
  %v329 = vadd.f32 %v253, %v328
  %v330 = vpop.f32.mrf.mxu0
  %331 = vmatprep.mubr.f32.mxu0 0.0
  %332 = vmatmul.mubr.f32.gmra.mxu0 %v260
  %v333 = vpop.f32.mrf.mxu0
  %v334 = vadd.f32 %v253, %v333
  %v335 = vpop.f32.mrf.mxu0
  %336 = vdwg.mxu0
  %v337 = vtanh.pop %v329
  %v338 = vtanh.pop %v334
  %v339 = vld [vmem:[%s9] sm:$0xff]
  %v340 = vld [vmem:[%s9 + $0x8] sm:$0xff]
  %v341 = vld [vmem:[%s9 + $0x10] sm:$0xff]
  %v342 = vld [vmem:[%s9 + $0x18] sm:$0xff]
  %v343 = vld [vmem:[%s10] sm:$0x1]
  %v345 = vlaneseq
  %v346 = vshrl.u32 %v345, 7
  %v347 = vsub.s32 0, %v346
  %v348 = vrot.slane %v343, %v347
  %v351 = vsel %vm55, %v337, 0
  %v354 = vsel %vm55, %v338, 0
  %356 = vmatprep.subr.mxu0 0.0
  %357 = vmatpush1.msra.mxu0 0.0
  %358 = vmatprep.subr.mxu0 0.0
  %359 = vmatpush1.msra.mxu0 0.0
  %360 = vmatprep.subr.mxu0 0.0
  %361 = vmatpush1.msra.mxu0 0.0
  %362 = vmatprep.subr.mxu0 0.0
  %363 = vmatpush1.msra.mxu0 0.0
  %364 = vmatprep.subr.mxu0 0.0
  %365 = vmatpush1.msra.mxu0 0.0
  %366 = vmatprep.subr.mxu0 0.0
  %367 = vmatpush1.msra.mxu0 0.0
  %368 = vmatprep.subr.mxu0 0.0
  %369 = vmatpush1.msra.mxu0 0.0
  %370 = vmatprep.subr.mxu0 0.0
  %371 = vmatpush1.msra.mxu0 0.0
  %372 = vmatprep.subr.mxu0 0.0
  %373 = vmatpush1.msra.mxu0 0.0
  %374 = vmatprep.subr.mxu0 0.0
  %375 = vmatpush1.msra.mxu0 0.0
  %376 = vmatprep.subr.mxu0 0.0
  %377 = vmatpush1.msra.mxu0 0.0
  %378 = vmatprep.subr.mxu0 0.0
  %379 = vmatpush1.msra.mxu0 0.0
  %380 = vmatprep.subr.mxu0 0.0
  %381 = vmatpush1.msra.mxu0 %v342
  %382 = vmatprep.subr.mxu0 0.0
  %383 = vmatpush1.msra.mxu0 %v341
  %384 = vmatprep.subr.mxu0 0.0
  %385 = vmatpush1.msra.mxu0 %v340
  %386 = vmatprep.subr.mxu0 0.0
  %387 = vmatpush1.msra.mxu0 %v339
  %388 = vmatprep.subr.mxu0 0.0
  %389 = vmatpush2.msra.mxu0 0.0
  %390 = vmatprep.subr.mxu0 0.0
  %391 = vmatpush2.msra.mxu0 0.0
  %392 = vmatprep.subr.mxu0 0.0
  %393 = vmatpush2.msra.mxu0 0.0
  %394 = vmatprep.subr.mxu0 0.0
  %395 = vmatpush2.msra.mxu0 0.0
  %396 = vmatprep.subr.mxu0 0.0
  %397 = vmatpush2.msra.mxu0 0.0
  %398 = vmatprep.subr.mxu0 0.0
  %399 = vmatpush2.msra.mxu0 0.0
  %400 = vmatprep.subr.mxu0 0.0
  %401 = vmatpush2.msra.mxu0 0.0
  %402 = vmatprep.subr.mxu0 0.0
  %403 = vmatpush2.msra.mxu0 0.0
  %404 = vmatprep.subr.mxu0 0.0
  %405 = vmatpush2.msra.mxu0 0.0
  %406 = vmatprep.subr.mxu0 0.0
  %407 = vmatpush2.msra.mxu0 0.0
  %408 = vmatprep.subr.mxu0 0.0
  %409 = vmatpush2.msra.mxu0 0.0
  %410 = vmatprep.subr.mxu0 0.0
  %411 = vmatpush2.msra.mxu0 0.0
  %412 = vmatprep.subr.mxu0 0.0
  %413 = vmatpush2.msra.mxu0 0.0
  %414 = vmatprep.subr.mxu0 0.0
  %415 = vmatpush2.msra.mxu0 0.0
  %416 = vmatprep.subr.mxu0 0.0
  %417 = vmatpush2.msra.mxu0 0.0
  %418 = vmatprep.subr.mxu0 0.0
  %419 = vmatpush2.msra.mxu0 0.0
  %420 = vmatprep.mubr.f32.mxu0 0.0
  %421 = vmatmul.mubr.f32.gmra.mxu0 %v351
  %v422 = vpop.f32.mrf.mxu0
  %v423 = vadd.f32 %v348, %v422
  %v424 = vpop.f32.mrf.mxu0
  %425 = vmatprep.mubr.f32.mxu0 0.0
  %426 = vmatmul.mubr.f32.gmra.mxu0 %v354
  %v427 = vpop.f32.mrf.mxu0
  %v428 = vadd.f32 %v348, %v427
  %v429 = vpop.f32.mrf.mxu0
  %430 = vdwg.mxu0
  %v431 = vlaneseq
  %v432 = vshrl.u32 %v431, 7
  %v433 = vadd.s32 %v432, 8
  %v434 = vlaneseq
  %v435 = vand.u32 %v434, 127
  %v436 = vadd.s32 %v432, 2
  %v437 = vadd.s32 %v433, 2
  %vm438 = vcmp.eq.s32.totalorder %v435, %v436
  %vm439 = vcmp.eq.s32.totalorder %v435, %v437
  %v440 = vsel %vm438, 1, 0
  %v441 = vsel %vm439, 1, 0
  %v442 = vcvt.s32.f32 %v440
  %v443 = vcvt.s32.f32 %v441
  %vm444 = vcmask 130048
  %v446 = vsel %vm444, %v442, 0
  %v449 = vsel %vm444, %v443, 0
  %451 = vmatprep.subr.mxu0 0.0
  %452 = vmatpush1.msra.mxu0 0.0
  %453 = vmatprep.subr.mxu0 0.0
  %454 = vmatpush1.msra.mxu0 0.0
  %455 = vmatprep.subr.mxu0 0.0
  %456 = vmatpush1.msra.mxu0 0.0
  %457 = vmatprep.subr.mxu0 0.0
  %458 = vmatpush1.msra.mxu0 0.0
  %459 = vmatprep.subr.mxu0 0.0
  %460 = vmatpush1.msra.mxu0 0.0
  %461 = vmatprep.subr.mxu0 0.0
  %462 = vmatpush1.msra.mxu0 0.0
  %463 = vmatprep.subr.mxu0 0.0
  %464 = vmatpush1.msra.mxu0 0.0
  %465 = vmatprep.subr.mxu0 0.0
  %466 = vmatpush1.msra.mxu0 0.0
  %467 = vmatprep.subr.mxu0 0.0
  %468 = vmatpush1.msra.mxu0 0.0
  %469 = vmatprep.subr.mxu0 0.0
  %470 = vmatpush1.msra.mxu0 0.0
  %471 = vmatprep.subr.mxu0 0.0
  %472 = vmatpush1.msra.mxu0 0.0
  %473 = vmatprep.subr.mxu0 0.0
  %474 = vmatpush1.msra.mxu0 0.0
  %475 = vmatprep.subr.mxu0 0.0
  %476 = vmatpush1.msra.mxu0 0.0
  %477 = vmatprep.subr.mxu0 0.0
  %478 = vmatpush1.msra.mxu0 0.0
  %479 = vmatprep.subr.mxu0 0.0
  %480 = vmatpush1.msra.mxu0 %v428
  %481 = vmatprep.subr.mxu0 0.0
  %482 = vmatpush1.msra.mxu0 %v423
  %483 = vmatprep.subr.mxu0 0.0
  %484 = vmatpush2.msra.mxu0 0.0
  %485 = vmatprep.subr.mxu0 0.0
  %486 = vmatpush2.msra.mxu0 0.0
  %487 = vmatprep.subr.mxu0 0.0
  %488 = vmatpush2.msra.mxu0 0.0
  %489 = vmatprep.subr.mxu0 0.0
  %490 = vmatpush2.msra.mxu0 0.0
  %491 = vmatprep.subr.mxu0 0.0
  %492 = vmatpush2.msra.mxu0 0.0
  %493 = vmatprep.subr.mxu0 0.0
  %494 = vmatpush2.msra.mxu0 0.0
  %495 = vmatprep.subr.mxu0 0.0
  %496 = vmatpush2.msra.mxu0 0.0
  %497 = vmatprep.subr.mxu0 0.0
  %498 = vmatpush2.msra.mxu0 0.0
  %499 = vmatprep.subr.mxu0 0.0
  %500 = vmatpush2.msra.mxu0 0.0
  %501 = vmatprep.subr.mxu0 0.0
  %502 = vmatpush2.msra.mxu0 0.0
  %503 = vmatprep.subr.mxu0 0.0
  %504 = vmatpush2.msra.mxu0 0.0
  %505 = vmatprep.subr.mxu0 0.0
  %506 = vmatpush2.msra.mxu0 0.0
  %507 = vmatprep.subr.mxu0 0.0
  %508 = vmatpush2.msra.mxu0 0.0
  %509 = vmatprep.subr.mxu0 0.0
  %510 = vmatpush2.msra.mxu0 0.0
  %511 = vmatprep.subr.mxu0 0.0
  %512 = vmatpush2.msra.mxu0 0.0
  %513 = vmatprep.subr.mxu0 0.0
  %514 = vmatpush2.msra.mxu0 0.0
  %515 = vmatprep.mubr.f32.mxu0 0.0
  %516 = vmatmul.mubr.f32.gmra.mxu0 %v446
  %v517 = vpop.f32.mrf.mxu0
  %v518 = vadd.f32 0.0, %v517
  %v519 = vpop.f32.mrf.mxu0
  %520 = vmatprep.mubr.f32.mxu0 0.0
  %521 = vmatmul.mubr.f32.gmra.mxu0 %v449
  %v522 = vpop.f32.mrf.mxu0
  %v523 = vadd.f32 0.0, %v522
  %v524 = vpop.f32.mrf.mxu0
  %525 = vdwg.mxu0
  %527 = vset.pattern.permute.xlu0 0
  %528 = vperm.xlu0 %527, %v42
  %v529 = vpop.permute.xlu0 %528
  %532 = vset.pattern.permute.xlu0 0
  %533 = vperm.xlu0 %532, %v43
  %v534 = vpop.permute.xlu0 %533
  %v536 = vmul.f32 %v518, %v529
  %v537 = vmul.f32 %v523, %v534
  %v538 = vadd.f32 %v241, %v536
  %v539 = vadd.f32 %v242, %v537
  %542 = vrot.lane.b32.xlu0 %v536, 32
  %v543 = vpop.permute.xlu0 %542
  %544 = vrot.lane.b32.xlu0 %v537, 32
  %v545 = vpop.permute.xlu0 %544
  %vm548 = vcmask 64512
  %v549 = vsel %vm548, %v538, %v241
  %v550 = vsel %vm548, %v539, %v242
  %v551 = vsel %vm255, %v549, %v543
  %v552 = vsel %vm255, %v550, %v545
  %vm553 = vcmask 588800
  %554 = vst.msk [vmem:[%s11] sm:$0xff] %vm553, %v551
  %555 = vst.msk [vmem:[%s11 + $0x8] sm:$0xff] %vm553, %v552
  // Predicated region
  $region46: #{forward.2} parent=0 // pred_check
    _
  $region47: #{forward.2} parent=0 // pred_check_branch
    %557 = sbr.rel (0) target = $region49
  $region48: #{forward.2} parent=0 // pred_region
    _
  $region49: #{forward.2} parent=0 // pred_fallthru
    _
  // Predicated region
  $region50: #{forward.2} parent=0 // pred_check
    _
  $region51: #{forward.2} parent=0 // pred_check_branch
    %559 = sbr.rel (0) target = $region53
  $region52: #{forward.2} parent=0 // pred_region
    _
  $region53: #{forward.2} parent=0 // pred_fallthru
    _

// kernel: forward.3
$region0: #{forward.3}
  #allocation0 [shape = 'u32[]', space=smem, size = 0x4, offset = 0x4, fixed_abs, tag = 'smem constant byte address 0x4 - core index']
  #allocation1 [shape = 'u32[144,128]{1,0:T(1,128)}', space=vmem, size = 0x12000, scoped, tag = 'internal scratch']
  #allocation2 [shape = 'f32[8,8]{1,0:T(8,128)}', space=vmem, size = 0x1000, scoped, tag = 'scratch operand']
  %s0 = inlined_call_operand.vmem [shape: f32[8,2,8], index: 0, kind: input, shape index: {}]
  %s1 = inlined_call_operand.vmem [shape: f32[8,16,4], index: 1, kind: input, shape index: {}]
  %s2 = inlined_call_operand.vmem [shape: f32[8,16,4], index: 2, kind: input, shape index: {}]
  %s3 = inlined_call_operand.vmem [shape: f32[8,8,8], index: 3, kind: input, shape index: {}]
  %s4 = inlined_call_operand.vmem [shape: f32[8,8,8], index: 4, kind: input, shape index: {}]
  %s5 = inlined_call_operand.vmem [shape: f32[8,2,32], index: 5, kind: input, shape index: {}]
  %s6 = inlined_call_operand.vmem [shape: f32[1,8], index: 6, kind: input, shape index: {}]
  %s7 = inlined_call_operand.vmem [shape: f32[1,8], index: 7, kind: input, shape index: {}]
  %s8 = inlined_call_operand.vmem [shape: f32[1,8], index: 8, kind: input, shape index: {}]
  %s9 = inlined_call_operand.vmem [shape: f32[8,16], index: 9, kind: input, shape index: {}]
  %s10 = inlined_call_operand.vmem [shape: f32[1,16], index: 10, kind: input, shape index: {}]
  %s11 = inlined_call_operand.vmem [shape: f32[16,8], index: 11, kind: input, shape index: {}]
  %s12 = inlined_call_operand.vmem [shape: f32[8,32], index: 12, kind: input, shape index: {}]
  %s13 = inlined_call_operand.vmem [shape: f32[1,32], index: 13, kind: input, shape index: {}]
  %s14 = inlined_call_operand.vmem [shape: f32[8,8,8], index: 14, kind: output, shape index: {0}]
  %s15 = inlined_call_operand.vmem [shape: f32[8,1,2], index: 15, kind: output, shape index: {1}]
  %s16 = inlined_call_operand.vmem [shape: f32[8,1,2], index: 16, kind: output, shape index: {2}]
  %s17 = inlined_call_operand.vmem [shape: f32[8,2,8], index: 17, kind: output, shape index: {3}]
  %18 = xla_tuple %s14, %s15, %s16, %s17
  %s19 = sld [smem:[#allocation0]]
  $region117: #{forward.3} parent=0
    _
  %s21 = ssub.s32 1, %s19
  %s22 = scalar_select 0, %s21, %s19
  loop: start=0, step=1, limit=10
  $region2: #{forward.3} parent=0 // loop_pre_header
    _
  $region3: #{forward.3} parent=0 // loop_header
    %s24 = sphi 0, %s28
    %p25 = scmp.ge.s32.totalorder %s24, 10
    %s34 = sphi 0, %s36
    %s37 = sphi 0, %s34
    %s38 = sphi 0, %s37
    %s54 = sphi 0, %s38
    %s60 = sphi 0, %s62
    %s63 = sphi 0, %s60
    %s64 = sphi 0, %s63
    %s80 = sphi 0, %s64
    %s86 = sphi 0, %s88
    %s89 = sphi 0, %s86
    %s90 = sphi 0, %s89
    %s106 = sphi 0, %s90
    %s112 = sphi 0, %s114
    %s115 = sphi 0, %s112
    %s116 = sphi 0, %s115
    %s132 = sphi 0, %s116
    %s138 = sphi 0, %s140
    %s141 = sphi 0, %s138
    %s142 = sphi 0, %s141
    %s158 = sphi 0, %s142
    %s164 = sphi 0, %s166
    %s167 = sphi 0, %s164
    %s168 = sphi 0, %s167
    %s184 = sphi 0, %s168
    %s188 = sphi 0, %s188
    %s190 = sphi 0, %s188
    %s191 = sphi 0, %s190
    %s205 = sphi 0, %s191
    %s209 = sphi 0, %s209
    %s211 = sphi 0, %s209
    %s212 = sphi 0, %s211
    %s226 = sphi 0, %s212
    %s230 = sphi 0, %s230
    %s232 = sphi 0, %s230
    %s233 = sphi 0, %s232
    %s247 = sphi 0, %s233
    %s251 = sphi 0, %s251
    %s253 = sphi 0, %s251
    %s254 = sphi 0, %s253
    %s268 = sphi 0, %s254
    %s272 = sphi 0, %s272
    %s274 = sphi 0, %s272
    %s275 = sphi 0, %s274
    %s289 = sphi 0, %s275
    %s293 = sphi 0, %s293
    %s295 = sphi 0, %s293
    %s296 = sphi 0, %s295
    %s310 = sphi 0, %s296
    %s314 = sphi 0, %s314
    %s316 = sphi 0, %s314
    %s317 = sphi 0, %s316
    %s331 = sphi 0, %s317
    %s335 = sphi 0, %s335
    %s337 = sphi 0, %s335
    %s338 = sphi 0, %s337
    %s352 = sphi 0, %s338
    %s358 = sphi 0, %s360
    %s361 = sphi 0, %s358
    %s362 = sphi 0, %s361
    %s378 = sphi 0, %s362
    %s384 = sphi 0, %s386
    %s387 = sphi 0, %s384
    %s388 = sphi 0, %s387
    %s404 = sphi 0, %s388
    %s410 = sphi 0, %s412
    %s413 = sphi 0, %s410
    %s414 = sphi 0, %s413
    %s430 = sphi 0, %s414
    %s436 = sphi 0, %s438
    %s439 = sphi 0, %s436
    %s440 = sphi 0, %s439
    %s456 = sphi 0, %s440
  $region4: #{forward.3} parent=0 // loop_header_branch
    %27 = sbr.rel (%p25) target = $region8
  $region5: #{forward.3} parent=0 // loop_body
    %s29 = ssub.s32 %s24, 1
    %s30 = ssub.s32 %s24, 2
    %s31 = sadd.s32 %s24, 1
    %s32 = ssub.s32 %s24, %s31
    %p33 = scmp.eq.s32.totalorder %s32, 0
    %s35 = sadd.s32 %s34, 1
    %s36 = scalar_select %p33, %s34, %s35
    %p39 = pneg %p33
    %p40 = scmp.eq.s32.totalorder %s24, 7
    %p41 = por %p39, %p40
    %p42 = scmp.ne.s32.totalorder %s34, %s37
    %p43 = scmp.eq.s32.totalorder %s24, 0
    %p44 = por %p42, %p43
    %p45 = scmp.ne.s32.totalorder %s34, %s37
    %p46 = scmp.eq.s32.totalorder %s29, 7
    %p47 = por %p45, %p46
    %p48 = scmp.ne.s32.totalorder %s37, %s38
    %p49 = scmp.eq.s32.totalorder %s29, 0
    %p50 = por %p48, %p49
    %p51 = scmp.ne.s32.totalorder %s37, %s38
    %p52 = scmp.eq.s32.totalorder %s30, 7
    %p53 = por %p51, %p52
    %p55 = scmp.ne.s32.totalorder %s38, %s54
    %p56 = scmp.eq.s32.totalorder %s30, 0
    %p57 = por %p55, %p56
    %s58 = ssub.s32 %s24, %s31
    %p59 = scmp.eq.s32.totalorder %s58, 0
    %s61 = sadd.s32 %s60, 1
    %s62 = scalar_select %p59, %s60, %s61
    %p65 = pneg %p59
    %p66 = scmp.eq.s32.totalorder %s24, 7
    %p67 = por %p65, %p66
    %p68 = scmp.ne.s32.totalorder %s60, %s63
    %p69 = scmp.eq.s32.totalorder %s24, 0
    %p70 = por %p68, %p69
    %p71 = scmp.ne.s32.totalorder %s60, %s63
    %p72 = scmp.eq.s32.totalorder %s29, 7
    %p73 = por %p71, %p72
    %p74 = scmp.ne.s32.totalorder %s63, %s64
    %p75 = scmp.eq.s32.totalorder %s29, 0
    %p76 = por %p74, %p75
    %p77 = scmp.ne.s32.totalorder %s63, %s64
    %p78 = scmp.eq.s32.totalorder %s30, 7
    %p79 = por %p77, %p78
    %p81 = scmp.ne.s32.totalorder %s64, %s80
    %p82 = scmp.eq.s32.totalorder %s30, 0
    %p83 = por %p81, %p82
    %s84 = ssub.s32 %s24, %s31
    %p85 = scmp.eq.s32.totalorder %s84, 0
    %s87 = sadd.s32 %s86, 1
    %s88 = scalar_select %p85, %s86, %s87
    %p91 = pneg %p85
    %p92 = scmp.eq.s32.totalorder %s24, 7
    %p93 = por %p91, %p92
    %p94 = scmp.ne.s32.totalorder %s86, %s89
    %p95 = scmp.eq.s32.totalorder %s24, 0
    %p96 = por %p94, %p95
    %p97 = scmp.ne.s32.totalorder %s86, %s89
    %p98 = scmp.eq.s32.totalorder %s29, 7
    %p99 = por %p97, %p98
    %p100 = scmp.ne.s32.totalorder %s89, %s90
    %p101 = scmp.eq.s32.totalorder %s29, 0
    %p102 = por %p100, %p101
    %p103 = scmp.ne.s32.totalorder %s89, %s90
    %p104 = scmp.eq.s32.totalorder %s30, 7
    %p105 = por %p103, %p104
    %p107 = scmp.ne.s32.totalorder %s90, %s106
    %p108 = scmp.eq.s32.totalorder %s30, 0
    %p109 = por %p107, %p108
    %s110 = ssub.s32 %s24, %s31
    %p111 = scmp.eq.s32.totalorder %s110, 0
    %s113 = sadd.s32 %s112, 1
    %s114 = scalar_select %p111, %s112, %s113
    %p117 = pneg %p111
    %p118 = scmp.eq.s32.totalorder %s24, 7
    %p119 = por %p117, %p118
    %p120 = scmp.ne.s32.totalorder %s112, %s115
    %p121 = scmp.eq.s32.totalorder %s24, 0
    %p122 = por %p120, %p121
    %p123 = scmp.ne.s32.totalorder %s112, %s115
    %p124 = scmp.eq.s32.totalorder %s29, 7
    %p125 = por %p123, %p124
    %p126 = scmp.ne.s32.totalorder %s115, %s116
    %p127 = scmp.eq.s32.totalorder %s29, 0
    %p128 = por %p126, %p127
    %p129 = scmp.ne.s32.totalorder %s115, %s116
    %p130 = scmp.eq.s32.totalorder %s30, 7
    %p131 = por %p129, %p130
    %p133 = scmp.ne.s32.totalorder %s116, %s132
    %p134 = scmp.eq.s32.totalorder %s30, 0
    %p135 = por %p133, %p134
    %s136 = ssub.s32 %s24, %s31
    %p137 = scmp.eq.s32.totalorder %s136, 0
    %s139 = sadd.s32 %s138, 1
    %s140 = scalar_select %p137, %s138, %s139
    %p143 = pneg %p137
    %p144 = scmp.eq.s32.totalorder %s24, 7
    %p145 = por %p143, %p144
    %p146 = scmp.ne.s32.totalorder %s138, %s141
    %p147 = scmp.eq.s32.totalorder %s24, 0
    %p148 = por %p146, %p147
    %p149 = scmp.ne.s32.totalorder %s138, %s141
    %p150 = scmp.eq.s32.totalorder %s29, 7
    %p151 = por %p149, %p150
    %p152 = scmp.ne.s32.totalorder %s141, %s142
    %p153 = scmp.eq.s32.totalorder %s29, 0
    %p154 = por %p152, %p153
    %p155 = scmp.ne.s32.totalorder %s141, %s142
    %p156 = scmp.eq.s32.totalorder %s30, 7
    %p157 = por %p155, %p156
    %p159 = scmp.ne.s32.totalorder %s142, %s158
    %p160 = scmp.eq.s32.totalorder %s30, 0
    %p161 = por %p159, %p160
    %s162 = ssub.s32 %s24, %s31
    %p163 = scmp.eq.s32.totalorder %s162, 0
    %s165 = sadd.s32 %s164, 1
    %s166 = scalar_select %p163, %s164, %s165
    %p169 = pneg %p163
    %p170 = scmp.eq.s32.totalorder %s24, 7
    %p171 = por %p169, %p170
    %p172 = scmp.ne.s32.totalorder %s164, %s167
    %p173 = scmp.eq.s32.totalorder %s24, 0
    %p174 = por %p172, %p173
    %p175 = scmp.ne.s32.totalorder %s164, %s167
    %p176 = scmp.eq.s32.totalorder %s29, 7
    %p177 = por %p175, %p176
    %p178 = scmp.ne.s32.totalorder %s167, %s168
    %p179 = scmp.eq.s32.totalorder %s29, 0
    %p180 = por %p178, %p179
    %p181 = scmp.ne.s32.totalorder %s167, %s168
    %p182 = scmp.eq.s32.totalorder %s30, 7
    %p183 = por %p181, %p182
    %p185 = scmp.ne.s32.totalorder %s168, %s184
    %p186 = scmp.eq.s32.totalorder %s30, 0
    %p187 = por %p185, %p186
    %s189 = sadd.s32 %s188, 1
    %p192 = scmp.eq.s32.totalorder %s24, 7
    %p193 = scmp.ne.s32.totalorder %s188, %s190
    %p194 = scmp.eq.s32.totalorder %s24, 0
    %p195 = por %p193, %p194
    %p196 = scmp.ne.s32.totalorder %s188, %s190
    %p197 = scmp.eq.s32.totalorder %s29, 7
    %p198 = por %p196, %p197
    %p199 = scmp.ne.s32.totalorder %s190, %s191
    %p200 = scmp.eq.s32.totalorder %s29, 0
    %p201 = por %p199, %p200
    %p202 = scmp.ne.s32.totalorder %s190, %s191
    %p203 = scmp.eq.s32.totalorder %s30, 7
    %p204 = por %p202, %p203
    %p206 = scmp.ne.s32.totalorder %s191, %s205
    %p207 = scmp.eq.s32.totalorder %s30, 0
    %p208 = por %p206, %p207
    %s210 = sadd.s32 %s209, 1
    %p213 = scmp.eq.s32.totalorder %s24, 7
    %p214 = scmp.ne.s32.totalorder %s209, %s211
    %p215 = scmp.eq.s32.totalorder %s24, 0
    %p216 = por %p214, %p215
    %p217 = scmp.ne.s32.totalorder %s209, %s211
    %p218 = scmp.eq.s32.totalorder %s29, 7
    %p219 = por %p217, %p218
    %p220 = scmp.ne.s32.totalorder %s211, %s212
    %p221 = scmp.eq.s32.totalorder %s29, 0
    %p222 = por %p220, %p221
    %p223 = scmp.ne.s32.totalorder %s211, %s212
    %p224 = scmp.eq.s32.totalorder %s30, 7
    %p225 = por %p223, %p224
    %p227 = scmp.ne.s32.totalorder %s212, %s226
    %p228 = scmp.eq.s32.totalorder %s30, 0
    %p229 = por %p227, %p228
    %s231 = sadd.s32 %s230, 1
    %p234 = scmp.eq.s32.totalorder %s24, 7
    %p235 = scmp.ne.s32.totalorder %s230, %s232
    %p236 = scmp.eq.s32.totalorder %s24, 0
    %p237 = por %p235, %p236
    %p238 = scmp.ne.s32.totalorder %s230, %s232
    %p239 = scmp.eq.s32.totalorder %s29, 7
    %p240 = por %p238, %p239
    %p241 = scmp.ne.s32.totalorder %s232, %s233
    %p242 = scmp.eq.s32.totalorder %s29, 0
    %p243 = por %p241, %p242
    %p244 = scmp.ne.s32.totalorder %s232, %s233
    %p245 = scmp.eq.s32.totalorder %s30, 7
    %p246 = por %p244, %p245
    %p248 = scmp.ne.s32.totalorder %s233, %s247
    %p249 = scmp.eq.s32.totalorder %s30, 0
    %p250 = por %p248, %p249
    %s252 = sadd.s32 %s251, 1
    %p255 = scmp.eq.s32.totalorder %s24, 7
    %p256 = scmp.ne.s32.totalorder %s251, %s253
    %p257 = scmp.eq.s32.totalorder %s24, 0
    %p258 = por %p256, %p257
    %p259 = scmp.ne.s32.totalorder %s251, %s253
    %p260 = scmp.eq.s32.totalorder %s29, 7
    %p261 = por %p259, %p260
    %p262 = scmp.ne.s32.totalorder %s253, %s254
    %p263 = scmp.eq.s32.totalorder %s29, 0
    %p264 = por %p262, %p263
    %p265 = scmp.ne.s32.totalorder %s253, %s254
    %p266 = scmp.eq.s32.totalorder %s30, 7
    %p267 = por %p265, %p266
    %p269 = scmp.ne.s32.totalorder %s254, %s268
    %p270 = scmp.eq.s32.totalorder %s30, 0
    %p271 = por %p269, %p270
    %s273 = sadd.s32 %s272, 1
    %p276 = scmp.eq.s32.totalorder %s24, 7
    %p277 = scmp.ne.s32.totalorder %s272, %s274
    %p278 = scmp.eq.s32.totalorder %s24, 0
    %p279 = por %p277, %p278
    %p280 = scmp.ne.s32.totalorder %s272, %s274
    %p281 = scmp.eq.s32.totalorder %s29, 7
    %p282 = por %p280, %p281
    %p283 = scmp.ne.s32.totalorder %s274, %s275
    %p284 = scmp.eq.s32.totalorder %s29, 0
    %p285 = por %p283, %p284
    %p286 = scmp.ne.s32.totalorder %s274, %s275
    %p287 = scmp.eq.s32.totalorder %s30, 7
    %p288 = por %p286, %p287
    %p290 = scmp.ne.s32.totalorder %s275, %s289
    %p291 = scmp.eq.s32.totalorder %s30, 0
    %p292 = por %p290, %p291
    %s294 = sadd.s32 %s293, 1
    %p297 = scmp.eq.s32.totalorder %s24, 7
    %p298 = scmp.ne.s32.totalorder %s293, %s295
    %p299 = scmp.eq.s32.totalorder %s24, 0
    %p300 = por %p298, %p299
    %p301 = scmp.ne.s32.totalorder %s293, %s295
    %p302 = scmp.eq.s32.totalorder %s29, 7
    %p303 = por %p301, %p302
    %p304 = scmp.ne.s32.totalorder %s295, %s296
    %p305 = scmp.eq.s32.totalorder %s29, 0
    %p306 = por %p304, %p305
    %p307 = scmp.ne.s32.totalorder %s295, %s296
    %p308 = scmp.eq.s32.totalorder %s30, 7
    %p309 = por %p307, %p308
    %p311 = scmp.ne.s32.totalorder %s296, %s310
    %p312 = scmp.eq.s32.totalorder %s30, 0
    %p313 = por %p311, %p312
    %s315 = sadd.s32 %s314, 1
    %p318 = scmp.eq.s32.totalorder %s24, 7
    %p319 = scmp.ne.s32.totalorder %s314, %s316
    %p320 = scmp.eq.s32.totalorder %s24, 0
    %p321 = por %p319, %p320
    %p322 = scmp.ne.s32.totalorder %s314, %s316
    %p323 = scmp.eq.s32.totalorder %s29, 7
    %p324 = por %p322, %p323
    %p325 = scmp.ne.s32.totalorder %s316, %s317
    %p326 = scmp.eq.s32.totalorder %s29, 0
    %p327 = por %p325, %p326
    %p328 = scmp.ne.s32.totalorder %s316, %s317
    %p329 = scmp.eq.s32.totalorder %s30, 7
    %p330 = por %p328, %p329
    %p332 = scmp.ne.s32.totalorder %s317, %s331
    %p333 = scmp.eq.s32.totalorder %s30, 0
    %p334 = por %p332, %p333
    %s336 = sadd.s32 %s335, 1
    %p339 = scmp.eq.s32.totalorder %s24, 7
    %p340 = scmp.ne.s32.totalorder %s335, %s337
    %p341 = scmp.eq.s32.totalorder %s24, 0
    %p342 = por %p340, %p341
    %p343 = scmp.ne.s32.totalorder %s335, %s337
    %p344 = scmp.eq.s32.totalorder %s29, 7
    %p345 = por %p343, %p344
    %p346 = scmp.ne.s32.totalorder %s337, %s338
    %p347 = scmp.eq.s32.totalorder %s29, 0
    %p348 = por %p346, %p347
    %p349 = scmp.ne.s32.totalorder %s337, %s338
    %p350 = scmp.eq.s32.totalorder %s30, 7
    %p351 = por %p349, %p350
    %p353 = scmp.ne.s32.totalorder %s338, %s352
    %p354 = scmp.eq.s32.totalorder %s30, 0
    %p355 = por %p353, %p354
    %s356 = ssub.s32 %s24, %s31
    %p357 = scmp.eq.s32.totalorder %s356, 0
    %s359 = sadd.s32 %s358, 1
    %s360 = scalar_select %p357, %s358, %s359
    %p363 = pneg %p357
    %p364 = scmp.eq.s32.totalorder %s24, 7
    %p365 = por %p363, %p364
    %p366 = scmp.ne.s32.totalorder %s358, %s361
    %p367 = scmp.eq.s32.totalorder %s24, 0
    %p368 = por %p366, %p367
    %p369 = scmp.ne.s32.totalorder %s358, %s361
    %p370 = scmp.eq.s32.totalorder %s29, 7
    %p371 = por %p369, %p370
    %p372 = scmp.ne.s32.totalorder %s361, %s362
    %p373 = scmp.eq.s32.totalorder %s29, 0
    %p374 = por %p372, %p373
    %p375 = scmp.ne.s32.totalorder %s361, %s362
    %p376 = scmp.eq.s32.totalorder %s30, 7
    %p377 = por %p375, %p376
    %p379 = scmp.ne.s32.totalorder %s362, %s378
    %p380 = scmp.eq.s32.totalorder %s30, 0
    %p381 = por %p379, %p380
    %s382 = ssub.s32 %s24, %s31
    %p383 = scmp.eq.s32.totalorder %s382, 0
    %s385 = sadd.s32 %s384, 1
    %s386 = scalar_select %p383, %s384, %s385
    %p389 = pneg %p383
    %p390 = scmp.eq.s32.totalorder %s24, 7
    %p391 = por %p389, %p390
    %p392 = scmp.ne.s32.totalorder %s384, %s387
    %p393 = scmp.eq.s32.totalorder %s24, 0
    %p394 = por %p392, %p393
    %p395 = scmp.ne.s32.totalorder %s384, %s387
    %p396 = scmp.eq.s32.totalorder %s29, 7
    %p397 = por %p395, %p396
    %p398 = scmp.ne.s32.totalorder %s387, %s388
    %p399 = scmp.eq.s32.totalorder %s29, 0
    %p400 = por %p398, %p399
    %p401 = scmp.ne.s32.totalorder %s387, %s388
    %p402 = scmp.eq.s32.totalorder %s30, 7
    %p403 = por %p401, %p402
    %p405 = scmp.ne.s32.totalorder %s388, %s404
    %p406 = scmp.eq.s32.totalorder %s30, 0
    %p407 = por %p405, %p406
    %s408 = ssub.s32 %s24, %s31
    %p409 = scmp.eq.s32.totalorder %s408, 0
    %s411 = sadd.s32 %s410, 1
    %s412 = scalar_select %p409, %s410, %s411
    %p415 = pneg %p409
    %p416 = scmp.eq.s32.totalorder %s24, 7
    %p417 = por %p415, %p416
    %p418 = scmp.ne.s32.totalorder %s410, %s413
    %p419 = scmp.eq.s32.totalorder %s24, 0
    %p420 = por %p418, %p419
    %p421 = scmp.ne.s32.totalorder %s410, %s413
    %p422 = scmp.eq.s32.totalorder %s29, 7
    %p423 = por %p421, %p422
    %p424 = scmp.ne.s32.totalorder %s413, %s414
    %p425 = scmp.eq.s32.totalorder %s29, 0
    %p426 = por %p424, %p425
    %p427 = scmp.ne.s32.totalorder %s413, %s414
    %p428 = scmp.eq.s32.totalorder %s30, 7
    %p429 = por %p427, %p428
    %p431 = scmp.ne.s32.totalorder %s414, %s430
    %p432 = scmp.eq.s32.totalorder %s30, 0
    %p433 = por %p431, %p432
    %s434 = ssub.s32 %s24, %s31
    %p435 = scmp.eq.s32.totalorder %s434, 0
    %s437 = sadd.s32 %s436, 1
    %s438 = scalar_select %p435, %s436, %s437
    %p441 = pneg %p435
    %p442 = scmp.eq.s32.totalorder %s24, 7
    %p443 = por %p441, %p442
    %p444 = scmp.ne.s32.totalorder %s436, %s439
    %p445 = scmp.eq.s32.totalorder %s24, 0
    %p446 = por %p444, %p445
    %p447 = scmp.ne.s32.totalorder %s436, %s439
    %p448 = scmp.eq.s32.totalorder %s29, 7
    %p449 = por %p447, %p448
    %p450 = scmp.ne.s32.totalorder %s439, %s440
    %p451 = scmp.eq.s32.totalorder %s29, 0
    %p452 = por %p450, %p451
    %p453 = scmp.ne.s32.totalorder %s439, %s440
    %p454 = scmp.eq.s32.totalorder %s30, 7
    %p455 = por %p453, %p454
    %p457 = scmp.ne.s32.totalorder %s440, %s456
    %p458 = scmp.eq.s32.totalorder %s30, 0
    %p459 = por %p457, %p458
    %p460 = scmp.le.s32.totalorder 1, %s24
    %p461 = scmp.lt.s32.totalorder %s24, 9
    %p462 = pnand %p460, %p461
    %p463 = pneg %p462
    // Predicated region
    $region9: #{forward.3} parent=5 // pred_check
      _
    $region10: #{forward.3} parent=5 // pred_check_branch
      %465 = sbr.rel (%p462) target = $region12
    $region11: #{forward.3} parent=5 // pred_region
      %s466 = ssub.s32 %s24, 1
      // Predicated region
      $region13: #{forward.3} parent=11 // pred_check
        %p467 = pneg %p201
      $region14: #{forward.3} parent=11 // pred_check_branch
        %469 = sbr.rel (%p467) target = $region16
      $region15: #{forward.3} parent=11 // pred_region
        _
      $region16: #{forward.3} parent=11 // pred_fallthru
        _
      // Predicated region
      $region17: #{forward.3} parent=11 // pred_check
        %p470 = pneg %p222
      $region18: #{forward.3} parent=11 // pred_check_branch
        %472 = sbr.rel (%p470) target = $region20
      $region19: #{forward.3} parent=11 // pred_region
        _
      $region20: #{forward.3} parent=11 // pred_fallthru
        _
      // Predicated region
      $region21: #{forward.3} parent=11 // pred_check
        %p473 = pneg %p243
      $region22: #{forward.3} parent=11 // pred_check_branch
        %475 = sbr.rel (%p473) target = $region24
      $region23: #{forward.3} parent=11 // pred_region
        _
      $region24: #{forward.3} parent=11 // pred_fallthru
        _
      // Predicated region
      $region25: #{forward.3} parent=11 // pred_check
        %p476 = pneg %p264
      $region26: #{forward.3} parent=11 // pred_check_branch
        %478 = sbr.rel (%p476) target = $region28
      $region27: #{forward.3} parent=11 // pred_region
        _
      $region28: #{forward.3} parent=11 // pred_fallthru
        _
      // Predicated region
      $region29: #{forward.3} parent=11 // pred_check
        %p479 = pneg %p285
      $region30: #{forward.3} parent=11 // pred_check_branch
        %481 = sbr.rel (%p479) target = $region32
      $region31: #{forward.3} parent=11 // pred_region
        _
      $region32: #{forward.3} parent=11 // pred_fallthru
        _
      // Predicated region
      $region33: #{forward.3} parent=11 // pred_check
        %p482 = pneg %p306
      $region34: #{forward.3} parent=11 // pred_check_branch
        %484 = sbr.rel (%p482) target = $region36
      $region35: #{forward.3} parent=11 // pred_region
        _
      $region36: #{forward.3} parent=11 // pred_fallthru
        _
      // Predicated region
      $region37: #{forward.3} parent=11 // pred_check
        %p485 = pneg %p327
      $region38: #{forward.3} parent=11 // pred_check_branch
        %487 = sbr.rel (%p485) target = $region40
      $region39: #{forward.3} parent=11 // pred_region
        _
      $region40: #{forward.3} parent=11 // pred_fallthru
        _
      // Predicated region
      $region41: #{forward.3} parent=11 // pred_check
        %p488 = pneg %p348
      $region42: #{forward.3} parent=11 // pred_check_branch
        %490 = sbr.rel (%p488) target = $region44
      $region43: #{forward.3} parent=11 // pred_region
        _
      $region44: #{forward.3} parent=11 // pred_fallthru
        _
    $region12: #{forward.3} parent=5 // pred_fallthru
      _
    %p491 = scmp.lt.s32.totalorder %s24, 8
    // Predicated region
    $region45: #{forward.3} parent=5 // pred_check
      %p492 = pneg %p491
    $region46: #{forward.3} parent=5 // pred_check_branch
      %494 = sbr.rel (%p492) target = $region48
    $region47: #{forward.3} parent=5 // pred_region
      // Predicated region
      $region49: #{forward.3} parent=47 // pred_check
        %p495 = pneg %p44
      $region50: #{forward.3} parent=47 // pred_check_branch
        %497 = sbr.rel (%p495) target = $region52
      $region51: #{forward.3} parent=47 // pred_region
        %p498 = scmp.lt.s32.totalorder %s24, 7
        %s499 = scalar_select %p498, %s24, 7
        %s500 = smul.addr %s499, 2
        %s501 = scalar_lea.vmem %s0, %s500
      $region52: #{forward.3} parent=47 // pred_fallthru
        _
      // Predicated region
      $region53: #{forward.3} parent=47 // pred_check
        %p502 = pneg %p70
      $region54: #{forward.3} parent=47 // pred_check_branch
        %504 = sbr.rel (%p502) target = $region56
      $region55: #{forward.3} parent=47 // pred_region
        %p505 = scmp.lt.s32.totalorder %s24, 7
        %s506 = scalar_select %p505, %s24, 7
        %s507 = smul.addr %s506, 2
        %s508 = smul.addr %s507, 8
        %s509 = scalar_lea.vmem %s1, %s508
      $region56: #{forward.3} parent=47 // pred_fallthru
        _
      // Predicated region
      $region57: #{forward.3} parent=47 // pred_check
        %p510 = pneg %p96
      $region58: #{forward.3} parent=47 // pred_check_branch
        %512 = sbr.rel (%p510) target = $region60
      $region59: #{forward.3} parent=47 // pred_region
        %p513 = scmp.lt.s32.totalorder %s24, 7
        %s514 = scalar_select %p513, %s24, 7
        %s515 = smul.addr %s514, 2
        %s516 = smul.addr %s515, 8
        %s517 = scalar_lea.vmem %s2, %s516
      $region60: #{forward.3} parent=47 // pred_fallthru
        _
      // Predicated region
      $region61: #{forward.3} parent=47 // pred_check
        %p518 = pneg %p122
      $region62: #{forward.3} parent=47 // pred_check_branch
        %520 = sbr.rel (%p518) target = $region64
      $region63: #{forward.3} parent=47 // pred_region
        %p521 = scmp.lt.s32.totalorder %s24, 7
        %s522 = scalar_select %p521, %s24, 7
        %s523 = smul.addr %s522, 8
        %s524 = scalar_lea.vmem %s3, %s523
      $region64: #{forward.3} parent=47 // pred_fallthru
        _
      // Predicated region
      $region65: #{forward.3} parent=47 // pred_check
        %p525 = pneg %p148
      $region66: #{forward.3} parent=47 // pred_check_branch
        %527 = sbr.rel (%p525) target = $region68
      $region67: #{forward.3} parent=47 // pred_region
        %p528 = scmp.lt.s32.totalorder %s24, 7
        %s529 = scalar_select %p528, %s24, 7
        %s530 = smul.addr %s529, 8
        %s531 = scalar_lea.vmem %s4, %s530
      $region68: #{forward.3} parent=47 // pred_fallthru
        _
      // Predicated region
      $region69: #{forward.3} parent=47 // pred_check
        %p532 = pneg %p174
      $region70: #{forward.3} parent=47 // pred_check_branch
        %534 = sbr.rel (%p532) target = $region72
      $region71: #{forward.3} parent=47 // pred_region
        %p535 = scmp.lt.s32.totalorder %s24, 7
        %s536 = scalar_select %p535, %s24, 7
        %s537 = smul.addr %s536, 2
        %s538 = scalar_lea.vmem %s5, %s537
      $region72: #{forward.3} parent=47 // pred_fallthru
        _
    $region48: #{forward.3} parent=5 // pred_fallthru
      _
    %p539 = scmp.le.s32.totalorder 1, %s24
    %p540 = scmp.lt.s32.totalorder %s24, 9
    %p541 = pnand %p539, %p540
    %p542 = pneg %p541
    // Predicated region
    $region73: #{forward.3} parent=5 // pred_check
      _
    $region74: #{forward.3} parent=5 // pred_check_branch
      %544 = sbr.rel (%p541) target = $region76
    $region75: #{forward.3} parent=5 // pred_region
      %s545 = ssub.s32 %s24, 1
      %p546 = scmp.lt.s32.totalorder %s29, 7
      %s547 = scalar_select %p546, %s29, 7
      %s548 = smul.addr %s547, 2
      %s549 = scalar_lea.vmem %s0, %s548
      %p550 = pneg %p50
      %p551 = pneg %p47
      %p552 = scmp.lt.s32.totalorder %s29, 7
      %s553 = scalar_select %p552, %s29, 7
      %s554 = smul.addr %s553, 2
      %s555 = smul.addr %s554, 8
      %s556 = scalar_lea.vmem %s1, %s555
      %p557 = pneg %p76
      %p558 = pneg %p73
      %p559 = scmp.lt.s32.totalorder %s29, 7
      %s560 = scalar_select %p559, %s29, 7
      %s561 = smul.addr %s560, 2
      %s562 = smul.addr %s561, 8
      %s563 = scalar_lea.vmem %s2, %s562
      %p564 = pneg %p102
      %p565 = pneg %p99
      %p566 = scmp.lt.s32.totalorder %s29, 7
      %s567 = scalar_select %p566, %s29, 7
      %s568 = smul.addr %s567, 8
      %s569 = scalar_lea.vmem %s3, %s568
      %p570 = pneg %p128
      %p571 = pneg %p125
      %p572 = scmp.lt.s32.totalorder %s29, 7
      %s573 = scalar_select %p572, %s29, 7
      %s574 = smul.addr %s573, 8
      %s575 = scalar_lea.vmem %s4, %s574
      %p576 = pneg %p154
      %p577 = pneg %p151
      %p578 = scmp.lt.s32.totalorder %s29, 7
      %s579 = scalar_select %p578, %s29, 7
      %s580 = smul.addr %s579, 2
      %s581 = scalar_lea.vmem %s5, %s580
      %p582 = pneg %p180
      %p583 = pneg %p177
      %p584 = pneg %p201
      %p585 = pneg %p198
      %p586 = pneg %p222
      %p587 = pneg %p219
      %p588 = pneg %p243
      %p589 = pneg %p240
      %p590 = pneg %p264
      %p591 = pneg %p261
      %p592 = pneg %p285
      %p593 = pneg %p282
      %p594 = pneg %p306
      %p595 = pneg %p303
      %p596 = pneg %p327
      %p597 = pneg %p324
      %p598 = pneg %p348
      %p599 = pneg %p345
      %p600 = pneg %p374
      %p601 = pneg %p371
      %p602 = scmp.lt.s32.totalorder %s29, 7
      %s603 = scalar_select %p602, %s29, 7
      %s604 = smul.addr %s603, 8
      %s605 = scalar_lea.vmem %s14, %s604
      %p606 = pneg %p400
      %p607 = pneg %p397
      %p608 = scmp.lt.s32.totalorder %s29, 7
      %s609 = scalar_select %p608, %s29, 7
      %s610 = scalar_lea.vmem %s15, %s609
      %p611 = pneg %p426
      %p612 = pneg %p423
      %p613 = scmp.lt.s32.totalorder %s29, 7
      %s614 = scalar_select %p613, %s29, 7
      %s615 = scalar_lea.vmem %s16, %s614
      %p616 = pneg %p452
      %p617 = pneg %p449
      %p618 = scmp.lt.s32.totalorder %s29, 7
      %s619 = scalar_select %p618, %s29, 7
      %s620 = smul.addr %s619, 2
      %s621 = scalar_lea.vmem %s17, %s620
      %p622 = scmp.lt.s32.totalorder %s29, 7
      %s623 = scalar_select %p622, %s29, 7
      %s624 = smul.addr %s623, 2
      %s625 = scalar_lea.vmem %s0, %s624
      %p626 = scmp.lt.s32.totalorder %s29, 7
      %s627 = scalar_select %p626, %s29, 7
      %s628 = smul.addr %s627, 2
      %s629 = smul.addr %s628, 8
      %s630 = scalar_lea.vmem %s1, %s629
      %p631 = scmp.lt.s32.totalorder %s29, 7
      %s632 = scalar_select %p631, %s29, 7
      %s633 = smul.addr %s632, 2
      %s634 = smul.addr %s633, 8
      %s635 = scalar_lea.vmem %s2, %s634
      %p636 = scmp.lt.s32.totalorder %s29, 7
      %s637 = scalar_select %p636, %s29, 7
      %s638 = smul.addr %s637, 8
      %s639 = scalar_lea.vmem %s3, %s638
      %p640 = scmp.lt.s32.totalorder %s29, 7
      %s641 = scalar_select %p640, %s29, 7
      %s642 = smul.addr %s641, 8
      %s643 = scalar_lea.vmem %s4, %s642
      %p644 = scmp.lt.s32.totalorder %s29, 7
      %s645 = scalar_select %p644, %s29, 7
      %s646 = smul.addr %s645, 2
      %s647 = scalar_lea.vmem %s5, %s646
      %p648 = scmp.lt.s32.totalorder %s29, 7
      %s649 = scalar_select %p648, %s29, 7
      %s650 = smul.addr %s649, 8
      %s651 = scalar_lea.vmem %s14, %s650
      %p652 = scmp.lt.s32.totalorder %s29, 7
      %s653 = scalar_select %p652, %s29, 7
      %s654 = scalar_lea.vmem %s15, %s653
      %p655 = scmp.lt.s32.totalorder %s29, 7
      %s656 = scalar_select %p655, %s29, 7
      %s657 = scalar_lea.vmem %s16, %s656
      %p658 = scmp.lt.s32.totalorder %s29, 7
      %s659 = scalar_select %p658, %s29, 7
      %s660 = smul.addr %s659, 2
      %s661 = scalar_lea.vmem %s17, %s660
      %p662 = scmp.eq.s32.totalorder %s29, 0
      // Predicated region
      $region77: #{forward.3} parent=75 // pred_check
        %p663 = pneg %p662
      $region78: #{forward.3} parent=75 // pred_check_branch
        %665 = sbr.rel (%p663) target = $region80
      $region79: #{forward.3} parent=75 // pred_region
        %vm666 = vcmask 64512
        %667 = vst.msk [vmem:[#allocation2] sm:$0xff] %vm666, 0.0
      $region80: #{forward.3} parent=75 // pred_fallthru
        _
      %s668 = scalar_select %p662, 1, 0
      %s669 = scvt.s32.f32 %s668
      %v670 = vld [vmem:[%s625] sm:$0x3]
      %v671 = vld [vmem:[%s630] sm:$0xff]
      %v672 = vld [vmem:[%s630 + $0x8] sm:$0xff]
      %v673 = vld [vmem:[%s635] sm:$0xff]
      %v674 = vld [vmem:[%s635 + $0x8] sm:$0xff]
      %v675 = vld [vmem:[%s639] sm:$0xff]
      %v676 = vld [vmem:[%s643] sm:$0xff]
      %v677 = vld [vmem:[%s647] sm:$0x3]
      %v678 = vld [vmem:[%s7] sm:$0x1]
      %v679 = vstv %s669
      %v680 = vmul.f32 %v679, %v678
      %s681 = ssub.f32 1.0, %s669
      %v682 = vld [vmem:[%s6] sm:$0x1]
      %v683 = vstv %s681
      %v684 = vmul.f32 %v683, %v682
      %v685 = vadd.f32 %v680, %v684
      %v686 = vrcp.pop %v685
      %v687 = vmul.f32 1.0, %v686
      %v688 = vrsqrt.pop %v685
      %v689 = vmul.f32 %v685, %v688
      %vm690 = vcmp.eq.f32.partialorder %v685, inf
      %v691 = vsel %vm690, %v685, %v689
      %vm692 = vcmp.eq.f32.partialorder %v685, 0.0
      %v693 = vand.u32 %v685, 2147483648
      %v694 = vsel %vm692, %v693, %v691
      %v695 = vrcp.pop %v694
      %v696 = vmul.f32 1.0, %v695
      %v697 = vlog2.pop %v685
      %v698 = vmul.f32 %v697, 0.6931472
      %vm699 = vcmask 57344
      %v700 = vsel %vm699, %v698, 0.0
      %701 = vadd.xlane.f32.xlu0 %v700
      %v702 = vpop.xlane.xlu0 %701
      %v703 = vld [vmem:[#allocation2] sm:$0xff]
      %v704 = vld [vmem:[%s9] sm:$0xff]
      %v705 = vld [vmem:[%s10] sm:$0x1]
      %v707 = vlaneseq
      %v708 = vshrl.u32 %v707, 7
      %v709 = vsub.s32 0, %v708
      %v710 = vrot.slane %v705, %v709
      %vm712 = vcmask 64512
      %v714 = vsel %vm712, %v703, 0
      %716 = vmatprep.subr.mxu0 0.0
      %717 = vmatpush1.msra.mxu0 0.0
      %718 = vmatprep.subr.mxu0 0.0
      %719 = vmatpush1.msra.mxu0 0.0
      %720 = vmatprep.subr.mxu0 0.0
      %721 = vmatpush1.msra.mxu0 0.0
      %722 = vmatprep.subr.mxu0 0.0
      %723 = vmatpush1.msra.mxu0 0.0
      %724 = vmatprep.subr.mxu0 0.0
      %725 = vmatpush1.msra.mxu0 0.0
      %726 = vmatprep.subr.mxu0 0.0
      %727 = vmatpush1.msra.mxu0 0.0
      %728 = vmatprep.subr.mxu0 0.0
      %729 = vmatpush1.msra.mxu0 0.0
      %730 = vmatprep.subr.mxu0 0.0
      %731 = vmatpush1.msra.mxu0 0.0
      %732 = vmatprep.subr.mxu0 0.0
      %733 = vmatpush1.msra.mxu0 0.0
      %734 = vmatprep.subr.mxu0 0.0
      %735 = vmatpush1.msra.mxu0 0.0
      %736 = vmatprep.subr.mxu0 0.0
      %737 = vmatpush1.msra.mxu0 0.0
      %738 = vmatprep.subr.mxu0 0.0
      %739 = vmatpush1.msra.mxu0 0.0
      %740 = vmatprep.subr.mxu0 0.0
      %741 = vmatpush1.msra.mxu0 0.0
      %742 = vmatprep.subr.mxu0 0.0
      %743 = vmatpush1.msra.mxu0 0.0
      %744 = vmatprep.subr.mxu0 0.0
      %745 = vmatpush1.msra.mxu0 0.0
      %746 = vmatprep.subr.mxu0 0.0
      %747 = vmatpush1.msra.mxu0 %v704
      %748 = vmatprep.subr.mxu0 0.0
      %749 = vmatpush2.msra.mxu0 0.0
      %750 = vmatprep.subr.mxu0 0.0
      %751 = vmatpush2.msra.mxu0 0.0
      %752 = vmatprep.subr.mxu0 0.0
      %753 = vmatpush2.msra.mxu0 0.0
      %754 = vmatprep.subr.mxu0 0.0
      %755 = vmatpush2.msra.mxu0 0.0
      %756 = vmatprep.subr.mxu0 0.0
      %757 = vmatpush2.msra.mxu0 0.0
      %758 = vmatprep.subr.mxu0 0.0
      %759 = vmatpush2.msra.mxu0 0.0
      %760 = vmatprep.subr.mxu0 0.0
      %761 = vmatpush2.msra.mxu0 0.0
      %762 = vmatprep.subr.mxu0 0.0
      %763 = vmatpush2.msra.mxu0 0.0
      %764 = vmatprep.subr.mxu0 0.0
      %765 = vmatpush2.msra.mxu0 0.0
      %766 = vmatprep.subr.mxu0 0.0
      %767 = vmatpush2.msra.mxu0 0.0
      %768 = vmatprep.subr.mxu0 0.0
      %769 = vmatpush2.msra.mxu0 0.0
      %770 = vmatprep.subr.mxu0 0.0
      %771 = vmatpush2.msra.mxu0 0.0
      %772 = vmatprep.subr.mxu0 0.0
      %773 = vmatpush2.msra.mxu0 0.0
      %774 = vmatprep.subr.mxu0 0.0
      %775 = vmatpush2.msra.mxu0 0.0
      %776 = vmatprep.subr.mxu0 0.0
      %777 = vmatpush2.msra.mxu0 0.0
      %778 = vmatprep.subr.mxu0 0.0
      %779 = vmatpush2.msra.mxu0 0.0
      %780 = vmatprep.mubr.f32.mxu0 0.0
      %781 = vmatmul.mubr.f32.gmra.mxu0 %v714
      %v782 = vpop.f32.mrf.mxu0
      %v783 = vadd.f32 %v710, %v782
      %v784 = vpop.f32.mrf.mxu0
      %785 = vdwg.mxu0
      %v786 = vtanh.pop %v783
      %v787 = vld [vmem:[%s11] sm:$0xff]
      %v788 = vld [vmem:[%s11 + $0x8] sm:$0xff]
      %vm789 = vcmask 130048
      %v791 = vsel %vm789, %v786, 0
      %793 = vmatprep.subr.mxu0 0.0
      %794 = vmatpush1.msra.mxu0 0.0
      %795 = vmatprep.subr.mxu0 0.0
      %796 = vmatpush1.msra.mxu0 0.0
      %797 = vmatprep.subr.mxu0 0.0
      %798 = vmatpush1.msra.mxu0 0.0
      %799 = vmatprep.subr.mxu0 0.0
      %800 = vmatpush1.msra.mxu0 0.0
      %801 = vmatprep.subr.mxu0 0.0
      %802 = vmatpush1.msra.mxu0 0.0
      %803 = vmatprep.subr.mxu0 0.0
      %804 = vmatpush1.msra.mxu0 0.0
      %805 = vmatprep.subr.mxu0 0.0
      %806 = vmatpush1.msra.mxu0 0.0
      %807 = vmatprep.subr.mxu0 0.0
      %808 = vmatpush1.msra.mxu0 0.0
      %809 = vmatprep.subr.mxu0 0.0
      %810 = vmatpush1.msra.mxu0 0.0
      %811 = vmatprep.subr.mxu0 0.0
      %812 = vmatpush1.msra.mxu0 0.0
      %813 = vmatprep.subr.mxu0 0.0
      %814 = vmatpush1.msra.mxu0 0.0
      %815 = vmatprep.subr.mxu0 0.0
      %816 = vmatpush1.msra.mxu0 0.0
      %817 = vmatprep.subr.mxu0 0.0
      %818 = vmatpush1.msra.mxu0 0.0
      %819 = vmatprep.subr.mxu0 0.0
      %820 = vmatpush1.msra.mxu0 0.0
      %821 = vmatprep.subr.mxu0 0.0
      %822 = vmatpush1.msra.mxu0 %v788
      %823 = vmatprep.subr.mxu0 0.0
      %824 = vmatpush1.msra.mxu0 %v787
      %825 = vmatprep.subr.mxu0 0.0
      %826 = vmatpush2.msra.mxu0 0.0
      %827 = vmatprep.subr.mxu0 0.0
      %828 = vmatpush2.msra.mxu0 0.0
      %829 = vmatprep.subr.mxu0 0.0
      %830 = vmatpush2.msra.mxu0 0.0
      %831 = vmatprep.subr.mxu0 0.0
      %832 = vmatpush2.msra.mxu0 0.0
      %833 = vmatprep.subr.mxu0 0.0
      %834 = vmatpush2.msra.mxu0 0.0
      %835 = vmatprep.subr.mxu0 0.0
      %836 = vmatpush2.msra.mxu0 0.0
      %837 = vmatprep.subr.mxu0 0.0
      %838 = vmatpush2.msra.mxu0 0.0
      %839 = vmatprep.subr.mxu0 0.0
      %840 = vmatpush2.msra.mxu0 0.0
      %841 = vmatprep.subr.mxu0 0.0
      %842 = vmatpush2.msra.mxu0 0.0
      %843 = vmatprep.subr.mxu0 0.0
      %844 = vmatpush2.msra.mxu0 0.0
      %845 = vmatprep.subr.mxu0 0.0
      %846 = vmatpush2.msra.mxu0 0.0
      %847 = vmatprep.subr.mxu0 0.0
      %848 = vmatpush2.msra.mxu0 0.0
      %849 = vmatprep.subr.mxu0 0.0
      %850 = vmatpush2.msra.mxu0 0.0
      %851 = vmatprep.subr.mxu0 0.0
      %852 = vmatpush2.msra.mxu0 0.0
      %853 = vmatprep.subr.mxu0 0.0
      %854 = vmatpush2.msra.mxu0 0.0
      %855 = vmatprep.subr.mxu0 0.0
      %856 = vmatpush2.msra.mxu0 0.0
      %857 = vmatprep.mubr.f32.mxu0 0.0
      %858 = vmatmul.mubr.f32.gmra.mxu0 %v791
      %v859 = vpop.f32.mrf.mxu0
      %v860 = vadd.f32 0.0, %v859
      %v861 = vpop.f32.mrf.mxu0
      %862 = vdwg.mxu0
      %v863 = vadd.f32 %v703, %v860
      %v864 = vld [vmem:[%s8] sm:$0x1]
      %v865 = vmul.f32 %v679, %v864
      %v866 = vmul.f32 %v683, %v863
      %v868 = vlaneseq
      %v869 = vshrl.u32 %v868, 7
      %v870 = vsub.s32 0, %v869
      %v871 = vrot.slane %v865, %v870
      %v873 = vadd.f32 %v871, %v866
      %v874 = vlaneseq
      %v875 = vshrl.u32 %v874, 7
      %v876 = vlaneseq
      %v877 = vand.u32 %v876, 127
      %vm878 = vcmp.eq.s32.totalorder %v875, %v877
      %v879 = vsel %vm878, 1, 0
      %v880 = vcvt.s32.f32 %v879
      %v882 = vlaneseq
      %v883 = vshrl.u32 %v882, 7
      %v884 = vsub.s32 0, %v883
      %v885 = vrot.slane %v687, %v884
      %v887 = vmul.f32 %v880, %v885
      %vm888 = vcmask 31744
      %v890 = vsel %vm888, %v671, 0
      %892 = vmatprep.subr.mxu0 0.0
      %893 = vmatpush1.xpose.msra.mxu0 0.0
      %894 = vmatprep.subr.mxu0 0.0
      %895 = vmatpush1.xpose.msra.mxu0 0.0
      %896 = vmatprep.subr.mxu0 0.0
      %897 = vmatpush1.xpose.msra.mxu0 0.0
      %898 = vmatprep.subr.mxu0 0.0
      %899 = vmatpush1.xpose.msra.mxu0 0.0
      %900 = vmatprep.subr.mxu0 0.0
      %901 = vmatpush1.xpose.msra.mxu0 0.0
      %902 = vmatprep.subr.mxu0 0.0
      %903 = vmatpush1.xpose.msra.mxu0 0.0
      %904 = vmatprep.subr.mxu0 0.0
      %905 = vmatpush1.xpose.msra.mxu0 0.0
      %906 = vmatprep.subr.mxu0 0.0
      %907 = vmatpush1.xpose.msra.mxu0 0.0
      %908 = vmatprep.subr.mxu0 0.0
      %909 = vmatpush1.xpose.msra.mxu0 0.0
      %910 = vmatprep.subr.mxu0 0.0
      %911 = vmatpush1.xpose.msra.mxu0 0.0
      %912 = vmatprep.subr.mxu0 0.0
      %913 = vmatpush1.xpose.msra.mxu0 0.0
      %914 = vmatprep.subr.mxu0 0.0
      %915 = vmatpush1.xpose.msra.mxu0 0.0
      %916 = vmatprep.subr.mxu0 0.0
      %917 = vmatpush1.xpose.msra.mxu0 0.0
      %918 = vmatprep.subr.mxu0 0.0
      %919 = vmatpush1.xpose.msra.mxu0 0.0
      %920 = vmatprep.subr.mxu0 0.0
      %921 = vmatpush1.xpose.msra.mxu0 0.0
      %922 = vmatprep.subr.mxu0 0.0
      %923 = vmatpush1.xpose.msra.mxu0 %v890
      %924 = vmatprep.subr.mxu0 0.0
      %925 = vmatpush2.xpose.msra.mxu0 0.0
      %926 = vmatprep.subr.mxu0 0.0
      %927 = vmatpush2.xpose.msra.mxu0 0.0
      %928 = vmatprep.subr.mxu0 0.0
      %929 = vmatpush2.xpose.msra.mxu0 0.0
      %930 = vmatprep.subr.mxu0 0.0
      %931 = vmatpush2.xpose.msra.mxu0 0.0
      %932 = vmatprep.subr.mxu0 0.0
      %933 = vmatpush2.xpose.msra.mxu0 0.0
      %934 = vmatprep.subr.mxu0 0.0
      %935 = vmatpush2.xpose.msra.mxu0 0.0
      %936 = vmatprep.subr.mxu0 0.0
      %937 = vmatpush2.xpose.msra.mxu0 0.0
      %938 = vmatprep.subr.mxu0 0.0
      %939 = vmatpush2.xpose.msra.mxu0 0.0
      %940 = vmatprep.subr.mxu0 0.0
      %941 = vmatpush2.xpose.msra.mxu0 0.0
      %942 = vmatprep.subr.mxu0 0.0
      %943 = vmatpush2.xpose.msra.mxu0 0.0
      %944 = vmatprep.subr.mxu0 0.0
      %945 = vmatpush2.xpose.msra.mxu0 0.0
      %946 = vmatprep.subr.mxu0 0.0
      %947 = vmatpush2.xpose.msra.mxu0 0.0
      %948 = vmatprep.subr.mxu0 0.0
      %949 = vmatpush2.xpose.msra.mxu0 0.0
      %950 = vmatprep.subr.mxu0 0.0
      %951 = vmatpush2.xpose.msra.mxu0 0.0
      %952 = vmatprep.subr.mxu0 0.0
      %953 = vmatpush2.xpose.msra.mxu0 0.0
      %954 = vmatprep.subr.mxu0 0.0
      %955 = vmatpush2.xpose.msra.mxu0 0.0
      %956 = vmatprep.mubr.f32.mxu0 0.0
      %957 = vmatmul.mubr.f32.gmra.mxu0 %v890
      %v958 = vpop.f32.mrf.mxu0
      %v959 = vadd.f32 0.0, %v958
      %v960 = vpop.f32.mrf.mxu0
      %961 = vdwg.mxu0
      %v962 = vadd.f32 %v887, %v959
      %v964 = vsel %vm888, %v673, 0
      %966 = vmatprep.subr.mxu0 0.0
      %967 = vmatpush1.xpose.msra.mxu0 0.0
      %968 = vmatprep.subr.mxu0 0.0
      %969 = vmatpush1.xpose.msra.mxu0 0.0
      %970 = vmatprep.subr.mxu0 0.0
      %971 = vmatpush1.xpose.msra.mxu0 0.0
      %972 = vmatprep.subr.mxu0 0.0
      %973 = vmatpush1.xpose.msra.mxu0 0.0
      %974 = vmatprep.subr.mxu0 0.0
      %975 = vmatpush1.xpose.msra.mxu0 0.0
      %976 = vmatprep.subr.mxu0 0.0
      %977 = vmatpush1.xpose.msra.mxu0 0.0
      %978 = vmatprep.subr.mxu0 0.0
      %979 = vmatpush1.xpose.msra.mxu0 0.0
      %980 = vmatprep.subr.mxu0 0.0
      %981 = vmatpush1.xpose.msra.mxu0 0.0
      %982 = vmatprep.subr.mxu0 0.0
      %983 = vmatpush1.xpose.msra.mxu0 0.0
      %984 = vmatprep.subr.mxu0 0.0
      %985 = vmatpush1.xpose.msra.mxu0 0.0
      %986 = vmatprep.subr.mxu0 0.0
      %987 = vmatpush1.xpose.msra.mxu0 0.0
      %988 = vmatprep.subr.mxu0 0.0
      %989 = vmatpush1.xpose.msra.mxu0 0.0
      %990 = vmatprep.subr.mxu0 0.0
      %991 = vmatpush1.xpose.msra.mxu0 0.0
      %992 = vmatprep.subr.mxu0 0.0
      %993 = vmatpush1.xpose.msra.mxu0 0.0
      %994 = vmatprep.subr.mxu0 0.0
      %995 = vmatpush1.xpose.msra.mxu0 0.0
      %996 = vmatprep.subr.mxu0 0.0
      %997 = vmatpush1.xpose.msra.mxu0 %v964
      %998 = vmatprep.subr.mxu0 0.0
      %999 = vmatpush2.xpose.msra.mxu0 0.0
      %1000 = vmatprep.subr.mxu0 0.0
      %1001 = vmatpush2.xpose.msra.mxu0 0.0
      %1002 = vmatprep.subr.mxu0 0.0
      %1003 = vmatpush2.xpose.msra.mxu0 0.0
      %1004 = vmatprep.subr.mxu0 0.0
      %1005 = vmatpush2.xpose.msra.mxu0 0.0
      %1006 = vmatprep.subr.mxu0 0.0
      %1007 = vmatpush2.xpose.msra.mxu0 0.0
      %1008 = vmatprep.subr.mxu0 0.0
      %1009 = vmatpush2.xpose.msra.mxu0 0.0
      %1010 = vmatprep.subr.mxu0 0.0
      %1011 = vmatpush2.xpose.msra.mxu0 0.0
      %1012 = vmatprep.subr.mxu0 0.0
      %1013 = vmatpush2.xpose.msra.mxu0 0.0
      %1014 = vmatprep.subr.mxu0 0.0
      %1015 = vmatpush2.xpose.msra.mxu0 0.0
      %1016 = vmatprep.subr.mxu0 0.0
      %1017 = vmatpush2.xpose.msra.mxu0 0.0
      %1018 = vmatprep.subr.mxu0 0.0
      %1019 = vmatpush2.xpose.msra.mxu0 0.0
      %1020 = vmatprep.subr.mxu0 0.0
      %1021 = vmatpush2.xpose.msra.mxu0 0.0
      %1022 = vmatprep.subr.mxu0 0.0
      %1023 = vmatpush2.xpose.msra.mxu0 0.0
      %1024 = vmatprep.subr.mxu0 0.0
      %1025 = vmatpush2.xpose.msra.mxu0 0.0
      %1026 = vmatprep.subr.mxu0 0.0
      %1027 = vmatpush2.xpose.msra.mxu0 0.0
      %1028 = vmatprep.subr.mxu0 0.0
      %1029 = vmatpush2.xpose.msra.mxu0 0.0
      %1030 = vmatprep.mubr.f32.mxu0 0.0
      %1031 = vmatmul.mubr.f32.gmra.mxu0 %v964
      %v1032 = vpop.f32.mrf.mxu0
      %v1033 = vadd.f32 0.0, %v1032
      %v1034 = vpop.f32.mrf.mxu0
      %1035 = vdwg.mxu0
      %v1036 = vadd.f32 %v962, %v1033
      %1038 = vrot.lane.b32.xlu0 %v880, 8
      %v1039 = vpop.permute.xlu0 %1038
      %v1041 = vsel %vm712, %v1036, %v1039
      %v1042 = vlog2.pop %v1041
      %v1043 = vmul.f32 %v1042, 0.6931472
      %v1044 = vadd.f32 %v1043, 0.0
      %1046 = vset.pattern.permute.xlu0 0
      %1047 = vperm.xlu0 %1046, %v1041
      %v1048 = vpop.permute.xlu0 %1047
      %v1050 = vrcp.pop %v1048
      %v1051 = vmul.f32 %v1041, %v1050
      %v1052 = vlaneseq
      %v1053 = vshrl.u32 %v1052, 7
      %v1054 = vsub.s32 0, %v1053
      %v1055 = vrot.slane %v1051, %v1054
      %v1056 = vmul.f32 %v1048, %v1055
      %v1057 = vsub.f32 %v1041, %v1056
      %vm1058 = vcmp.eq.s32.totalorder %v875, 0
      %v1059 = vsel %vm1058, %v1055, %v1057
      %v1060 = vlog2.pop %v1059
      %v1061 = vmul.f32 %v1060, 0.6931472
      %v1063 = vrot.slane %v1061, 1
      %1064 = vrot.lane.b32.xlu0 %v1063, 127
      %v1065 = vpop.permute.xlu0 %1064
      %v1067 = vadd.f32 %v1044, %v1065
      %1069 = vset.pattern.permute.xlu0 1
      %1070 = vperm.xlu0 %1069, %v1059
      %v1071 = vpop.permute.xlu0 %1070
      %v1073 = vrcp.pop %v1071
      %v1074 = vmul.f32 %v1059, %v1073
      %v1075 = vlaneseq
      %v1076 = vshrl.u32 %v1075, 7
      %v1077 = vsub.s32 1, %v1076
      %v1078 = vrot.slane %v1074, %v1077
      %v1079 = vmul.f32 %v1071, %v1078
      %v1080 = vsub.f32 %v1059, %v1079
      %vm1081 = vcmp.eq.s32.totalorder %v875, 1
      %v1082 = vsel %vm1081, %v1078, %v1080
      %v1083 = vlog2.pop %v1082
      %v1084 = vmul.f32 %v1083, 0.6931472
      %v1086 = vrot.slane %v1084, 2
      %1087 = vrot.lane.b32.xlu0 %v1086, 126
      %v1088 = vpop.permute.xlu0 %1087
      %v1090 = vadd.f32 %v1067, %v1088
      %1092 = vset.pattern.permute.xlu0 2
      %1093 = vperm.xlu0 %1092, %v1082
      %v1094 = vpop.permute.xlu0 %1093
      %v1096 = vrcp.pop %v1094
      %v1097 = vmul.f32 %v1082, %v1096
      %v1098 = vlaneseq
      %v1099 = vshrl.u32 %v1098, 7
      %v1100 = vsub.s32 2, %v1099
      %v1101 = vrot.slane %v1097, %v1100
      %v1102 = vmul.f32 %v1094, %v1101
      %v1103 = vsub.f32 %v1082, %v1102
      %vm1104 = vcmp.eq.s32.totalorder %v875, 2
      %v1105 = vsel %vm1104, %v1101, %v1103
      %v1106 = vlog2.pop %v1105
      %v1107 = vmul.f32 %v1106, 0.6931472
      %v1109 = vrot.slane %v1107, 3
      %1110 = vrot.lane.b32.xlu0 %v1109, 125
      %v1111 = vpop.permute.xlu0 %1110
      %v1113 = vadd.f32 %v1090, %v1111
      %1115 = vset.pattern.permute.xlu0 3
      %1116 = vperm.xlu0 %1115, %v1105
      %v1117 = vpop.permute.xlu0 %1116
      %v1119 = vrcp.pop %v1117
      %v1120 = vmul.f32 %v1105, %v1119
      %v1121 = vlaneseq
      %v1122 = vshrl.u32 %v1121, 7
      %v1123 = vsub.s32 3, %v1122
      %v1124 = vrot.slane %v1120, %v1123
      %v1125 = vmul.f32 %v1117, %v1124
      %v1126 = vsub.f32 %v1105, %v1125
      %vm1127 = vcmp.eq.s32.totalorder %v875, 3
      %v1128 = vsel %vm1127, %v1124, %v1126
      %v1129 = vlog2.pop %v1128
      %v1130 = vmul.f32 %v1129, 0.6931472
      %v1132 = vrot.slane %v1130, 4
      %1133 = vrot.lane.b32.xlu0 %v1132, 124
      %v1134 = vpop.permute.xlu0 %1133
      %v1136 = vadd.f32 %v1113, %v1134
      %1138 = vset.pattern.permute.xlu0 4
      %1139 = vperm.xlu0 %1138, %v1128
      %v1140 = vpop.permute.xlu0 %1139
      %v1142 = vrcp.pop %v1140
      %v1143 = vmul.f32 %v1128, %v1142
      %v1144 = vlaneseq
      %v1145 = vshrl.u32 %v1144, 7
      %v1146 = vsub.s32 4, %v1145
      %v1147 = vrot.slane %v1143, %v1146
      %v1148 = vmul.f32 %v1140, %v1147
      %v1149 = vsub.f32 %v1128, %v1148
      %vm1150 = vcmp.eq.s32.totalorder %v875, 4
      %v1151 = vsel %vm1150, %v1147, %v1149
      %v1152 = vlog2.pop %v1151
      %v1153 = vmul.f32 %v1152, 0.6931472
      %v1155 = vrot.slane %v1153, 5
      %1156 = vrot.lane.b32.xlu0 %v1155, 123
      %v1157 = vpop.permute.xlu0 %1156
      %v1159 = vadd.f32 %v1136, %v1157
      %1161 = vset.pattern.permute.xlu0 5
      %1162 = vperm.xlu0 %1161, %v1151
      %v1163 = vpop.permute.xlu0 %1162
      %v1165 = vrcp.pop %v1163
      %v1166 = vmul.f32 %v1151, %v1165
      %v1167 = vlaneseq
      %v1168 = vshrl.u32 %v1167, 7
      %v1169 = vsub.s32 5, %v1168
      %v1170 = vrot.slane %v1166, %v1169
      %v1171 = vmul.f32 %v1163, %v1170
      %v1172 = vsub.f32 %v1151, %v1171
      %vm1173 = vcmp.eq.s32.totalorder %v875, 5
      %v1174 = vsel %vm1173, %v1170, %v1172
      %v1175 = vlog2.pop %v1174
      %v1176 = vmul.f32 %v1175, 0.6931472
      %v1178 = vrot.slane %v1176, 6
      %1179 = vrot.lane.b32.xlu0 %v1178, 122
      %v1180 = vpop.permute.xlu0 %1179
      %v1182 = vadd.f32 %v1159, %v1180
      %1184 = vset.pattern.permute.xlu0 6
      %1185 = vperm.xlu0 %1184, %v1174
      %v1186 = vpop.permute.xlu0 %1185
      %v1188 = vrcp.pop %v1186
      %v1189 = vmul.f32 %v1174, %v1188
      %v1190 = vlaneseq
      %v1191 = vshrl.u32 %v1190, 7
      %v1192 = vsub.s32 6, %v1191
      %v1193 = vrot.slane %v1189, %v1192
      %v1194 = vmul.f32 %v1186, %v1193
      %v1195 = vsub.f32 %v1174, %v1194
      %vm1196 = vcmp.eq.s32.totalorder %v875, 6
      %v1197 = vsel %vm1196, %v1193, %v1195
      %v1198 = vlog2.pop %v1197
      %v1199 = vmul.f32 %v1198, 0.6931472
      %v1201 = vrot.slane %v1199, 7
      %1202 = vrot.lane.b32.xlu0 %v1201, 121
      %v1203 = vpop.permute.xlu0 %1202
      %v1205 = vadd.f32 %v1182, %v1203
      %1207 = vset.pattern.permute.xlu0 7
      %1208 = vperm.xlu0 %1207, %v1197
      %v1209 = vpop.permute.xlu0 %1208
      %v1211 = vrcp.pop %v1209
      %v1212 = vmul.f32 %v1197, %v1211
      %v1213 = vlaneseq
      %v1214 = vshrl.u32 %v1213, 7
      %v1215 = vsub.s32 7, %v1214
      %v1216 = vrot.slane %v1212, %v1215
      %v1217 = vmul.f32 %v1209, %v1216
      %v1218 = vsub.f32 %v1197, %v1217
      %vm1219 = vcmp.eq.s32.totalorder %v875, 7
      %v1220 = vsel %vm1219, %v1216, %v1218
      %v1221 = vmul.f32 %v873, %v885
      %v1222 = vlaneseq
      %v1223 = vshrl.u32 %v1222, 7
      %v1224 = vsub.s32 0, %v1223
      %v1225 = vrot.slane %v670, %v1224
      %v1226 = vadd.f32 %v1221, %v1225
      %v1228 = vlaneseq
      %v1229 = vshrl.u32 %v1228, 7
      %v1230 = vsub.s32 0, %v1229
      %v1231 = vrot.slane %v696, %v1230
      %v1233 = vmul.f32 %v675, %v1231
      %v1235 = vsel %vm888, %v676, 0
      %1237 = vmatprep.subr.mxu0 0.0
      %1238 = vmatpush1.xpose.msra.mxu0 0.0
      %1239 = vmatprep.subr.mxu0 0.0
      %1240 = vmatpush1.xpose.msra.mxu0 0.0
      %1241 = vmatprep.subr.mxu0 0.0
      %1242 = vmatpush1.xpose.msra.mxu0 0.0
      %1243 = vmatprep.subr.mxu0 0.0
      %1244 = vmatpush1.xpose.msra.mxu0 0.0
      %1245 = vmatprep.subr.mxu0 0.0
      %1246 = vmatpush1.xpose.msra.mxu0 0.0
      %1247 = vmatprep.subr.mxu0 0.0
      %1248 = vmatpush1.xpose.msra.mxu0 0.0
      %1249 = vmatprep.subr.mxu0 0.0
      %1250 = vmatpush1.xpose.msra.mxu0 0.0
      %1251 = vmatprep.subr.mxu0 0.0
      %1252 = vmatpush1.xpose.msra.mxu0 0.0
      %1253 = vmatprep.subr.mxu0 0.0
      %1254 = vmatpush1.xpose.msra.mxu0 0.0
      %1255 = vmatprep.subr.mxu0 0.0
      %1256 = vmatpush1.xpose.msra.mxu0 0.0
      %1257 = vmatprep.subr.mxu0 0.0
      %1258 = vmatpush1.xpose.msra.mxu0 0.0
      %1259 = vmatprep.subr.mxu0 0.0
      %1260 = vmatpush1.xpose.msra.mxu0 0.0
      %1261 = vmatprep.subr.mxu0 0.0
      %1262 = vmatpush1.xpose.msra.mxu0 0.0
      %1263 = vmatprep.subr.mxu0 0.0
      %1264 = vmatpush1.xpose.msra.mxu0 0.0
      %1265 = vmatprep.subr.mxu0 0.0
      %1266 = vmatpush1.xpose.msra.mxu0 0.0
      %1267 = vmatprep.subr.mxu0 0.0
      %1268 = vmatpush1.xpose.msra.mxu0 %v890
      %1269 = vmatprep.subr.mxu0 0.0
      %1270 = vmatpush2.xpose.msra.mxu0 0.0
      %1271 = vmatprep.subr.mxu0 0.0
      %1272 = vmatpush2.xpose.msra.mxu0 0.0
      %1273 = vmatprep.subr.mxu0 0.0
      %1274 = vmatpush2.xpose.msra.mxu0 0.0
      %1275 = vmatprep.subr.mxu0 0.0
      %1276 = vmatpush2.xpose.msra.mxu0 0.0
      %1277 = vmatprep.subr.mxu0 0.0
      %1278 = vmatpush2.xpose.msra.mxu0 0.0
      %1279 = vmatprep.subr.mxu0 0.0
      %1280 = vmatpush2.xpose.msra.mxu0 0.0
      %1281 = vmatprep.subr.mxu0 0.0
      %1282 = vmatpush2.xpose.msra.mxu0 0.0
      %1283 = vmatprep.subr.mxu0 0.0
      %1284 = vmatpush2.xpose.msra.mxu0 0.0
      %1285 = vmatprep.subr.mxu0 0.0
      %1286 = vmatpush2.xpose.msra.mxu0 0.0
      %1287 = vmatprep.subr.mxu0 0.0
      %1288 = vmatpush2.xpose.msra.mxu0 0.0
      %1289 = vmatprep.subr.mxu0 0.0
      %1290 = vmatpush2.xpose.msra.mxu0 0.0
      %1291 = vmatprep.subr.mxu0 0.0
      %1292 = vmatpush2.xpose.msra.mxu0 0.0
      %1293 = vmatprep.subr.mxu0 0.0
      %1294 = vmatpush2.xpose.msra.mxu0 0.0
      %1295 = vmatprep.subr.mxu0 0.0
      %1296 = vmatpush2.xpose.msra.mxu0 0.0
      %1297 = vmatprep.subr.mxu0 0.0
      %1298 = vmatpush2.xpose.msra.mxu0 0.0
      %1299 = vmatprep.subr.mxu0 0.0
      %1300 = vmatpush2.xpose.msra.mxu0 0.0
      %1301 = vmatprep.mubr.f32.mxu0 0.0
      %1302 = vmatmul.mubr.f32.gmra.mxu0 %v1235
      %v1303 = vpop.f32.mrf.mxu0
      %v1304 = vadd.f32 0.0, %v1303
      %v1305 = vpop.f32.mrf.mxu0
      %1306 = vdwg.mxu0
      %v1307 = vadd.f32 %v1233, %v1304
      %1308 = vrot.lane.b32.xlu0 %v676, 124
      %v1309 = vpop.permute.xlu0 %1308
      %v1310 = vsel %vm888, %v1309, 0
      %1312 = vmatprep.subr.mxu0 0.0
      %1313 = vmatpush1.xpose.msra.mxu0 0.0
      %1314 = vmatprep.subr.mxu0 0.0
      %1315 = vmatpush1.xpose.msra.mxu0 0.0
      %1316 = vmatprep.subr.mxu0 0.0
      %1317 = vmatpush1.xpose.msra.mxu0 0.0
      %1318 = vmatprep.subr.mxu0 0.0
      %1319 = vmatpush1.xpose.msra.mxu0 0.0
      %1320 = vmatprep.subr.mxu0 0.0
      %1321 = vmatpush1.xpose.msra.mxu0 0.0
      %1322 = vmatprep.subr.mxu0 0.0
      %1323 = vmatpush1.xpose.msra.mxu0 0.0
      %1324 = vmatprep.subr.mxu0 0.0
      %1325 = vmatpush1.xpose.msra.mxu0 0.0
      %1326 = vmatprep.subr.mxu0 0.0
      %1327 = vmatpush1.xpose.msra.mxu0 0.0
      %1328 = vmatprep.subr.mxu0 0.0
      %1329 = vmatpush1.xpose.msra.mxu0 0.0
      %1330 = vmatprep.subr.mxu0 0.0
      %1331 = vmatpush1.xpose.msra.mxu0 0.0
      %1332 = vmatprep.subr.mxu0 0.0
      %1333 = vmatpush1.xpose.msra.mxu0 0.0
      %1334 = vmatprep.subr.mxu0 0.0
      %1335 = vmatpush1.xpose.msra.mxu0 0.0
      %1336 = vmatprep.subr.mxu0 0.0
      %1337 = vmatpush1.xpose.msra.mxu0 0.0
      %1338 = vmatprep.subr.mxu0 0.0
      %1339 = vmatpush1.xpose.msra.mxu0 0.0
      %1340 = vmatprep.subr.mxu0 0.0
      %1341 = vmatpush1.xpose.msra.mxu0 0.0
      %1342 = vmatprep.subr.mxu0 0.0
      %1343 = vmatpush1.xpose.msra.mxu0 %v964
      %1344 = vmatprep.subr.mxu0 0.0
      %1345 = vmatpush2.xpose.msra.mxu0 0.0
      %1346 = vmatprep.subr.mxu0 0.0
      %1347 = vmatpush2.xpose.msra.mxu0 0.0
      %1348 = vmatprep.subr.mxu0 0.0
      %1349 = vmatpush2.xpose.msra.mxu0 0.0
      %1350 = vmatprep.subr.mxu0 0.0
      %1351 = vmatpush2.xpose.msra.mxu0 0.0
      %1352 = vmatprep.subr.mxu0 0.0
      %1353 = vmatpush2.xpose.msra.mxu0 0.0
      %1354 = vmatprep.subr.mxu0 0.0
      %1355 = vmatpush2.xpose.msra.mxu0 0.0
      %1356 = vmatprep.subr.mxu0 0.0
      %1357 = vmatpush2.xpose.msra.mxu0 0.0
      %1358 = vmatprep.subr.mxu0 0.0
      %1359 = vmatpush2.xpose.msra.mxu0 0.0
      %1360 = vmatprep.subr.mxu0 0.0
      %1361 = vmatpush2.xpose.msra.mxu0 0.0
      %1362 = vmatprep.subr.mxu0 0.0
      %1363 = vmatpush2.xpose.msra.mxu0 0.0
      %1364 = vmatprep.subr.mxu0 0.0
      %1365 = vmatpush2.xpose.msra.mxu0 0.0
      %1366 = vmatprep.subr.mxu0 0.0
      %1367 = vmatpush2.xpose.msra.mxu0 0.0
      %1368 = vmatprep.subr.mxu0 0.0
      %1369 = vmatpush2.xpose.msra.mxu0 0.0
      %1370 = vmatprep.subr.mxu0 0.0
      %1371 = vmatpush2.xpose.msra.mxu0 0.0
      %1372 = vmatprep.subr.mxu0 0.0
      %1373 = vmatpush2.xpose.msra.mxu0 0.0
      %1374 = vmatprep.subr.mxu0 0.0
      %1375 = vmatpush2.xpose.msra.mxu0 0.0
      %1376 = vmatprep.mubr.f32.mxu0 0.0
      %1377 = vmatmul.mubr.f32.gmra.mxu0 %v1310
      %v1378 = vpop.f32.mrf.mxu0
      %v1379 = vadd.f32 0.0, %v1378
      %v1380 = vpop.f32.mrf.mxu0
      %1381 = vdwg.mxu0
      %v1382 = vadd.f32 %v1307, %v1379
      %1384 = vrot.lane.b32.xlu0 %v1220, 120
      %v1385 = vpop.permute.xlu0 %1384
      %v1388 = vsel %vm712, %v1226, 0
      %1390 = vmatprep.subr.mxu0 0.0
      %1391 = vmatpush1.msra.mxu0 0.0
      %1392 = vmatprep.subr.mxu0 0.0
      %1393 = vmatpush1.msra.mxu0 0.0
      %1394 = vmatprep.subr.mxu0 0.0
      %1395 = vmatpush1.msra.mxu0 0.0
      %1396 = vmatprep.subr.mxu0 0.0
      %1397 = vmatpush1.msra.mxu0 0.0
      %1398 = vmatprep.subr.mxu0 0.0
      %1399 = vmatpush1.msra.mxu0 0.0
      %1400 = vmatprep.subr.mxu0 0.0
      %1401 = vmatpush1.msra.mxu0 0.0
      %1402 = vmatprep.subr.mxu0 0.0
      %1403 = vmatpush1.msra.mxu0 0.0
      %1404 = vmatprep.subr.mxu0 0.0
      %1405 = vmatpush1.msra.mxu0 0.0
      %1406 = vmatprep.subr.mxu0 0.0
      %1407 = vmatpush1.msra.mxu0 0.0
      %1408 = vmatprep.subr.mxu0 0.0
      %1409 = vmatpush1.msra.mxu0 0.0
      %1410 = vmatprep.subr.mxu0 0.0
      %1411 = vmatpush1.msra.mxu0 0.0
      %1412 = vmatprep.subr.mxu0 0.0
      %1413 = vmatpush1.msra.mxu0 0.0
      %1414 = vmatprep.subr.mxu0 0.0
      %1415 = vmatpush1.msra.mxu0 0.0
      %1416 = vmatprep.subr.mxu0 0.0
      %1417 = vmatpush1.msra.mxu0 0.0
      %1418 = vmatprep.subr.mxu0 0.0
      %1419 = vmatpush1.msra.mxu0 0.0
      %1420 = vmatprep.subr.mxu0 0.0
      %1421 = vmatpush1.msra.mxu0 %v1385
      %1422 = vmatprep.subr.mxu0 0.0
      %1423 = vmatpush2.msra.mxu0 0.0
      %1424 = vmatprep.subr.mxu0 0.0
      %1425 = vmatpush2.msra.mxu0 0.0
      %1426 = vmatprep.subr.mxu0 0.0
      %1427 = vmatpush2.msra.mxu0 0.0
      %1428 = vmatprep.subr.mxu0 0.0
      %1429 = vmatpush2.msra.mxu0 0.0
      %1430 = vmatprep.subr.mxu0 0.0
      %1431 = vmatpush2.msra.mxu0 0.0
      %1432 = vmatprep.subr.mxu0 0.0
      %1433 = vmatpush2.msra.mxu0 0.0
      %1434 = vmatprep.subr.mxu0 0.0
      %1435 = vmatpush2.msra.mxu0 0.0
      %1436 = vmatprep.subr.mxu0 0.0
      %1437 = vmatpush2.msra.mxu0 0.0
      %1438 = vmatprep.subr.mxu0 0.0
      %1439 = vmatpush2.msra.mxu0 0.0
      %1440 = vmatprep.subr.mxu0 0.0
      %1441 = vmatpush2.msra.mxu0 0.0
      %1442 = vmatprep.subr.mxu0 0.0
      %1443 = vmatpush2.msra.mxu0 0.0
      %1444 = vmatprep.subr.mxu0 0.0
      %1445 = vmatpush2.msra.mxu0 0.0
      %1446 = vmatprep.subr.mxu0 0.0
      %1447 = vmatpush2.msra.mxu0 0.0
      %1448 = vmatprep.subr.mxu0 0.0
      %1449 = vmatpush2.msra.mxu0 0.0
      %1450 = vmatprep.subr.mxu0 0.0
      %1451 = vmatpush2.msra.mxu0 0.0
      %1452 = vmatprep.subr.mxu0 0.0
      %1453 = vmatpush2.msra.mxu0 0.0
      %1454 = vmatprep.mubr.f32.mxu0 0.0
      %1455 = vmatmul.mubr.f32.gmra.mxu0 %v1388
      %v1456 = vpop.f32.mrf.mxu0
      %v1457 = vadd.f32 0.0, %v1456
      %v1458 = vpop.f32.mrf.mxu0
      %1459 = vdwg.mxu0
      %v1461 = vsel %vm712, %v1382, 0
      %1463 = vmatprep.subr.mxu0 0.0
      %1464 = vmatpush1.msra.mxu0 0.0
      %1465 = vmatprep.subr.mxu0 0.0
      %1466 = vmatpush1.msra.mxu0 0.0
      %1467 = vmatprep.subr.mxu0 0.0
      %1468 = vmatpush1.msra.mxu0 0.0
      %1469 = vmatprep.subr.mxu0 0.0
      %1470 = vmatpush1.msra.mxu0 0.0
      %1471 = vmatprep.subr.mxu0 0.0
      %1472 = vmatpush1.msra.mxu0 0.0
      %1473 = vmatprep.subr.mxu0 0.0
      %1474 = vmatpush1.msra.mxu0 0.0
      %1475 = vmatprep.subr.mxu0 0.0
      %1476 = vmatpush1.msra.mxu0 0.0
      %1477 = vmatprep.subr.mxu0 0.0
      %1478 = vmatpush1.msra.mxu0 0.0
      %1479 = vmatprep.subr.mxu0 0.0
      %1480 = vmatpush1.msra.mxu0 0.0
      %1481 = vmatprep.subr.mxu0 0.0
      %1482 = vmatpush1.msra.mxu0 0.0
      %1483 = vmatprep.subr.mxu0 0.0
      %1484 = vmatpush1.msra.mxu0 0.0
      %1485 = vmatprep.subr.mxu0 0.0
      %1486 = vmatpush1.msra.mxu0 0.0
      %1487 = vmatprep.subr.mxu0 0.0
      %1488 = vmatpush1.msra.mxu0 0.0
      %1489 = vmatprep.subr.mxu0 0.0
      %1490 = vmatpush1.msra.mxu0 0.0
      %1491 = vmatprep.subr.mxu0 0.0
      %1492 = vmatpush1.msra.mxu0 0.0
      %1493 = vmatprep.subr.mxu0 0.0
      %1494 = vmatpush1.msra.mxu0 %v1385
      %1495 = vmatprep.subr.mxu0 0.0
      %1496 = vmatpush2.msra.mxu0 0.0
      %1497 = vmatprep.subr.mxu0 0.0
      %1498 = vmatpush2.msra.mxu0 0.0
      %1499 = vmatprep.subr.mxu0 0.0
      %1500 = vmatpush2.msra.mxu0 0.0
      %1501 = vmatprep.subr.mxu0 0.0
      %1502 = vmatpush2.msra.mxu0 0.0
      %1503 = vmatprep.subr.mxu0 0.0
      %1504 = vmatpush2.msra.mxu0 0.0
      %1505 = vmatprep.subr.mxu0 0.0
      %1506 = vmatpush2.msra.mxu0 0.0
      %1507 = vmatprep.subr.mxu0 0.0
      %1508 = vmatpush2.msra.mxu0 0.0
      %1509 = vmatprep.subr.mxu0 0.0
      %1510 = vmatpush2.msra.mxu0 0.0
      %1511 = vmatprep.subr.mxu0 0.0
      %1512 = vmatpush2.msra.mxu0 0.0
      %1513 = vmatprep.subr.mxu0 0.0
      %1514 = vmatpush2.msra.mxu0 0.0
      %1515 = vmatprep.subr.mxu0 0.0
      %1516 = vmatpush2.msra.mxu0 0.0
      %1517 = vmatprep.subr.mxu0 0.0
      %1518 = vmatpush2.msra.mxu0 0.0
      %1519 = vmatprep.subr.mxu0 0.0
      %1520 = vmatpush2.msra.mxu0 0.0
      %1521 = vmatprep.subr.mxu0 0.0
      %1522 = vmatpush2.msra.mxu0 0.0
      %1523 = vmatprep.subr.mxu0 0.0
      %1524 = vmatpush2.msra.mxu0 0.0
      %1525 = vmatprep.subr.mxu0 0.0
      %1526 = vmatpush2.msra.mxu0 0.0
      %1527 = vmatprep.mubr.f32.mxu0 0.0
      %1528 = vmatmul.mubr.f32.gmra.mxu0 %v1461
      %v1529 = vpop.f32.mrf.mxu0
      %v1530 = vadd.f32 0.0, %v1529
      %v1531 = vpop.f32.mrf.mxu0
      %1532 = vdwg.mxu0
      %v1533 = vadd.f32 %v1457, %v1530
      %v1534 = vsub.f32 %v1533, %v1457
      %v1535 = vmul.f32 %v1534, %v1534
      %v1536 = vmul.f32 %v1535, %v885
      %vm1537 = vcmask 60416
      %v1538 = vsel %vm1537, %v1536, 0.0
      %1539 = vadd.xlane.f32.xlu0 %v1538
      %v1540 = vpop.xlane.xlu0 %1539
      %v1542 = vsel %vm712, %v1534, 0
      %1544 = vmatprep.subr.mxu0 0.0
      %1545 = vmatpush1.msra.mxu0 0.0
      %1546 = vmatprep.subr.mxu0 0.0
      %1547 = vmatpush1.msra.mxu0 0.0
      %1548 = vmatprep.subr.mxu0 0.0
      %1549 = vmatpush1.msra.mxu0 0.0
      %1550 = vmatprep.subr.mxu0 0.0
      %1551 = vmatpush1.msra.mxu0 0.0
      %1552 = vmatprep.subr.mxu0 0.0
      %1553 = vmatpush1.msra.mxu0 0.0
      %1554 = vmatprep.subr.mxu0 0.0
      %1555 = vmatpush1.msra.mxu0 0.0
      %1556 = vmatprep.subr.mxu0 0.0
      %1557 = vmatpush1.msra.mxu0 0.0
      %1558 = vmatprep.subr.mxu0 0.0
      %1559 = vmatpush1.msra.mxu0 0.0
      %1560 = vmatprep.subr.mxu0 0.0
      %1561 = vmatpush1.msra.mxu0 0.0
      %1562 = vmatprep.subr.mxu0 0.0
      %1563 = vmatpush1.msra.mxu0 0.0
      %1564 = vmatprep.subr.mxu0 0.0
      %1565 = vmatpush1.msra.mxu0 0.0
      %1566 = vmatprep.subr.mxu0 0.0
      %1567 = vmatpush1.msra.mxu0 0.0
      %1568 = vmatprep.subr.mxu0 0.0
      %1569 = vmatpush1.msra.mxu0 0.0
      %1570 = vmatprep.subr.mxu0 0.0
      %1571 = vmatpush1.msra.mxu0 0.0
      %1572 = vmatprep.subr.mxu0 0.0
      %1573 = vmatpush1.msra.mxu0 0.0
      %1574 = vmatprep.subr.mxu0 0.0
      %1575 = vmatpush1.msra.mxu0 %v671
      %1576 = vmatprep.subr.mxu0 0.0
      %1577 = vmatpush2.msra.mxu0 0.0
      %1578 = vmatprep.subr.mxu0 0.0
      %1579 = vmatpush2.msra.mxu0 0.0
      %1580 = vmatprep.subr.mxu0 0.0
      %1581 = vmatpush2.msra.mxu0 0.0
      %1582 = vmatprep.subr.mxu0 0.0
      %1583 = vmatpush2.msra.mxu0 0.0
      %1584 = vmatprep.subr.mxu0 0.0
      %1585 = vmatpush2.msra.mxu0 0.0
      %1586 = vmatprep.subr.mxu0 0.0
      %1587 = vmatpush2.msra.mxu0 0.0
      %1588 = vmatprep.subr.mxu0 0.0
      %1589 = vmatpush2.msra.mxu0 0.0
      %1590 = vmatprep.subr.mxu0 0.0
      %1591 = vmatpush2.msra.mxu0 0.0
      %1592 = vmatprep.subr.mxu0 0.0
      %1593 = vmatpush2.msra.mxu0 0.0
      %1594 = vmatprep.subr.mxu0 0.0
      %1595 = vmatpush2.msra.mxu0 0.0
      %1596 = vmatprep.subr.mxu0 0.0
      %1597 = vmatpush2.msra.mxu0 0.0
      %1598 = vmatprep.subr.mxu0 0.0
      %1599 = vmatpush2.msra.mxu0 0.0
      %1600 = vmatprep.subr.mxu0 0.0
      %1601 = vmatpush2.msra.mxu0 0.0
      %1602 = vmatprep.subr.mxu0 0.0
      %1603 = vmatpush2.msra.mxu0 0.0
      %1604 = vmatprep.subr.mxu0 0.0
      %1605 = vmatpush2.msra.mxu0 0.0
      %1606 = vmatprep.subr.mxu0 0.0
      %1607 = vmatpush2.msra.mxu0 0.0
      %1608 = vmatprep.mubr.f32.mxu0 0.0
      %1609 = vmatmul.mubr.f32.gmra.mxu0 %v1542
      %v1610 = vpop.f32.mrf.mxu0
      %v1611 = vadd.f32 0.0, %v1610
      %v1612 = vpop.f32.mrf.mxu0
      %1613 = vdwg.mxu0
      %v1614 = vmul.f32 %v1611, %v1611
      %vm1615 = vcmask 27648
      %v1616 = vsel %vm1615, %v1614, 0.0
      %1617 = vadd.xlane.f32.xlu0 %v1616
      %v1618 = vpop.xlane.xlu0 %1617
      %v1619 = vadd.f32 %v1540, %v1618
      %1620 = vmatprep.subr.mxu0 0.0
      %1621 = vmatpush1.msra.mxu0 0.0
      %1622 = vmatprep.subr.mxu0 0.0
      %1623 = vmatpush1.msra.mxu0 0.0
      %1624 = vmatprep.subr.mxu0 0.0
      %1625 = vmatpush1.msra.mxu0 0.0
      %1626 = vmatprep.subr.mxu0 0.0
      %1627 = vmatpush1.msra.mxu0 0.0
      %1628 = vmatprep.subr.mxu0 0.0
      %1629 = vmatpush1.msra.mxu0 0.0
      %1630 = vmatprep.subr.mxu0 0.0
      %1631 = vmatpush1.msra.mxu0 0.0
      %1632 = vmatprep.subr.mxu0 0.0
      %1633 = vmatpush1.msra.mxu0 0.0
      %1634 = vmatprep.subr.mxu0 0.0
      %1635 = vmatpush1.msra.mxu0 0.0
      %1636 = vmatprep.subr.mxu0 0.0
      %1637 = vmatpush1.msra.mxu0 0.0
      %1638 = vmatprep.subr.mxu0 0.0
      %1639 = vmatpush1.msra.mxu0 0.0
      %1640 = vmatprep.subr.mxu0 0.0
      %1641 = vmatpush1.msra.mxu0 0.0
      %1642 = vmatprep.subr.mxu0 0.0
      %1643 = vmatpush1.msra.mxu0 0.0
      %1644 = vmatprep.subr.mxu0 0.0
      %1645 = vmatpush1.msra.mxu0 0.0
      %1646 = vmatprep.subr.mxu0 0.0
      %1647 = vmatpush1.msra.mxu0 0.0
      %1648 = vmatprep.subr.mxu0 0.0
      %1649 = vmatpush1.msra.mxu0 0.0
      %1650 = vmatprep.subr.mxu0 0.0
      %1651 = vmatpush1.msra.mxu0 %v673
      %1652 = vmatprep.subr.mxu0 0.0
      %1653 = vmatpush2.msra.mxu0 0.0
      %1654 = vmatprep.subr.mxu0 0.0
      %1655 = vmatpush2.msra.mxu0 0.0
      %1656 = vmatprep.subr.mxu0 0.0
      %1657 = vmatpush2.msra.mxu0 0.0
      %1658 = vmatprep.subr.mxu0 0.0
      %1659 = vmatpush2.msra.mxu0 0.0
      %1660 = vmatprep.subr.mxu0 0.0
      %1661 = vmatpush2.msra.mxu0 0.0
      %1662 = vmatprep.subr.mxu0 0.0
      %1663 = vmatpush2.msra.mxu0 0.0
      %1664 = vmatprep.subr.mxu0 0.0
      %1665 = vmatpush2.msra.mxu0 0.0
      %1666 = vmatprep.subr.mxu0 0.0
      %1667 = vmatpush2.msra.mxu0 0.0
      %1668 = vmatprep.subr.mxu0 0.0
      %1669 = vmatpush2.msra.mxu0 0.0
      %1670 = vmatprep.subr.mxu0 0.0
      %1671 = vmatpush2.msra.mxu0 0.0
      %1672 = vmatprep.subr.mxu0 0.0
      %1673 = vmatpush2.msra.mxu0 0.0
      %1674 = vmatprep.subr.mxu0 0.0
      %1675 = vmatpush2.msra.mxu0 0.0
      %1676 = vmatprep.subr.mxu0 0.0
      %1677 = vmatpush2.msra.mxu0 0.0
      %1678 = vmatprep.subr.mxu0 0.0
      %1679 = vmatpush2.msra.mxu0 0.0
      %1680 = vmatprep.subr.mxu0 0.0
      %1681 = vmatpush2.msra.mxu0 0.0
      %1682 = vmatprep.subr.mxu0 0.0
      %1683 = vmatpush2.msra.mxu0 0.0
      %1684 = vmatprep.mubr.f32.mxu0 0.0
      %1685 = vmatmul.mubr.f32.gmra.mxu0 %v1542
      %v1686 = vpop.f32.mrf.mxu0
      %v1687 = vadd.f32 0.0, %v1686
      %v1688 = vpop.f32.mrf.mxu0
      %1689 = vdwg.mxu0
      %v1690 = vmul.f32 %v1687, %v1687
      %v1691 = vsel %vm1615, %v1690, 0.0
      %1692 = vadd.xlane.f32.xlu0 %v1691
      %v1693 = vpop.xlane.xlu0 %1692
      %v1694 = vadd.f32 %v1619, %v1693
      %v1695 = vmul.f32 %v1205, 0.5
      %v1696 = vsub.f32 %v1695, 7.351508
      %v1697 = vmul.f32 %v1694, 0.5
      %v1698 = vlaneseq
      %v1699 = vshrl.u32 %v1698, 7
      %v1700 = vsub.s32 0, %v1699
      %v1701 = vrot.slane %v1696, %v1700
      %v1702 = vsub.f32 %v1701, %v1697
      %v1703 = vsub.f32 %v1533, %v873
      %v1704 = vmul.f32 %v1703, %v1703
      %v1705 = vmul.f32 %v1704, %v885
      %v1706 = vsel %vm1537, %v1705, 0.0
      %1707 = vadd.xlane.f32.xlu0 %v1706
      %v1708 = vpop.xlane.xlu0 %1707
      %v1709 = vmul.f32 %v1708, -0.5
      %v1710 = vmul.f32 %v702, 0.5
      %v1711 = vlaneseq
      %v1712 = vshrl.u32 %v1711, 7
      %v1713 = vsub.s32 0, %v1712
      %v1714 = vrot.slane %v1710, %v1713
      %v1715 = vsub.f32 %v1709, %v1714
      %v1716 = vsub.f32 %v1715, 7.351508
      %v1717 = vsub.f32 %v1702, %v1716
      %vm1718 = vcmask 3072
      %v1719 = vsel %vm1718, %v1717, 0.0
      %v1720 = vrot.slane %v1719, 4
      %v1721 = vadd.f32 %v1719, %v1720
      %v1722 = vrot.slane %v1721, 2
      %v1723 = vadd.f32 %v1721, %v1722
      %v1724 = vrot.slane %v1723, 1
      %v1725 = vadd.f32 %v1723, %v1724
      %v1726 = vmul.f32 %v1725, 0.25
      %v1727 = vld [vmem:[%s12] sm:$0xff]
      %v1728 = vld [vmem:[%s13] sm:$0x1]
      %v1730 = vlaneseq
      %v1731 = vshrl.u32 %v1730, 7
      %v1732 = vsub.s32 0, %v1731
      %v1733 = vrot.slane %v1728, %v1732
      %v1736 = vsel %vm712, %v1533, 0
      %1738 = vmatprep.subr.mxu0 0.0
      %1739 = vmatpush1.msra.mxu0 0.0
      %1740 = vmatprep.subr.mxu0 0.0
      %1741 = vmatpush1.msra.mxu0 0.0
      %1742 = vmatprep.subr.mxu0 0.0
      %1743 = vmatpush1.msra.mxu0 0.0
      %1744 = vmatprep.subr.mxu0 0.0
      %1745 = vmatpush1.msra.mxu0 0.0
      %1746 = vmatprep.subr.mxu0 0.0
      %1747 = vmatpush1.msra.mxu0 0.0
      %1748 = vmatprep.subr.mxu0 0.0
      %1749 = vmatpush1.msra.mxu0 0.0
      %1750 = vmatprep.subr.mxu0 0.0
      %1751 = vmatpush1.msra.mxu0 0.0
      %1752 = vmatprep.subr.mxu0 0.0
      %1753 = vmatpush1.msra.mxu0 0.0
      %1754 = vmatprep.subr.mxu0 0.0
      %1755 = vmatpush1.msra.mxu0 0.0
      %1756 = vmatprep.subr.mxu0 0.0
      %1757 = vmatpush1.msra.mxu0 0.0
      %1758 = vmatprep.subr.mxu0 0.0
      %1759 = vmatpush1.msra.mxu0 0.0
      %1760 = vmatprep.subr.mxu0 0.0
      %1761 = vmatpush1.msra.mxu0 0.0
      %1762 = vmatprep.subr.mxu0 0.0
      %1763 = vmatpush1.msra.mxu0 0.0
      %1764 = vmatprep.subr.mxu0 0.0
      %1765 = vmatpush1.msra.mxu0 0.0
      %1766 = vmatprep.subr.mxu0 0.0
      %1767 = vmatpush1.msra.mxu0 0.0
      %1768 = vmatprep.subr.mxu0 0.0
      %1769 = vmatpush1.msra.mxu0 %v1727
      %1770 = vmatprep.subr.mxu0 0.0
      %1771 = vmatpush2.msra.mxu0 0.0
      %1772 = vmatprep.subr.mxu0 0.0
      %1773 = vmatpush2.msra.mxu0 0.0
      %1774 = vmatprep.subr.mxu0 0.0
      %1775 = vmatpush2.msra.mxu0 0.0
      %1776 = vmatprep.subr.mxu0 0.0
      %1777 = vmatpush2.msra.mxu0 0.0
      %1778 = vmatprep.subr.mxu0 0.0
      %1779 = vmatpush2.msra.mxu0 0.0
      %1780 = vmatprep.subr.mxu0 0.0
      %1781 = vmatpush2.msra.mxu0 0.0
      %1782 = vmatprep.subr.mxu0 0.0
      %1783 = vmatpush2.msra.mxu0 0.0
      %1784 = vmatprep.subr.mxu0 0.0
      %1785 = vmatpush2.msra.mxu0 0.0
      %1786 = vmatprep.subr.mxu0 0.0
      %1787 = vmatpush2.msra.mxu0 0.0
      %1788 = vmatprep.subr.mxu0 0.0
      %1789 = vmatpush2.msra.mxu0 0.0
      %1790 = vmatprep.subr.mxu0 0.0
      %1791 = vmatpush2.msra.mxu0 0.0
      %1792 = vmatprep.subr.mxu0 0.0
      %1793 = vmatpush2.msra.mxu0 0.0
      %1794 = vmatprep.subr.mxu0 0.0
      %1795 = vmatpush2.msra.mxu0 0.0
      %1796 = vmatprep.subr.mxu0 0.0
      %1797 = vmatpush2.msra.mxu0 0.0
      %1798 = vmatprep.subr.mxu0 0.0
      %1799 = vmatpush2.msra.mxu0 0.0
      %1800 = vmatprep.subr.mxu0 0.0
      %1801 = vmatpush2.msra.mxu0 0.0
      %1802 = vmatprep.mubr.f32.mxu0 0.0
      %1803 = vmatmul.mubr.f32.gmra.mxu0 %v1736
      %v1804 = vpop.f32.mrf.mxu0
      %v1805 = vadd.f32 %v1733, %v1804
      %v1806 = vpop.f32.mrf.mxu0
      %1807 = vdwg.mxu0
      %v1808 = vlaneseq
      %v1809 = vshrl.u32 %v1808, 7
      %v1810 = vsub.s32 0, %v1809
      %v1811 = vrot.slane %v677, %v1810
      %v1812 = vmul.f32 %v1811, %v1805
      %v1813 = vmul.f32 %v1805, 1.442695
      %v1814 = vpow.pop %v1813
      %v1815 = vsub.f32 %v1812, %v1814
      %vm1816 = vcmask 257024
      %v1817 = vsel %vm1816, %v1815, 0.0
      %1818 = vadd.xlane.f32.xlu0 %v1817
      %v1819 = vpop.xlane.xlu0 %1818
      %vm1820 = vcmask 1043456
      %v1821 = vsel %vm1820, %v1819, 0.0
      %v1822 = vrot.slane %v1821, 4
      %v1823 = vadd.f32 %v1821, %v1822
      %v1824 = vrot.slane %v1823, 2
      %v1825 = vadd.f32 %v1823, %v1824
      %v1826 = vrot.slane %v1825, 1
      %v1827 = vadd.f32 %v1825, %v1826
      %v1828 = vmul.f32 %v1827, 0.25
      %v1829 = vsel %vm1537, %v1457, 0.0
      %v1830 = vrot.slane %v1829, 4
      %v1831 = vadd.f32 %v1829, %v1830
      %v1832 = vrot.slane %v1831, 2
      %v1833 = vadd.f32 %v1831, %v1832
      %v1834 = vrot.slane %v1833, 1
      %v1835 = vadd.f32 %v1833, %v1834
      %v1836 = vmul.f32 %v1835, 0.25
      %1837 = vst.msk [vmem:[%s651] sm:$0xf] %vm1537, %v1533
      %1838 = vst.msk [vmem:[#allocation2] sm:$0xf] %vm1537, %v1533
      %vm1839 = vcmask 0
      %1840 = vst.msk [vmem:[%s654] sm:$0x1] %vm1839, %v1726
      %1841 = vst.msk [vmem:[%s657] sm:$0x1] %vm1839, %v1828
      %1842 = vst.msk [vmem:[%s661] sm:$0x1] %vm699, %v1836
      %v1844 = vsel %vm888, %v672, 0
      %1846 = vmatprep.subr.mxu0 0.0
      %1847 = vmatpush1.xpose.msra.mxu0 0.0
      %1848 = vmatprep.subr.mxu0 0.0
      %1849 = vmatpush1.xpose.msra.mxu0 0.0
      %1850 = vmatprep.subr.mxu0 0.0
      %1851 = vmatpush1.xpose.msra.mxu0 0.0
      %1852 = vmatprep.subr.mxu0 0.0
      %1853 = vmatpush1.xpose.msra.mxu0 0.0
      %1854 = vmatprep.subr.mxu0 0.0
      %1855 = vmatpush1.xpose.msra.mxu0 0.0
      %1856 = vmatprep.subr.mxu0 0.0
      %1857 = vmatpush1.xpose.msra.mxu0 0.0
      %1858 = vmatprep.subr.mxu0 0.0
      %1859 = vmatpush1.xpose.msra.mxu0 0.0
      %1860 = vmatprep.subr.mxu0 0.0
      %1861 = vmatpush1.xpose.msra.mxu0 0.0
      %1862 = vmatprep.subr.mxu0 0.0
      %1863 = vmatpush1.xpose.msra.mxu0 0.0
      %1864 = vmatprep.subr.mxu0 0.0
      %1865 = vmatpush1.xpose.msra.mxu0 0.0
      %1866 = vmatprep.subr.mxu0 0.0
      %1867 = vmatpush1.xpose.msra.mxu0 0.0
      %1868 = vmatprep.subr.mxu0 0.0
      %1869 = vmatpush1.xpose.msra.mxu0 0.0
      %1870 = vmatprep.subr.mxu0 0.0
      %1871 = vmatpush1.xpose.msra.mxu0 0.0
      %1872 = vmatprep.subr.mxu0 0.0
      %1873 = vmatpush1.xpose.msra.mxu0 0.0
      %1874 = vmatprep.subr.mxu0 0.0
      %1875 = vmatpush1.xpose.msra.mxu0 0.0
      %1876 = vmatprep.subr.mxu0 0.0
      %1877 = vmatpush1.xpose.msra.mxu0 %v1844
      %1878 = vmatprep.subr.mxu0 0.0
      %1879 = vmatpush2.xpose.msra.mxu0 0.0
      %1880 = vmatprep.subr.mxu0 0.0
      %1881 = vmatpush2.xpose.msra.mxu0 0.0
      %1882 = vmatprep.subr.mxu0 0.0
      %1883 = vmatpush2.xpose.msra.mxu0 0.0
      %1884 = vmatprep.subr.mxu0 0.0
      %1885 = vmatpush2.xpose.msra.mxu0 0.0
      %1886 = vmatprep.subr.mxu0 0.0
      %1887 = vmatpush2.xpose.msra.mxu0 0.0
      %1888 = vmatprep.subr.mxu0 0.0
      %1889 = vmatpush2.xpose.msra.mxu0 0.0
      %1890 = vmatprep.subr.mxu0 0.0
      %1891 = vmatpush2.xpose.msra.mxu0 0.0
      %1892 = vmatprep.subr.mxu0 0.0
      %1893 = vmatpush2.xpose.msra.mxu0 0.0
      %1894 = vmatprep.subr.mxu0 0.0
      %1895 = vmatpush2.xpose.msra.mxu0 0.0
      %1896 = vmatprep.subr.mxu0 0.0
      %1897 = vmatpush2.xpose.msra.mxu0 0.0
      %1898 = vmatprep.subr.mxu0 0.0
      %1899 = vmatpush2.xpose.msra.mxu0 0.0
      %1900 = vmatprep.subr.mxu0 0.0
      %1901 = vmatpush2.xpose.msra.mxu0 0.0
      %1902 = vmatprep.subr.mxu0 0.0
      %1903 = vmatpush2.xpose.msra.mxu0 0.0
      %1904 = vmatprep.subr.mxu0 0.0
      %1905 = vmatpush2.xpose.msra.mxu0 0.0
      %1906 = vmatprep.subr.mxu0 0.0
      %1907 = vmatpush2.xpose.msra.mxu0 0.0
      %1908 = vmatprep.subr.mxu0 0.0
      %1909 = vmatpush2.xpose.msra.mxu0 0.0
      %1910 = vmatprep.mubr.f32.mxu0 0.0
      %1911 = vmatmul.mubr.f32.gmra.mxu0 %v1844
      %v1912 = vpop.f32.mrf.mxu0
      %v1913 = vadd.f32 0.0, %v1912
      %v1914 = vpop.f32.mrf.mxu0
      %1915 = vdwg.mxu0
      %v1916 = vadd.f32 %v887, %v1913
      %v1918 = vsel %vm888, %v674, 0
      %1920 = vmatprep.subr.mxu0 0.0
      %1921 = vmatpush1.xpose.msra.mxu0 0.0
      %1922 = vmatprep.subr.mxu0 0.0
      %1923 = vmatpush1.xpose.msra.mxu0 0.0
      %1924 = vmatprep.subr.mxu0 0.0
      %1925 = vmatpush1.xpose.msra.mxu0 0.0
      %1926 = vmatprep.subr.mxu0 0.0
      %1927 = vmatpush1.xpose.msra.mxu0 0.0
      %1928 = vmatprep.subr.mxu0 0.0
      %1929 = vmatpush1.xpose.msra.mxu0 0.0
      %1930 = vmatprep.subr.mxu0 0.0
      %1931 = vmatpush1.xpose.msra.mxu0 0.0
      %1932 = vmatprep.subr.mxu0 0.0
      %1933 = vmatpush1.xpose.msra.mxu0 0.0
      %1934 = vmatprep.subr.mxu0 0.0
      %1935 = vmatpush1.xpose.msra.mxu0 0.0
      %1936 = vmatprep.subr.mxu0 0.0
      %1937 = vmatpush1.xpose.msra.mxu0 0.0
      %1938 = vmatprep.subr.mxu0 0.0
      %1939 = vmatpush1.xpose.msra.mxu0 0.0
      %1940 = vmatprep.subr.mxu0 0.0
      %1941 = vmatpush1.xpose.msra.mxu0 0.0
      %1942 = vmatprep.subr.mxu0 0.0
      %1943 = vmatpush1.xpose.msra.mxu0 0.0
      %1944 = vmatprep.subr.mxu0 0.0
      %1945 = vmatpush1.xpose.msra.mxu0 0.0
      %1946 = vmatprep.subr.mxu0 0.0
      %1947 = vmatpush1.xpose.msra.mxu0 0.0
      %1948 = vmatprep.subr.mxu0 0.0
      %1949 = vmatpush1.xpose.msra.mxu0 0.0
      %1950 = vmatprep.subr.mxu0 0.0
      %1951 = vmatpush1.xpose.msra.mxu0 %v1918
      %1952 = vmatprep.subr.mxu0 0.0
      %1953 = vmatpush2.xpose.msra.mxu0 0.0
      %1954 = vmatprep.subr.mxu0 0.0
      %1955 = vmatpush2.xpose.msra.mxu0 0.0
      %1956 = vmatprep.subr.mxu0 0.0
      %1957 = vmatpush2.xpose.msra.mxu0 0.0
      %1958 = vmatprep.subr.mxu0 0.0
      %1959 = vmatpush2.xpose.msra.mxu0 0.0
      %1960 = vmatprep.subr.mxu0 0.0
      %1961 = vmatpush2.xpose.msra.mxu0 0.0
      %1962 = vmatprep.subr.mxu0 0.0
      %1963 = vmatpush2.xpose.msra.mxu0 0.0
      %1964 = vmatprep.subr.mxu0 0.0
      %1965 = vmatpush2.xpose.msra.mxu0 0.0
      %1966 = vmatprep.subr.mxu0 0.0
      %1967 = vmatpush2.xpose.msra.mxu0 0.0
      %1968 = vmatprep.subr.mxu0 0.0
      %1969 = vmatpush2.xpose.msra.mxu0 0.0
      %1970 = vmatprep.subr.mxu0 0.0
      %1971 = vmatpush2.xpose.msra.mxu0 0.0
      %1972 = vmatprep.subr.mxu0 0.0
      %1973 = vmatpush2.xpose.msra.mxu0 0.0
      %1974 = vmatprep.subr.mxu0 0.0
      %1975 = vmatpush2.xpose.msra.mxu0 0.0
      %1976 = vmatprep.subr.mxu0 0.0
      %1977 = vmatpush2.xpose.msra.mxu0 0.0
      %1978 = vmatprep.subr.mxu0 0.0
      %1979 = vmatpush2.xpose.msra.mxu0 0.0
      %1980 = vmatprep.subr.mxu0 0.0
      %1981 = vmatpush2.xpose.msra.mxu0 0.0
      %1982 = vmatprep.subr.mxu0 0.0
      %1983 = vmatpush2.xpose.msra.mxu0 0.0
      %1984 = vmatprep.mubr.f32.mxu0 0.0
      %1985 = vmatmul.mubr.f32.gmra.mxu0 %v1918
      %v1986 = vpop.f32.mrf.mxu0
      %v1987 = vadd.f32 0.0, %v1986
      %v1988 = vpop.f32.mrf.mxu0
      %1989 = vdwg.mxu0
      %v1990 = vadd.f32 %v1916, %v1987
      %v1991 = vsel %vm712, %v1990, %v1039
      %v1992 = vlog2.pop %v1991
      %v1993 = vmul.f32 %v1992, 0.6931472
      %v1994 = vadd.f32 %v1993, 0.0
      %1996 = vset.pattern.permute.xlu0 0
      %1997 = vperm.xlu0 %1996, %v1991
      %v1998 = vpop.permute.xlu0 %1997
      %v2000 = vrcp.pop %v1998
      %v2001 = vmul.f32 %v1991, %v2000
      %v2002 = vlaneseq
      %v2003 = vshrl.u32 %v2002, 7
      %v2004 = vsub.s32 0, %v2003
      %v2005 = vrot.slane %v2001, %v2004
      %v2006 = vmul.f32 %v1998, %v2005
      %v2007 = vsub.f32 %v1991, %v2006
      %v2008 = vsel %vm1058, %v2005, %v2007
      %v2009 = vlog2.pop %v2008
      %v2010 = vmul.f32 %v2009, 0.6931472
      %v2012 = vrot.slane %v2010, 1
      %2013 = vrot.lane.b32.xlu0 %v2012, 127
      %v2014 = vpop.permute.xlu0 %2013
      %v2016 = vadd.f32 %v1994, %v2014
      %2018 = vset.pattern.permute.xlu0 1
      %2019 = vperm.xlu0 %2018, %v2008
      %v2020 = vpop.permute.xlu0 %2019
      %v2022 = vrcp.pop %v2020
      %v2023 = vmul.f32 %v2008, %v2022
      %v2024 = vlaneseq
      %v2025 = vshrl.u32 %v2024, 7
      %v2026 = vsub.s32 1, %v2025
      %v2027 = vrot.slane %v2023, %v2026
      %v2028 = vmul.f32 %v2020, %v2027
      %v2029 = vsub.f32 %v2008, %v2028
      %v2030 = vsel %vm1081, %v2027, %v2029
      %v2031 = vlog2.pop %v2030
      %v2032 = vmul.f32 %v2031, 0.6931472
      %v2034 = vrot.slane %v2032, 2
      %2035 = vrot.lane.b32.xlu0 %v2034, 126
      %v2036 = vpop.permute.xlu0 %2035
      %v2038 = vadd.f32 %v2016, %v2036
      %2040 = vset.pattern.permute.xlu0 2
      %2041 = vperm.xlu0 %2040, %v2030
      %v2042 = vpop.permute.xlu0 %2041
      %v2044 = vrcp.pop %v2042
      %v2045 = vmul.f32 %v2030, %v2044
      %v2046 = vlaneseq
      %v2047 = vshrl.u32 %v2046, 7
      %v2048 = vsub.s32 2, %v2047
      %v2049 = vrot.slane %v2045, %v2048
      %v2050 = vmul.f32 %v2042, %v2049
      %v2051 = vsub.f32 %v2030, %v2050
      %v2052 = vsel %vm1104, %v2049, %v2051
      %v2053 = vlog2.pop %v2052
      %v2054 = vmul.f32 %v2053, 0.6931472
      %v2056 = vrot.slane %v2054, 3
      %2057 = vrot.lane.b32.xlu0 %v2056, 125
      %v2058 = vpop.permute.xlu0 %2057
      %v2060 = vadd.f32 %v2038, %v2058
      %2062 = vset.pattern.permute.xlu0 3
      %2063 = vperm.xlu0 %2062, %v2052
      %v2064 = vpop.permute.xlu0 %2063
      %v2066 = vrcp.pop %v2064
      %v2067 = vmul.f32 %v2052, %v2066
      %v2068 = vlaneseq
      %v2069 = vshrl.u32 %v2068, 7
      %v2070 = vsub.s32 3, %v2069
      %v2071 = vrot.slane %v2067, %v2070
      %v2072 = vmul.f32 %v2064, %v2071
      %v2073 = vsub.f32 %v2052, %v2072
      %v2074 = vsel %vm1127, %v2071, %v2073
      %v2075 = vlog2.pop %v2074
      %v2076 = vmul.f32 %v2075, 0.6931472
      %v2078 = vrot.slane %v2076, 4
      %2079 = vrot.lane.b32.xlu0 %v2078, 124
      %v2080 = vpop.permute.xlu0 %2079
      %v2082 = vadd.f32 %v2060, %v2080
      %2084 = vset.pattern.permute.xlu0 4
      %2085 = vperm.xlu0 %2084, %v2074
      %v2086 = vpop.permute.xlu0 %2085
      %v2088 = vrcp.pop %v2086
      %v2089 = vmul.f32 %v2074, %v2088
      %v2090 = vlaneseq
      %v2091 = vshrl.u32 %v2090, 7
      %v2092 = vsub.s32 4, %v2091
      %v2093 = vrot.slane %v2089, %v2092
      %v2094 = vmul.f32 %v2086, %v2093
      %v2095 = vsub.f32 %v2074, %v2094
      %v2096 = vsel %vm1150, %v2093, %v2095
      %v2097 = vlog2.pop %v2096
      %v2098 = vmul.f32 %v2097, 0.6931472
      %v2100 = vrot.slane %v2098, 5
      %2101 = vrot.lane.b32.xlu0 %v2100, 123
      %v2102 = vpop.permute.xlu0 %2101
      %v2104 = vadd.f32 %v2082, %v2102
      %2106 = vset.pattern.permute.xlu0 5
      %2107 = vperm.xlu0 %2106, %v2096
      %v2108 = vpop.permute.xlu0 %2107
      %v2110 = vrcp.pop %v2108
      %v2111 = vmul.f32 %v2096, %v2110
      %v2112 = vlaneseq
      %v2113 = vshrl.u32 %v2112, 7
      %v2114 = vsub.s32 5, %v2113
      %v2115 = vrot.slane %v2111, %v2114
      %v2116 = vmul.f32 %v2108, %v2115
      %v2117 = vsub.f32 %v2096, %v2116
      %v2118 = vsel %vm1173, %v2115, %v2117
      %v2119 = vlog2.pop %v2118
      %v2120 = vmul.f32 %v2119, 0.6931472
      %v2122 = vrot.slane %v2120, 6
      %2123 = vrot.lane.b32.xlu0 %v2122, 122
      %v2124 = vpop.permute.xlu0 %2123
      %v2126 = vadd.f32 %v2104, %v2124
      %2128 = vset.pattern.permute.xlu0 6
      %2129 = vperm.xlu0 %2128, %v2118
      %v2130 = vpop.permute.xlu0 %2129
      %v2132 = vrcp.pop %v2130
      %v2133 = vmul.f32 %v2118, %v2132
      %v2134 = vlaneseq
      %v2135 = vshrl.u32 %v2134, 7
      %v2136 = vsub.s32 6, %v2135
      %v2137 = vrot.slane %v2133, %v2136
      %v2138 = vmul.f32 %v2130, %v2137
      %v2139 = vsub.f32 %v2118, %v2138
      %v2140 = vsel %vm1196, %v2137, %v2139
      %v2141 = vlog2.pop %v2140
      %v2142 = vmul.f32 %v2141, 0.6931472
      %v2144 = vrot.slane %v2142, 7
      %2145 = vrot.lane.b32.xlu0 %v2144, 121
      %v2146 = vpop.permute.xlu0 %2145
      %v2148 = vadd.f32 %v2126, %v2146
      %2150 = vset.pattern.permute.xlu0 7
      %2151 = vperm.xlu0 %2150, %v2140
      %v2152 = vpop.permute.xlu0 %2151
      %v2154 = vrcp.pop %v2152
      %v2155 = vmul.f32 %v2140, %v2154
      %v2156 = vlaneseq
      %v2157 = vshrl.u32 %v2156, 7
      %v2158 = vsub.s32 7, %v2157
      %v2159 = vrot.slane %v2155, %v2158
      %v2160 = vmul.f32 %v2152, %v2159
      %v2161 = vsub.f32 %v2140, %v2160
      %v2162 = vsel %vm1219, %v2159, %v2161
      %v2163 = vlaneseq
      %v2164 = vshrl.u32 %v2163, 7
      %v2165 = vsub.s32 1, %v2164
      %v2166 = vrot.slane %v670, %v2165
      %v2167 = vadd.f32 %v1221, %v2166
      %v2168 = vrot.slane %v676, 4
      %v2169 = vsel %vm888, %v2168, 0
      %2171 = vmatprep.subr.mxu0 0.0
      %2172 = vmatpush1.xpose.msra.mxu0 0.0
      %2173 = vmatprep.subr.mxu0 0.0
      %2174 = vmatpush1.xpose.msra.mxu0 0.0
      %2175 = vmatprep.subr.mxu0 0.0
      %2176 = vmatpush1.xpose.msra.mxu0 0.0
      %2177 = vmatprep.subr.mxu0 0.0
      %2178 = vmatpush1.xpose.msra.mxu0 0.0
      %2179 = vmatprep.subr.mxu0 0.0
      %2180 = vmatpush1.xpose.msra.mxu0 0.0
      %2181 = vmatprep.subr.mxu0 0.0
      %2182 = vmatpush1.xpose.msra.mxu0 0.0
      %2183 = vmatprep.subr.mxu0 0.0
      %2184 = vmatpush1.xpose.msra.mxu0 0.0
      %2185 = vmatprep.subr.mxu0 0.0
      %2186 = vmatpush1.xpose.msra.mxu0 0.0
      %2187 = vmatprep.subr.mxu0 0.0
      %2188 = vmatpush1.xpose.msra.mxu0 0.0
      %2189 = vmatprep.subr.mxu0 0.0
      %2190 = vmatpush1.xpose.msra.mxu0 0.0
      %2191 = vmatprep.subr.mxu0 0.0
      %2192 = vmatpush1.xpose.msra.mxu0 0.0
      %2193 = vmatprep.subr.mxu0 0.0
      %2194 = vmatpush1.xpose.msra.mxu0 0.0
      %2195 = vmatprep.subr.mxu0 0.0
      %2196 = vmatpush1.xpose.msra.mxu0 0.0
      %2197 = vmatprep.subr.mxu0 0.0
      %2198 = vmatpush1.xpose.msra.mxu0 0.0
      %2199 = vmatprep.subr.mxu0 0.0
      %2200 = vmatpush1.xpose.msra.mxu0 0.0
      %2201 = vmatprep.subr.mxu0 0.0
      %2202 = vmatpush1.xpose.msra.mxu0 %v1844
      %2203 = vmatprep.subr.mxu0 0.0
      %2204 = vmatpush2.xpose.msra.mxu0 0.0
      %2205 = vmatprep.subr.mxu0 0.0
      %2206 = vmatpush2.xpose.msra.mxu0 0.0
      %2207 = vmatprep.subr.mxu0 0.0
      %2208 = vmatpush2.xpose.msra.mxu0 0.0
      %2209 = vmatprep.subr.mxu0 0.0
      %2210 = vmatpush2.xpose.msra.mxu0 0.0
      %2211 = vmatprep.subr.mxu0 0.0
      %2212 = vmatpush2.xpose.msra.mxu0 0.0
      %2213 = vmatprep.subr.mxu0 0.0
      %2214 = vmatpush2.xpose.msra.mxu0 0.0
      %2215 = vmatprep.subr.mxu0 0.0
      %2216 = vmatpush2.xpose.msra.mxu0 0.0
      %2217 = vmatprep.subr.mxu0 0.0
      %2218 = vmatpush2.xpose.msra.mxu0 0.0
      %2219 = vmatprep.subr.mxu0 0.0
      %2220 = vmatpush2.xpose.msra.mxu0 0.0
      %2221 = vmatprep.subr.mxu0 0.0
      %2222 = vmatpush2.xpose.msra.mxu0 0.0
      %2223 = vmatprep.subr.mxu0 0.0
      %2224 = vmatpush2.xpose.msra.mxu0 0.0
      %2225 = vmatprep.subr.mxu0 0.0
      %2226 = vmatpush2.xpose.msra.mxu0 0.0
      %2227 = vmatprep.subr.mxu0 0.0
      %2228 = vmatpush2.xpose.msra.mxu0 0.0
      %2229 = vmatprep.subr.mxu0 0.0
      %2230 = vmatpush2.xpose.msra.mxu0 0.0
      %2231 = vmatprep.subr.mxu0 0.0
      %2232 = vmatpush2.xpose.msra.mxu0 0.0
      %2233 = vmatprep.subr.mxu0 0.0
      %2234 = vmatpush2.xpose.msra.mxu0 0.0
      %2235 = vmatprep.mubr.f32.mxu0 0.0
      %2236 = vmatmul.mubr.f32.gmra.mxu0 %v2169
      %v2237 = vpop.f32.mrf.mxu0
      %v2238 = vadd.f32 0.0, %v2237
      %v2239 = vpop.f32.mrf.mxu0
      %2240 = vdwg.mxu0
      %v2242 = vrot.slane %v2238, 4
      %v2244 = vadd.f32 %v1233, %v2242
      %2245 = vrot.lane.b32.xlu0 %v2168, 124
      %v2246 = vpop.permute.xlu0 %2245
      %v2247 = vsel %vm888, %v2246, 0
      %2249 = vmatprep.subr.mxu0 0.0
      %2250 = vmatpush1.xpose.msra.mxu0 0.0
      %2251 = vmatprep.subr.mxu0 0.0
      %2252 = vmatpush1.xpose.msra.mxu0 0.0
      %2253 = vmatprep.subr.mxu0 0.0
      %2254 = vmatpush1.xpose.msra.mxu0 0.0
      %2255 = vmatprep.subr.mxu0 0.0
      %2256 = vmatpush1.xpose.msra.mxu0 0.0
      %2257 = vmatprep.subr.mxu0 0.0
      %2258 = vmatpush1.xpose.msra.mxu0 0.0
      %2259 = vmatprep.subr.mxu0 0.0
      %2260 = vmatpush1.xpose.msra.mxu0 0.0
      %2261 = vmatprep.subr.mxu0 0.0
      %2262 = vmatpush1.xpose.msra.mxu0 0.0
      %2263 = vmatprep.subr.mxu0 0.0
      %2264 = vmatpush1.xpose.msra.mxu0 0.0
      %2265 = vmatprep.subr.mxu0 0.0
      %2266 = vmatpush1.xpose.msra.mxu0 0.0
      %2267 = vmatprep.subr.mxu0 0.0
      %2268 = vmatpush1.xpose.msra.mxu0 0.0
      %2269 = vmatprep.subr.mxu0 0.0
      %2270 = vmatpush1.xpose.msra.mxu0 0.0
      %2271 = vmatprep.subr.mxu0 0.0
      %2272 = vmatpush1.xpose.msra.mxu0 0.0
      %2273 = vmatprep.subr.mxu0 0.0
      %2274 = vmatpush1.xpose.msra.mxu0 0.0
      %2275 = vmatprep.subr.mxu0 0.0
      %2276 = vmatpush1.xpose.msra.mxu0 0.0
      %2277 = vmatprep.subr.mxu0 0.0
      %2278 = vmatpush1.xpose.msra.mxu0 0.0
      %2279 = vmatprep.subr.mxu0 0.0
      %2280 = vmatpush1.xpose.msra.mxu0 %v1918
      %2281 = vmatprep.subr.mxu0 0.0
      %2282 = vmatpush2.xpose.msra.mxu0 0.0
      %2283 = vmatprep.subr.mxu0 0.0
      %2284 = vmatpush2.xpose.msra.mxu0 0.0
      %2285 = vmatprep.subr.mxu0 0.0
      %2286 = vmatpush2.xpose.msra.mxu0 0.0
      %2287 = vmatprep.subr.mxu0 0.0
      %2288 = vmatpush2.xpose.msra.mxu0 0.0
      %2289 = vmatprep.subr.mxu0 0.0
      %2290 = vmatpush2.xpose.msra.mxu0 0.0
      %2291 = vmatprep.subr.mxu0 0.0
      %2292 = vmatpush2.xpose.msra.mxu0 0.0
      %2293 = vmatprep.subr.mxu0 0.0
      %2294 = vmatpush2.xpose.msra.mxu0 0.0
      %2295 = vmatprep.subr.mxu0 0.0
      %2296 = vmatpush2.xpose.msra.mxu0 0.0
      %2297 = vmatprep.subr.mxu0 0.0
      %2298 = vmatpush2.xpose.msra.mxu0 0.0
      %2299 = vmatprep.subr.mxu0 0.0
      %2300 = vmatpush2.xpose.msra.mxu0 0.0
      %2301 = vmatprep.subr.mxu0 0.0
      %2302 = vmatpush2.xpose.msra.mxu0 0.0
      %2303 = vmatprep.subr.mxu0 0.0
      %2304 = vmatpush2.xpose.msra.mxu0 0.0
      %2305 = vmatprep.subr.mxu0 0.0
      %2306 = vmatpush2.xpose.msra.mxu0 0.0
      %2307 = vmatprep.subr.mxu0 0.0
      %2308 = vmatpush2.xpose.msra.mxu0 0.0
      %2309 = vmatprep.subr.mxu0 0.0
      %2310 = vmatpush2.xpose.msra.mxu0 0.0
      %2311 = vmatprep.subr.mxu0 0.0
      %2312 = vmatpush2.xpose.msra.mxu0 0.0
      %2313 = vmatprep.mubr.f32.mxu0 0.0
      %2314 = vmatmul.mubr.f32.gmra.mxu0 %v2247
      %v2315 = vpop.f32.mrf.mxu0
      %v2316 = vadd.f32 0.0, %v2315
      %v2317 = vpop.f32.mrf.mxu0
      %2318 = vdwg.mxu0
      %v2320 = vrot.slane %v2316, 4
      %v2322 = vadd.f32 %v2244, %v2320
      %v2324 = vrot.slane %v2167, 4
      %2326 = vrot.lane.b32.xlu0 %v2162, 120
      %v2327 = vpop.permute.xlu0 %2326
      %v2329 = vsel %vm712, %v2324, 0
      %2331 = vmatprep.subr.mxu0 0.0
      %2332 = vmatpush1.msra.mxu0 0.0
      %2333 = vmatprep.subr.mxu0 0.0
      %2334 = vmatpush1.msra.mxu0 0.0
      %2335 = vmatprep.subr.mxu0 0.0
      %2336 = vmatpush1.msra.mxu0 0.0
      %2337 = vmatprep.subr.mxu0 0.0
      %2338 = vmatpush1.msra.mxu0 0.0
      %2339 = vmatprep.subr.mxu0 0.0
      %2340 = vmatpush1.msra.mxu0 0.0
      %2341 = vmatprep.subr.mxu0 0.0
      %2342 = vmatpush1.msra.mxu0 0.0
      %2343 = vmatprep.subr.mxu0 0.0
      %2344 = vmatpush1.msra.mxu0 0.0
      %2345 = vmatprep.subr.mxu0 0.0
      %2346 = vmatpush1.msra.mxu0 0.0
      %2347 = vmatprep.subr.mxu0 0.0
      %2348 = vmatpush1.msra.mxu0 0.0
      %2349 = vmatprep.subr.mxu0 0.0
      %2350 = vmatpush1.msra.mxu0 0.0
      %2351 = vmatprep.subr.mxu0 0.0
      %2352 = vmatpush1.msra.mxu0 0.0
      %2353 = vmatprep.subr.mxu0 0.0
      %2354 = vmatpush1.msra.mxu0 0.0
      %2355 = vmatprep.subr.mxu0 0.0
      %2356 = vmatpush1.msra.mxu0 0.0
      %2357 = vmatprep.subr.mxu0 0.0
      %2358 = vmatpush1.msra.mxu0 0.0
      %2359 = vmatprep.subr.mxu0 0.0
      %2360 = vmatpush1.msra.mxu0 0.0
      %2361 = vmatprep.subr.mxu0 0.0
      %2362 = vmatpush1.msra.mxu0 %v2327
      %2363 = vmatprep.subr.mxu0 0.0
      %2364 = vmatpush2.msra.mxu0 0.0
      %2365 = vmatprep.subr.mxu0 0.0
      %2366 = vmatpush2.msra.mxu0 0.0
      %2367 = vmatprep.subr.mxu0 0.0
      %2368 = vmatpush2.msra.mxu0 0.0
      %2369 = vmatprep.subr.mxu0 0.0
      %2370 = vmatpush2.msra.mxu0 0.0
      %2371 = vmatprep.subr.mxu0 0.0
      %2372 = vmatpush2.msra.mxu0 0.0
      %2373 = vmatprep.subr.mxu0 0.0
      %2374 = vmatpush2.msra.mxu0 0.0
      %2375 = vmatprep.subr.mxu0 0.0
      %2376 = vmatpush2.msra.mxu0 0.0
      %2377 = vmatprep.subr.mxu0 0.0
      %2378 = vmatpush2.msra.mxu0 0.0
      %2379 = vmatprep.subr.mxu0 0.0
      %2380 = vmatpush2.msra.mxu0 0.0
      %2381 = vmatprep.subr.mxu0 0.0
      %2382 = vmatpush2.msra.mxu0 0.0
      %2383 = vmatprep.subr.mxu0 0.0
      %2384 = vmatpush2.msra.mxu0 0.0
      %2385 = vmatprep.subr.mxu0 0.0
      %2386 = vmatpush2.msra.mxu0 0.0
      %2387 = vmatprep.subr.mxu0 0.0
      %2388 = vmatpush2.msra.mxu0 0.0
      %2389 = vmatprep.subr.mxu0 0.0
      %2390 = vmatpush2.msra.mxu0 0.0
      %2391 = vmatprep.subr.mxu0 0.0
      %2392 = vmatpush2.msra.mxu0 0.0
      %2393 = vmatprep.subr.mxu0 0.0
      %2394 = vmatpush2.msra.mxu0 0.0
      %2395 = vmatprep.mubr.f32.mxu0 0.0
      %2396 = vmatmul.mubr.f32.gmra.mxu0 %v2329
      %v2397 = vpop.f32.mrf.mxu0
      %v2398 = vadd.f32 0.0, %v2397
      %v2399 = vpop.f32.mrf.mxu0
      %2400 = vdwg.mxu0
      %v2402 = vrot.slane %v2322, 4
      %v2403 = vsel %vm712, %v2402, 0
      %2405 = vmatprep.subr.mxu0 0.0
      %2406 = vmatpush1.msra.mxu0 0.0
      %2407 = vmatprep.subr.mxu0 0.0
      %2408 = vmatpush1.msra.mxu0 0.0
      %2409 = vmatprep.subr.mxu0 0.0
      %2410 = vmatpush1.msra.mxu0 0.0
      %2411 = vmatprep.subr.mxu0 0.0
      %2412 = vmatpush1.msra.mxu0 0.0
      %2413 = vmatprep.subr.mxu0 0.0
      %2414 = vmatpush1.msra.mxu0 0.0
      %2415 = vmatprep.subr.mxu0 0.0
      %2416 = vmatpush1.msra.mxu0 0.0
      %2417 = vmatprep.subr.mxu0 0.0
      %2418 = vmatpush1.msra.mxu0 0.0
      %2419 = vmatprep.subr.mxu0 0.0
      %2420 = vmatpush1.msra.mxu0 0.0
      %2421 = vmatprep.subr.mxu0 0.0
      %2422 = vmatpush1.msra.mxu0 0.0
      %2423 = vmatprep.subr.mxu0 0.0
      %2424 = vmatpush1.msra.mxu0 0.0
      %2425 = vmatprep.subr.mxu0 0.0
      %2426 = vmatpush1.msra.mxu0 0.0
      %2427 = vmatprep.subr.mxu0 0.0
      %2428 = vmatpush1.msra.mxu0 0.0
      %2429 = vmatprep.subr.mxu0 0.0
      %2430 = vmatpush1.msra.mxu0 0.0
      %2431 = vmatprep.subr.mxu0 0.0
      %2432 = vmatpush1.msra.mxu0 0.0
      %2433 = vmatprep.subr.mxu0 0.0
      %2434 = vmatpush1.msra.mxu0 0.0
      %2435 = vmatprep.subr.mxu0 0.0
      %2436 = vmatpush1.msra.mxu0 %v2327
      %2437 = vmatprep.subr.mxu0 0.0
      %2438 = vmatpush2.msra.mxu0 0.0
      %2439 = vmatprep.subr.mxu0 0.0
      %2440 = vmatpush2.msra.mxu0 0.0
      %2441 = vmatprep.subr.mxu0 0.0
      %2442 = vmatpush2.msra.mxu0 0.0
      %2443 = vmatprep.subr.mxu0 0.0
      %2444 = vmatpush2.msra.mxu0 0.0
      %2445 = vmatprep.subr.mxu0 0.0
      %2446 = vmatpush2.msra.mxu0 0.0
      %2447 = vmatprep.subr.mxu0 0.0
      %2448 = vmatpush2.msra.mxu0 0.0
      %2449 = vmatprep.subr.mxu0 0.0
      %2450 = vmatpush2.msra.mxu0 0.0
      %2451 = vmatprep.subr.mxu0 0.0
      %2452 = vmatpush2.msra.mxu0 0.0
      %2453 = vmatprep.subr.mxu0 0.0
      %2454 = vmatpush2.msra.mxu0 0.0
      %2455 = vmatprep.subr.mxu0 0.0
      %2456 = vmatpush2.msra.mxu0 0.0
      %2457 = vmatprep.subr.mxu0 0.0
      %2458 = vmatpush2.msra.mxu0 0.0
      %2459 = vmatprep.subr.mxu0 0.0
      %2460 = vmatpush2.msra.mxu0 0.0
      %2461 = vmatprep.subr.mxu0 0.0
      %2462 = vmatpush2.msra.mxu0 0.0
      %2463 = vmatprep.subr.mxu0 0.0
      %2464 = vmatpush2.msra.mxu0 0.0
      %2465 = vmatprep.subr.mxu0 0.0
      %2466 = vmatpush2.msra.mxu0 0.0
      %2467 = vmatprep.subr.mxu0 0.0
      %2468 = vmatpush2.msra.mxu0 0.0
      %2469 = vmatprep.mubr.f32.mxu0 0.0
      %2470 = vmatmul.mubr.f32.gmra.mxu0 %v2403
      %v2471 = vpop.f32.mrf.mxu0
      %v2472 = vadd.f32 0.0, %v2471
      %v2473 = vpop.f32.mrf.mxu0
      %2474 = vdwg.mxu0
      %v2475 = vadd.f32 %v2398, %v2472
      %v2476 = vsub.f32 %v2475, %v2398
      %v2477 = vmul.f32 %v2476, %v2476
      %v2478 = vmul.f32 %v2477, %v885
      %v2479 = vsel %vm1537, %v2478, 0.0
      %2480 = vadd.xlane.f32.xlu0 %v2479
      %v2481 = vpop.xlane.xlu0 %2480
      %v2483 = vsel %vm712, %v2476, 0
      %2485 = vmatprep.subr.mxu0 0.0
      %2486 = vmatpush1.msra.mxu0 0.0
      %2487 = vmatprep.subr.mxu0 0.0
      %2488 = vmatpush1.msra.mxu0 0.0
      %2489 = vmatprep.subr.mxu0 0.0
      %2490 = vmatpush1.msra.mxu0 0.0
      %2491 = vmatprep.subr.mxu0 0.0
      %2492 = vmatpush1.msra.mxu0 0.0
      %2493 = vmatprep.subr.mxu0 0.0
      %2494 = vmatpush1.msra.mxu0 0.0
      %2495 = vmatprep.subr.mxu0 0.0
      %2496 = vmatpush1.msra.mxu0 0.0
      %2497 = vmatprep.subr.mxu0 0.0
      %2498 = vmatpush1.msra.mxu0 0.0
      %2499 = vmatprep.subr.mxu0 0.0
      %2500 = vmatpush1.msra.mxu0 0.0
      %2501 = vmatprep.subr.mxu0 0.0
      %2502 = vmatpush1.msra.mxu0 0.0
      %2503 = vmatprep.subr.mxu0 0.0
      %2504 = vmatpush1.msra.mxu0 0.0
      %2505 = vmatprep.subr.mxu0 0.0
      %2506 = vmatpush1.msra.mxu0 0.0
      %2507 = vmatprep.subr.mxu0 0.0
      %2508 = vmatpush1.msra.mxu0 0.0
      %2509 = vmatprep.subr.mxu0 0.0
      %2510 = vmatpush1.msra.mxu0 0.0
      %2511 = vmatprep.subr.mxu0 0.0
      %2512 = vmatpush1.msra.mxu0 0.0
      %2513 = vmatprep.subr.mxu0 0.0
      %2514 = vmatpush1.msra.mxu0 0.0
      %2515 = vmatprep.subr.mxu0 0.0
      %2516 = vmatpush1.msra.mxu0 %v672
      %2517 = vmatprep.subr.mxu0 0.0
      %2518 = vmatpush2.msra.mxu0 0.0
      %2519 = vmatprep.subr.mxu0 0.0
      %2520 = vmatpush2.msra.mxu0 0.0
      %2521 = vmatprep.subr.mxu0 0.0
      %2522 = vmatpush2.msra.mxu0 0.0
      %2523 = vmatprep.subr.mxu0 0.0
      %2524 = vmatpush2.msra.mxu0 0.0
      %2525 = vmatprep.subr.mxu0 0.0
      %2526 = vmatpush2.msra.mxu0 0.0
      %2527 = vmatprep.subr.mxu0 0.0
      %2528 = vmatpush2.msra.mxu0 0.0
      %2529 = vmatprep.subr.mxu0 0.0
      %2530 = vmatpush2.msra.mxu0 0.0
      %2531 = vmatprep.subr.mxu0 0.0
      %2532 = vmatpush2.msra.mxu0 0.0
      %2533 = vmatprep.subr.mxu0 0.0
      %2534 = vmatpush2.msra.mxu0 0.0
      %2535 = vmatprep.subr.mxu0 0.0
      %2536 = vmatpush2.msra.mxu0 0.0
      %2537 = vmatprep.subr.mxu0 0.0
      %2538 = vmatpush2.msra.mxu0 0.0
      %2539 = vmatprep.subr.mxu0 0.0
      %2540 = vmatpush2.msra.mxu0 0.0
      %2541 = vmatprep.subr.mxu0 0.0
      %2542 = vmatpush2.msra.mxu0 0.0
      %2543 = vmatprep.subr.mxu0 0.0
      %2544 = vmatpush2.msra.mxu0 0.0
      %2545 = vmatprep.subr.mxu0 0.0
      %2546 = vmatpush2.msra.mxu0 0.0
      %2547 = vmatprep.subr.mxu0 0.0
      %2548 = vmatpush2.msra.mxu0 0.0
      %2549 = vmatprep.mubr.f32.mxu0 0.0
      %2550 = vmatmul.mubr.f32.gmra.mxu0 %v2483
      %v2551 = vpop.f32.mrf.mxu0
      %v2552 = vadd.f32 0.0, %v2551
      %v2553 = vpop.f32.mrf.mxu0
      %2554 = vdwg.mxu0
      %v2555 = vmul.f32 %v2552, %v2552
      %v2556 = vsel %vm1615, %v2555, 0.0
      %2557 = vadd.xlane.f32.xlu0 %v2556
      %v2558 = vpop.xlane.xlu0 %2557
      %v2559 = vadd.f32 %v2481, %v2558
      %2560 = vmatprep.subr.mxu0 0.0
      %2561 = vmatpush1.msra.mxu0 0.0
      %2562 = vmatprep.subr.mxu0 0.0
      %2563 = vmatpush1.msra.mxu0 0.0
      %2564 = vmatprep.subr.mxu0 0.0
      %2565 = vmatpush1.msra.mxu0 0.0
      %2566 = vmatprep.subr.mxu0 0.0
      %2567 = vmatpush1.msra.mxu0 0.0
      %2568 = vmatprep.subr.mxu0 0.0
      %2569 = vmatpush1.msra.mxu0 0.0
      %2570 = vmatprep.subr.mxu0 0.0
      %2571 = vmatpush1.msra.mxu0 0.0
      %2572 = vmatprep.subr.mxu0 0.0
      %2573 = vmatpush1.msra.mxu0 0.0
      %2574 = vmatprep.subr.mxu0 0.0
      %2575 = vmatpush1.msra.mxu0 0.0
      %2576 = vmatprep.subr.mxu0 0.0
      %2577 = vmatpush1.msra.mxu0 0.0
      %2578 = vmatprep.subr.mxu0 0.0
      %2579 = vmatpush1.msra.mxu0 0.0
      %2580 = vmatprep.subr.mxu0 0.0
      %2581 = vmatpush1.msra.mxu0 0.0
      %2582 = vmatprep.subr.mxu0 0.0
      %2583 = vmatpush1.msra.mxu0 0.0
      %2584 = vmatprep.subr.mxu0 0.0
      %2585 = vmatpush1.msra.mxu0 0.0
      %2586 = vmatprep.subr.mxu0 0.0
      %2587 = vmatpush1.msra.mxu0 0.0
      %2588 = vmatprep.subr.mxu0 0.0
      %2589 = vmatpush1.msra.mxu0 0.0
      %2590 = vmatprep.subr.mxu0 0.0
      %2591 = vmatpush1.msra.mxu0 %v674
      %2592 = vmatprep.subr.mxu0 0.0
      %2593 = vmatpush2.msra.mxu0 0.0
      %2594 = vmatprep.subr.mxu0 0.0
      %2595 = vmatpush2.msra.mxu0 0.0
      %2596 = vmatprep.subr.mxu0 0.0
      %2597 = vmatpush2.msra.mxu0 0.0
      %2598 = vmatprep.subr.mxu0 0.0
      %2599 = vmatpush2.msra.mxu0 0.0
      %2600 = vmatprep.subr.mxu0 0.0
      %2601 = vmatpush2.msra.mxu0 0.0
      %2602 = vmatprep.subr.mxu0 0.0
      %2603 = vmatpush2.msra.mxu0 0.0
      %2604 = vmatprep.subr.mxu0 0.0
      %2605 = vmatpush2.msra.mxu0 0.0
      %2606 = vmatprep.subr.mxu0 0.0
      %2607 = vmatpush2.msra.mxu0 0.0
      %2608 = vmatprep.subr.mxu0 0.0
      %2609 = vmatpush2.msra.mxu0 0.0
      %2610 = vmatprep.subr.mxu0 0.0
      %2611 = vmatpush2.msra.mxu0 0.0
      %2612 = vmatprep.subr.mxu0 0.0
      %2613 = vmatpush2.msra.mxu0 0.0
      %2614 = vmatprep.subr.mxu0 0.0
      %2615 = vmatpush2.msra.mxu0 0.0
      %2616 = vmatprep.subr.mxu0 0.0
      %2617 = vmatpush2.msra.mxu0 0.0
      %2618 = vmatprep.subr.mxu0 0.0
      %2619 = vmatpush2.msra.mxu0 0.0
      %2620 = vmatprep.subr.mxu0 0.0
      %2621 = vmatpush2.msra.mxu0 0.0
      %2622 = vmatprep.subr.mxu0 0.0
      %2623 = vmatpush2.msra.mxu0 0.0
      %2624 = vmatprep.mubr.f32.mxu0 0.0
      %2625 = vmatmul.mubr.f32.gmra.mxu0 %v2483
      %v2626 = vpop.f32.mrf.mxu0
      %v2627 = vadd.f32 0.0, %v2626
      %v2628 = vpop.f32.mrf.mxu0
      %2629 = vdwg.mxu0
      %v2630 = vmul.f32 %v2627, %v2627
      %v2631 = vsel %vm1615, %v2630, 0.0
      %2632 = vadd.xlane.f32.xlu0 %v2631
      %v2633 = vpop.xlane.xlu0 %2632
      %v2634 = vadd.f32 %v2559, %v2633
      %v2635 = vmul.f32 %v2148, 0.5
      %v2636 = vsub.f32 %v2635, 7.351508
      %v2637 = vmul.f32 %v2634, 0.5
      %v2638 = vlaneseq
      %v2639 = vshrl.u32 %v2638, 7
      %v2640 = vsub.s32 0, %v2639
      %v2641 = vrot.slane %v2636, %v2640
      %v2642 = vsub.f32 %v2641, %v2637
      %v2644 = vrot.slane %v873, 4
      %v2646 = vsub.f32 %v2475, %v2644
      %v2647 = vmul.f32 %v2646, %v2646
      %v2648 = vmul.f32 %v2647, %v885
      %v2649 = vsel %vm1537, %v2648, 0.0
      %2650 = vadd.xlane.f32.xlu0 %v2649
      %v2651 = vpop.xlane.xlu0 %2650
      %v2652 = vmul.f32 %v2651, -0.5
      %v2653 = vsub.f32 %v2652, %v1714
      %v2654 = vsub.f32 %v2653, 7.351508
      %v2655 = vsub.f32 %v2642, %v2654
      %v2656 = vsel %vm1718, %v2655, 0.0
      %v2657 = vrot.slane %v2656, 4
      %v2658 = vadd.f32 %v2656, %v2657
      %v2659 = vrot.slane %v2658, 2
      %v2660 = vadd.f32 %v2658, %v2659
      %v2661 = vrot.slane %v2660, 1
      %v2662 = vadd.f32 %v2660, %v2661
      %v2663 = vmul.f32 %v2662, 0.25
      %v2664 = vld [vmem:[%s12] sm:$0xff]
      %v2665 = vld [vmem:[%s13] sm:$0x1]
      %v2667 = vlaneseq
      %v2668 = vshrl.u32 %v2667, 7
      %v2669 = vsub.s32 0, %v2668
      %v2670 = vrot.slane %v2665, %v2669
      %v2673 = vsel %vm712, %v2475, 0
      %2675 = vmatprep.subr.mxu0 0.0
      %2676 = vmatpush1.msra.mxu0 0.0
      %2677 = vmatprep.subr.mxu0 0.0
      %2678 = vmatpush1.msra.mxu0 0.0
      %2679 = vmatprep.subr.mxu0 0.0
      %2680 = vmatpush1.msra.mxu0 0.0
      %2681 = vmatprep.subr.mxu0 0.0
      %2682 = vmatpush1.msra.mxu0 0.0
      %2683 = vmatprep.subr.mxu0 0.0
      %2684 = vmatpush1.msra.mxu0 0.0
      %2685 = vmatprep.subr.mxu0 0.0
      %2686 = vmatpush1.msra.mxu0 0.0
      %2687 = vmatprep.subr.mxu0 0.0
      %2688 = vmatpush1.msra.mxu0 0.0
      %2689 = vmatprep.subr.mxu0 0.0
      %2690 = vmatpush1.msra.mxu0 0.0
      %2691 = vmatprep.subr.mxu0 0.0
      %2692 = vmatpush1.msra.mxu0 0.0
      %2693 = vmatprep.subr.mxu0 0.0
      %2694 = vmatpush1.msra.mxu0 0.0
      %2695 = vmatprep.subr.mxu0 0.0
      %2696 = vmatpush1.msra.mxu0 0.0
      %2697 = vmatprep.subr.mxu0 0.0
      %2698 = vmatpush1.msra.mxu0 0.0
      %2699 = vmatprep.subr.mxu0 0.0
      %2700 = vmatpush1.msra.mxu0 0.0
      %2701 = vmatprep.subr.mxu0 0.0
      %2702 = vmatpush1.msra.mxu0 0.0
      %2703 = vmatprep.subr.mxu0 0.0
      %2704 = vmatpush1.msra.mxu0 0.0
      %2705 = vmatprep.subr.mxu0 0.0
      %2706 = vmatpush1.msra.mxu0 %v2664
      %2707 = vmatprep.subr.mxu0 0.0
      %2708 = vmatpush2.msra.mxu0 0.0
      %2709 = vmatprep.subr.mxu0 0.0
      %2710 = vmatpush2.msra.mxu0 0.0
      %2711 = vmatprep.subr.mxu0 0.0
      %2712 = vmatpush2.msra.mxu0 0.0
      %2713 = vmatprep.subr.mxu0 0.0
      %2714 = vmatpush2.msra.mxu0 0.0
      %2715 = vmatprep.subr.mxu0 0.0
      %2716 = vmatpush2.msra.mxu0 0.0
      %2717 = vmatprep.subr.mxu0 0.0
      %2718 = vmatpush2.msra.mxu0 0.0
      %2719 = vmatprep.subr.mxu0 0.0
      %2720 = vmatpush2.msra.mxu0 0.0
      %2721 = vmatprep.subr.mxu0 0.0
      %2722 = vmatpush2.msra.mxu0 0.0
      %2723 = vmatprep.subr.mxu0 0.0
      %2724 = vmatpush2.msra.mxu0 0.0
      %2725 = vmatprep.subr.mxu0 0.0
      %2726 = vmatpush2.msra.mxu0 0.0
      %2727 = vmatprep.subr.mxu0 0.0
      %2728 = vmatpush2.msra.mxu0 0.0
      %2729 = vmatprep.subr.mxu0 0.0
      %2730 = vmatpush2.msra.mxu0 0.0
      %2731 = vmatprep.subr.mxu0 0.0
      %2732 = vmatpush2.msra.mxu0 0.0
      %2733 = vmatprep.subr.mxu0 0.0
      %2734 = vmatpush2.msra.mxu0 0.0
      %2735 = vmatprep.subr.mxu0 0.0
      %2736 = vmatpush2.msra.mxu0 0.0
      %2737 = vmatprep.subr.mxu0 0.0
      %2738 = vmatpush2.msra.mxu0 0.0
      %2739 = vmatprep.mubr.f32.mxu0 0.0
      %2740 = vmatmul.mubr.f32.gmra.mxu0 %v2673
      %v2741 = vpop.f32.mrf.mxu0
      %v2742 = vadd.f32 %v2670, %v2741
      %v2743 = vpop.f32.mrf.mxu0
      %2744 = vdwg.mxu0
      %v2745 = vlaneseq
      %v2746 = vshrl.u32 %v2745, 7
      %v2747 = vsub.s32 1, %v2746
      %v2748 = vrot.slane %v677, %v2747
      %v2749 = vmul.f32 %v2748, %v2742
      %v2750 = vmul.f32 %v2742, 1.442695
      %v2751 = vpow.pop %v2750
      %v2752 = vsub.f32 %v2749, %v2751
      %v2753 = vsel %vm1816, %v2752, 0.0
      %2754 = vadd.xlane.f32.xlu0 %v2753
      %v2755 = vpop.xlane.xlu0 %2754
      %v2756 = vsel %vm1820, %v2755, 0.0
      %v2757 = vrot.slane %v2756, 4
      %v2758 = vadd.f32 %v2756, %v2757
      %v2759 = vrot.slane %v2758, 2
      %v2760 = vadd.f32 %v2758, %v2759
      %v2761 = vrot.slane %v2760, 1
      %v2762 = vadd.f32 %v2760, %v2761
      %v2763 = vmul.f32 %v2762, 0.25
      %v2764 = vsel %vm1537, %v2398, 0.0
      %v2765 = vrot.slane %v2764, 4
      %v2766 = vadd.f32 %v2764, %v2765
      %v2767 = vrot.slane %v2766, 2
      %v2768 = vadd.f32 %v2766, %v2767
      %v2769 = vrot.slane %v2768, 1
      %v2770 = vadd.f32 %v2768, %v2769
      %v2771 = vmul.f32 %v2770, 0.25
      %2772 = vst.msk [vmem:[%s651 + $0x4] sm:$0xf] %vm1537, %v2475
      %2773 = vst.msk [vmem:[#allocation2 + $0x4] sm:$0xf] %vm1537, %v2475
      %2775 = vrot.lane.b32.xlu0 %v2663, 1
      %v2776 = vpop.permute.xlu0 %2775
      %vm2778 = vcmask 8200
      %2779 = vst.msk [vmem:[%s654] sm:$0x1] %vm2778, %v2776
      %2780 = vst.msk [vmem:[%s657] sm:$0x1] %vm2778, %v2763
      %2781 = vst.msk [vmem:[%s661 + $0x1] sm:$0x1] %vm699, %v2771
      %p2782 = scmp.lt.s32.totalorder %s29, 7
      %s2783 = scalar_select %p2782, %s29, 7
      %s2784 = smul.addr %s2783, 8
      %s2785 = scalar_lea.vmem %s14, %s2784
      %p2786 = scmp.lt.s32.totalorder %s29, 7
      %s2787 = scalar_select %p2786, %s29, 7
      %s2788 = scalar_lea.vmem %s15, %s2787
      %p2789 = scmp.lt.s32.totalorder %s29, 7
      %s2790 = scalar_select %p2789, %s29, 7
      %s2791 = scalar_lea.vmem %s16, %s2790
      %p2792 = scmp.lt.s32.totalorder %s29, 7
      %s2793 = scalar_select %p2792, %s29, 7
      %s2794 = smul.addr %s2793, 2
      %s2795 = scalar_lea.vmem %s17, %s2794
      // Predicated region
      $region81: #{forward.3} parent=75 // pred_check
        %p2796 = pneg %p371
      $region82: #{forward.3} parent=75 // pred_check_branch
        %2798 = sbr.rel (%p2796) target = $region84
      $region83: #{forward.3} parent=75 // pred_region
        _
      $region84: #{forward.3} parent=75 // pred_fallthru
        _
      // Predicated region
      $region85: #{forward.3} parent=75 // pred_check
        %p2799 = pneg %p397
      $region86: #{forward.3} parent=75 // pred_check_branch
        %2801 = sbr.rel (%p2799) target = $region88
      $region87: #{forward.3} parent=75 // pred_region
        _
      $region88: #{forward.3} parent=75 // pred_fallthru
        _
      // Predicated region
      $region89: #{forward.3} parent=75 // pred_check
        %p2802 = pneg %p423
      $region90: #{forward.3} parent=75 // pred_check_branch
        %2804 = sbr.rel (%p2802) target = $region92
      $region91: #{forward.3} parent=75 // pred_region
        _
      $region92: #{forward.3} parent=75 // pred_fallthru
        _
      // Predicated region
      $region93: #{forward.3} parent=75 // pred_check
        %p2805 = pneg %p449
      $region94: #{forward.3} parent=75 // pred_check_branch
        %2807 = sbr.rel (%p2805) target = $region96
      $region95: #{forward.3} parent=75 // pred_region
        _
      $region96: #{forward.3} parent=75 // pred_fallthru
        _
    $region76: #{forward.3} parent=5 // pred_fallthru
      _
    %p2808 = scmp.le.s32.totalorder 2, %s24
    // Predicated region
    $region97: #{forward.3} parent=5 // pred_check
      %p2809 = pneg %p2808
    $region98: #{forward.3} parent=5 // pred_check_branch
      %2811 = sbr.rel (%p2809) target = $region100
    $region99: #{forward.3} parent=5 // pred_region
      %s2812 = ssub.s32 %s24, 2
      // Predicated region
      $region101: #{forward.3} parent=99 // pred_check
        %p2813 = pneg %p377
      $region102: #{forward.3} parent=99 // pred_check_branch
        %2815 = sbr.rel (%p2813) target = $region104
      $region103: #{forward.3} parent=99 // pred_region
        %p2816 = scmp.lt.s32.totalorder %s30, 7
        %s2817 = scalar_select %p2816, %s30, 7
        %s2818 = smul.addr %s2817, 8
        %s2819 = scalar_lea.vmem %s14, %s2818
      $region104: #{forward.3} parent=99 // pred_fallthru
        _
      // Predicated region
      $region105: #{forward.3} parent=99 // pred_check
        %p2820 = pneg %p403
      $region106: #{forward.3} parent=99 // pred_check_branch
        %2822 = sbr.rel (%p2820) target = $region108
      $region107: #{forward.3} parent=99 // pred_region
        %p2823 = scmp.lt.s32.totalorder %s30, 7
        %s2824 = scalar_select %p2823, %s30, 7
        %s2825 = scalar_lea.vmem %s15, %s2824
      $region108: #{forward.3} parent=99 // pred_fallthru
        _
      // Predicated region
      $region109: #{forward.3} parent=99 // pred_check
        %p2826 = pneg %p429
      $region110: #{forward.3} parent=99 // pred_check_branch
        %2828 = sbr.rel (%p2826) target = $region112
      $region111: #{forward.3} parent=99 // pred_region
        %p2829 = scmp.lt.s32.totalorder %s30, 7
        %s2830 = scalar_select %p2829, %s30, 7
        %s2831 = scalar_lea.vmem %s16, %s2830
      $region112: #{forward.3} parent=99 // pred_fallthru
        _
      // Predicated region
      $region113: #{forward.3} parent=99 // pred_check
        %p2832 = pneg %p455
      $region114: #{forward.3} parent=99 // pred_check_branch
        %2834 = sbr.rel (%p2832) target = $region116
      $region115: #{forward.3} parent=99 // pred_region
        %p2835 = scmp.lt.s32.totalorder %s30, 7
        %s2836 = scalar_select %p2835, %s30, 7
        %s2837 = smul.addr %s2836, 2
        %s2838 = scalar_lea.vmem %s17, %s2837
      $region116: #{forward.3} parent=99 // pred_fallthru
        _
    $region100: #{forward.3} parent=5 // pred_fallthru
      _
  $region6: #{forward.3} parent=0 // loop_footer
    %s28 = sadd.s32 1, %s24
  $region7: #{forward.3} parent=0 // loop_footer_branch
    %23 = sbr.rel target = $region3
  $region8: #{forward.3} parent=0 // loop_exit
    _

</llo_original>
